<compile_context>
chip_gen: v7x
topology: tpu7x:2x2x1
jax: 0.10.0
libtpu: 0.0.40
codegen_flags: <defaults>
</compile_context>

<pallas_src>
import jax
import jax.numpy as jnp
from jax.experimental import pallas as pl
from jax.experimental.pallas import tpu as pltpu

# ---- synthetic, deterministic FINN configuration ---------------------------------
NUM_FEATURES = 1   # num_vars (every flux module is fed u[[0]], as in the PyTorch source)
NX = 128           # number of finite-volume cells (lane aligned)
HIDDEN = 32        # hidden width of the retardation-inverse MLP
NT = 8             # number of requested time points

D_EFF = 5.0e-4            # effective diffusion coefficient
P_EXP = 0.0               # learnable exponent p_exp (synthetic init)
STENCIL = (-1.0, 1.0)     # two-point flux stencil
DIRICHLET_VAL = 1.0       # left Dirichlet boundary value; right boundary: zero-flux


def _finn_integrate_kernel(t_ref, scale_ref, u0_ref,
                           w1_ref, b1_ref, w2_ref, b2_ref, w3t_ref, b3_ref,
                           out_ref):
    """Fully-fused ConcentrationPredictor.forward.

    t_ref    : SMEM (NT,)     requested time points
    scale_ref: SMEM (1,)      (10 ** p_exp) * D_eff (runtime scalar, keeps p_exp trainable)
    u0_ref   : VMEM (1, NX)   initial concentration of variable 0
    w1 (H,1) b1 (H,1) w2 (H,H) b2 (H,1) w3t (H,1) b3 (1,1)   retardation-inverse MLP
    out_ref  : VMEM (NT, NX)  concentration trajectory (row 0 = u0)
    """
    # --- weights loaded once, VMEM/vreg-resident across the whole time loop ---
    w1 = w1_ref[...]
    b1 = b1_ref[...]
    w2 = w2_ref[...]
    b2 = b2_ref[...]
    w3t = w3t_ref[...]                 # torch w3 (1, H) pre-transposed to (H, 1)
    b3 = b3_ref[...]
    scale = scale_ref[0]               # (10 ** p_exp) * D_eff

    # --- loop-invariant boundary machinery (hoisted: built once per forward) ---
    col = jax.lax.broadcasted_iota(jnp.int32, (1, NX), 1)
    left_mask = col == 0
    right_mask = col == NX - 1

    def dudt(u):                                                       # u: (1, NX) f32
        # retardation-inverse MLP, evaluated per cell (per lane).
        # layer 1 has in_features == 1 -> W1 @ u is an outer product (VPU broadcast mul).
        h1 = jnp.tanh(w1 * u + b1)                                     # (H, NX)
        h2 = jnp.tanh(jnp.dot(w2, h1, preferred_element_type=jnp.float32) + b2)  # (H, NX)
        # degenerate (1,H)@(H,NX) matmul -> VPU multiply + XLU sublane reduce.
        ret_inv = jax.nn.sigmoid(jnp.sum(w3t * h2, axis=0, keepdims=True) + b3)  # (1, NX)

        # two-point flux stencil along x (lane axis, XLU rotations).
        u_im1 = pltpu.roll(u, shift=1, axis=1)                         # u_{i-1}
        u_ip1 = pltpu.roll(u, shift=NX - 1, axis=1)                    # u_{i+1} (circular -1)
        u_im1 = jnp.where(left_mask, DIRICHLET_VAL, u_im1)             # Dirichlet left BC
        left_flux = STENCIL[0] * u + STENCIL[1] * u_im1
        right_flux = STENCIL[0] * u + STENCIL[1] * u_ip1
        right_flux = jnp.where(right_mask, 0.0, right_flux)            # zero-flux right BC
        return ret_inv * scale * (left_flux + right_flux)

    u0 = u0_ref[...]
    out_ref[pl.ds(0, 1), :] = u0.astype(out_ref.dtype)

    # TODO(synk): torchdiffeq.odeint uses adaptive dopri5 (rtol=1e-5/atol=1e-6); adaptive
    # step-size control has no clean Pallas equivalent, so fixed-step RK4 on the requested
    # grid is used instead.
    def step(i, u):
        t0 = t_ref[i]
        t1 = t_ref[i + 1]
        dt = t1 - t0
        k1 = dudt(u)
        k2 = dudt(u + 0.5 * dt * k1)
        k3 = dudt(u + 0.5 * dt * k2)
        k4 = dudt(u + dt * k3)
        u_new = u + (dt / 6.0) * (k1 + 2.0 * (k2 + k3) + k4)
        out_ref[pl.ds(i + 1, 1), :] = u_new.astype(out_ref.dtype)
        return u_new

    # Short fixed trip count: fully unroll for LLO scheduler visibility.
    jax.lax.fori_loop(0, NT - 1, step, u0, unroll=True)


def concentration_predictor_forward(params, p_exp, u0_var0, t):
    """ConcentrationPredictor.forward(t): odeint(dudt_fun, u0, t), fused into one kernel.

    params  : (w1, b1, w2, b2, w3, b3) in torch.nn.Linear layout
    p_exp   : scalar learnable exponent (10**p_exp scales D_eff)
    u0_var0 : (1, NX) initial condition of variable 0
    t       : (NT,) requested time points
    Returns (NT, NUM_FEATURES, NX).
    """
    w1, b1, w2, b2, w3, b3 = params
    w3t = jnp.transpose(w3)                                           # (H, 1)
    # Runtime scalar keeps p_exp a differentiable/updatable parameter.
    scale = jnp.reshape((10.0 ** p_exp) * D_EFF, (1,)).astype(jnp.float32)

    smem = pl.BlockSpec(memory_space=pltpu.MemorySpace.SMEM)
    vmem = pl.BlockSpec(memory_space=pltpu.MemorySpace.VMEM)
    traj = pl.pallas_call(
        _finn_integrate_kernel,
        out_shape=jax.ShapeDtypeStruct((NT, NX), jnp.float32),
        in_specs=[smem, smem, vmem, vmem, vmem, vmem, vmem, vmem, vmem],
        out_specs=vmem,
    )(t, scale, u0_var0, w1, b1, w2, b2, w3t, b3)

    # TODO(synk): for NUM_FEATURES > 1 the flux modules all consume u[0] but have separate
    # MLPs; they would be batched onto sublanes inside the same fused kernel.
    return traj[:, None, :]                                           # (NT, 1, NX)


if __name__ == "__main__":
    key = jax.random.PRNGKey(0)
    k1, k2, k3, ku = jax.random.split(key, 4)

    # Deterministic synthetic parameters for the retardation-inverse MLP (torch Linear layout).
    w1 = 0.1 * jax.random.normal(k1, (HIDDEN, 1), jnp.float32)
    b1 = jnp.zeros((HIDDEN, 1), jnp.float32)
    w2 = 0.1 * jax.random.normal(k2, (HIDDEN, HIDDEN), jnp.float32)
    b2 = jnp.zeros((HIDDEN, 1), jnp.float32)
    w3 = 0.1 * jax.random.normal(k3, (1, HIDDEN), jnp.float32)
    b3 = jnp.zeros((1, 1), jnp.float32)
    params = (w1, b1, w2, b2, w3, b3)
    p_exp = jnp.float32(P_EXP)

    # Initial condition u0: [num_features, Nx]; time points t: [Nt]
    u0 = jax.random.uniform(ku, (NUM_FEATURES, NX), jnp.float32)
    t = jnp.linspace(0.0, 1.0, NT).astype(jnp.float32)

    fwd = jax.jit(concentration_predictor_forward)
    out = fwd(params, p_exp, u0[0:1], t)
    out = jax.block_until_ready(out)
    assert out.shape == (NT, NUM_FEATURES, NX), out.shape
    assert bool(jnp.all(jnp.isfinite(out)))
    print("KERNEL_OK")
</pallas_src>

<mosaic_0001>
module attributes {stable_mosaic.version = 11 : i64} {
  func.func @_finn_integrate_kernel(%arg0: memref<8xf32, #tpu.memory_space<smem>>, %arg1: memref<1xf32, #tpu.memory_space<smem>>, %arg2: memref<1x128xf32, #tpu.memory_space<vmem>>, %arg3: memref<32x1xf32, #tpu.memory_space<vmem>>, %arg4: memref<32x1xf32, #tpu.memory_space<vmem>>, %arg5: memref<32x32xf32, #tpu.memory_space<vmem>>, %arg6: memref<32x1xf32, #tpu.memory_space<vmem>>, %arg7: memref<32x1xf32, #tpu.memory_space<vmem>>, %arg8: memref<1x1xf32, #tpu.memory_space<vmem>>, %arg9: memref<8x128xf32, #tpu.memory_space<vmem>>) attributes {dimension_semantics = [], scalar_prefetch = 0 : i64, scratch_operands = 0 : i64, tpu.core_type = #tpu.core_type<tc>} {
    %c0 = arith.constant 0 : index
    %c0_0 = arith.constant 0 : index
    %0 = vector.load %arg3[%c0, %c0_0] : memref<32x1xf32, #tpu.memory_space<vmem>>, vector<32x1xf32>
    %c0_1 = arith.constant 0 : index
    %c0_2 = arith.constant 0 : index
    %1 = vector.load %arg4[%c0_1, %c0_2] : memref<32x1xf32, #tpu.memory_space<vmem>>, vector<32x1xf32>
    %c0_3 = arith.constant 0 : index
    %c0_4 = arith.constant 0 : index
    %2 = vector.load %arg5[%c0_3, %c0_4] : memref<32x32xf32, #tpu.memory_space<vmem>>, vector<32x32xf32>
    %c0_5 = arith.constant 0 : index
    %c0_6 = arith.constant 0 : index
    %3 = vector.load %arg6[%c0_5, %c0_6] : memref<32x1xf32, #tpu.memory_space<vmem>>, vector<32x1xf32>
    %c0_7 = arith.constant 0 : index
    %c0_8 = arith.constant 0 : index
    %4 = vector.load %arg7[%c0_7, %c0_8] : memref<32x1xf32, #tpu.memory_space<vmem>>, vector<32x1xf32>
    %c0_9 = arith.constant 0 : index
    %c0_10 = arith.constant 0 : index
    %5 = vector.load %arg8[%c0_9, %c0_10] : memref<1x1xf32, #tpu.memory_space<vmem>>, vector<1x1xf32>
    %c0_11 = arith.constant 0 : index
    %6 = memref.load %arg1[%c0_11] : memref<1xf32, #tpu.memory_space<smem>>
    %7 = tpu.iota {dimensions = array<i32: 1>} : vector<1x128xi32>
    %c0_i32 = arith.constant 0 : i32
    %8 = vector.broadcast %c0_i32 : i32 to vector<1x128xi32>
    %9 = arith.cmpi eq, %7, %8 : vector<1x128xi32>
    %c127_i32 = arith.constant 127 : i32
    %10 = vector.broadcast %c127_i32 : i32 to vector<1x128xi32>
    %11 = arith.cmpi eq, %7, %10 : vector<1x128xi32>
    %c0_12 = arith.constant 0 : index
    %c0_13 = arith.constant 0 : index
    %12 = vector.load %arg2[%c0_12, %c0_13] : memref<1x128xf32, #tpu.memory_space<vmem>>, vector<1x128xf32>
    %c0_14 = arith.constant 0 : index
    %c0_15 = arith.constant 0 : index
    %13 = vector.load %arg9[%c0_14, %c0_15] : memref<8x128xf32, #tpu.memory_space<vmem>>, vector<1x128xf32>
    tpu.vector_store %arg9[%c0_14, %c0_15], %12 {strides = array<i32>} : memref<8x128xf32, #tpu.memory_space<vmem>>, vector<1x128xf32>,
    %c0_i32_16 = arith.constant 0 : i32
    %14 = arith.index_cast %c0_i32_16 : i32 to index
    %15 = memref.load %arg0[%14] : memref<8xf32, #tpu.memory_space<smem>>
    %c1_i32 = arith.constant 1 : i32
    %16 = arith.addi %c0_i32_16, %c1_i32 : i32
    %17 = arith.index_cast %16 : i32 to index
    %18 = memref.load %arg0[%17] : memref<8xf32, #tpu.memory_space<smem>>
    %19 = arith.subf %18, %15 : f32
    %20 = vector.broadcast %0 : vector<32x1xf32> to vector<32x128xf32>
    %21 = vector.broadcast %12 : vector<1x128xf32> to vector<32x128xf32>
    %22 = arith.mulf %20, %21 : vector<32x128xf32>
    %23 = vector.broadcast %1 : vector<32x1xf32> to vector<32x128xf32>
    %24 = arith.addf %22, %23 : vector<32x128xf32>
    %25 = math.tanh %24 : vector<32x128xf32>
    %cst = arith.constant dense<0.000000e+00> : vector<32x128xf32>
    %26 = tpu.matmul %2, %25, %cst {dimension_numbers = #tpu.dot_dimension_numbers<[1], [0], [0], [1], [0, 0, 1, 1], [], []>} : vector<32x32xf32>, vector<32x128xf32>, vector<32x128xf32> -> vector<32x128xf32>
    %27 = vector.broadcast %3 : vector<32x1xf32> to vector<32x128xf32>
    %28 = arith.addf %26, %27 : vector<32x128xf32>
    %29 = math.tanh %28 : vector<32x128xf32>
    %30 = vector.broadcast %4 : vector<32x1xf32> to vector<32x128xf32>
    %31 = arith.mulf %30, %29 : vector<32x128xf32>
    %cst_17 = arith.constant dense<0.000000e+00> : vector<128xf32>
    %32 = vector.multi_reduction <add>, %31, %cst_17 [0] : vector<32x128xf32> to vector<128xf32>
    %33 = vector.shape_cast %32 : vector<128xf32> to vector<1x128xf32>
    %34 = vector.broadcast %5 : vector<1x1xf32> to vector<1x128xf32>
    %35 = arith.addf %33, %34 : vector<1x128xf32>
    %36 = arith.negf %35 : vector<1x128xf32>
    %37 = math.exp %36 : vector<1x128xf32>
    %cst_18 = arith.constant 1.000000e+00 : f32
    %38 = vector.broadcast %cst_18 : f32 to vector<1x128xf32>
    %39 = arith.addf %38, %37 : vector<1x128xf32>
    %40 = arith.divf %38, %39 : vector<1x128xf32>
    %c1_i32_19 = arith.constant 1 : i32
    %41 = tpu.dynamic_rotate %12 by %c1_i32_19 dim 1 : vector<1x128xf32>, i32 -> vector<1x128xf32>
    %c127_i32_20 = arith.constant 127 : i32
    %42 = tpu.dynamic_rotate %12 by %c127_i32_20 dim 1 : vector<1x128xf32>, i32 -> vector<1x128xf32>
    %cst_21 = arith.constant 1.000000e+00 : f32
    %43 = vector.broadcast %cst_21 : f32 to vector<1x128xf32>
    %44 = arith.select %9, %43, %41 : vector<1x128xi1>, vector<1x128xf32>
    %cst_22 = arith.constant -1.000000e+00 : f32
    %45 = vector.broadcast %cst_22 : f32 to vector<1x128xf32>
    %46 = arith.mulf %45, %12 : vector<1x128xf32>
    %cst_23 = arith.constant 1.000000e+00 : f32
    %47 = vector.broadcast %cst_23 : f32 to vector<1x128xf32>
    %48 = arith.mulf %47, %44 : vector<1x128xf32>
    %49 = arith.addf %46, %48 : vector<1x128xf32>
    %cst_24 = arith.constant -1.000000e+00 : f32
    %50 = vector.broadcast %cst_24 : f32 to vector<1x128xf32>
    %51 = arith.mulf %50, %12 : vector<1x128xf32>
    %cst_25 = arith.constant 1.000000e+00 : f32
    %52 = vector.broadcast %cst_25 : f32 to vector<1x128xf32>
    %53 = arith.mulf %52, %42 : vector<1x128xf32>
    %54 = arith.addf %51, %53 : vector<1x128xf32>
    %cst_26 = arith.constant 0.000000e+00 : f32
    %55 = vector.broadcast %cst_26 : f32 to vector<1x128xf32>
    %56 = arith.select %11, %55, %54 : vector<1x128xi1>, vector<1x128xf32>
    %57 = vector.broadcast %6 : f32 to vector<1x128xf32>
    %58 = arith.mulf %40, %57 : vector<1x128xf32>
    %59 = arith.addf %49, %56 : vector<1x128xf32>
    %60 = arith.mulf %58, %59 : vector<1x128xf32>
    %cst_27 = arith.constant 5.000000e-01 : f32
    %61 = arith.mulf %cst_27, %19 : f32
    %62 = vector.broadcast %61 : f32 to vector<1x128xf32>
    %63 = arith.mulf %62, %60 : vector<1x128xf32>
    %64 = arith.addf %12, %63 : vector<1x128xf32>
    %65 = vector.broadcast %0 : vector<32x1xf32> to vector<32x128xf32>
    %66 = vector.broadcast %64 : vector<1x128xf32> to vector<32x128xf32>
    %67 = arith.mulf %65, %66 : vector<32x128xf32>
    %68 = vector.broadcast %1 : vector<32x1xf32> to vector<32x128xf32>
    %69 = arith.addf %67, %68 : vector<32x128xf32>
    %70 = math.tanh %69 : vector<32x128xf32>
    %cst_28 = arith.constant dense<0.000000e+00> : vector<32x128xf32>
    %71 = tpu.matmul %2, %70, %cst_28 {dimension_numbers = #tpu.dot_dimension_numbers<[1], [0], [0], [1], [0, 0, 1, 1], [], []>} : vector<32x32xf32>, vector<32x128xf32>, vector<32x128xf32> -> vector<32x128xf32>
    %72 = vector.broadcast %3 : vector<32x1xf32> to vector<32x128xf32>
    %73 = arith.addf %71, %72 : vector<32x128xf32>
    %74 = math.tanh %73 : vector<32x128xf32>
    %75 = vector.broadcast %4 : vector<32x1xf32> to vector<32x128xf32>
    %76 = arith.mulf %75, %74 : vector<32x128xf32>
    %cst_29 = arith.constant dense<0.000000e+00> : vector<128xf32>
    %77 = vector.multi_reduction <add>, %76, %cst_29 [0] : vector<32x128xf32> to vector<128xf32>
    %78 = vector.shape_cast %77 : vector<128xf32> to vector<1x128xf32>
    %79 = vector.broadcast %5 : vector<1x1xf32> to vector<1x128xf32>
    %80 = arith.addf %78, %79 : vector<1x128xf32>
    %81 = arith.negf %80 : vector<1x128xf32>
    %82 = math.exp %81 : vector<1x128xf32>
    %cst_30 = arith.constant 1.000000e+00 : f32
    %83 = vector.broadcast %cst_30 : f32 to vector<1x128xf32>
    %84 = arith.addf %83, %82 : vector<1x128xf32>
    %85 = arith.divf %83, %84 : vector<1x128xf32>
    %c1_i32_31 = arith.constant 1 : i32
    %86 = tpu.dynamic_rotate %64 by %c1_i32_31 dim 1 : vector<1x128xf32>, i32 -> vector<1x128xf32>
    %c127_i32_32 = arith.constant 127 : i32
    %87 = tpu.dynamic_rotate %64 by %c127_i32_32 dim 1 : vector<1x128xf32>, i32 -> vector<1x128xf32>
    %cst_33 = arith.constant 1.000000e+00 : f32
    %88 = vector.broadcast %cst_33 : f32 to vector<1x128xf32>
    %89 = arith.select %9, %88, %86 : vector<1x128xi1>, vector<1x128xf32>
    %cst_34 = arith.constant -1.000000e+00 : f32
    %90 = vector.broadcast %cst_34 : f32 to vector<1x128xf32>
    %91 = arith.mulf %90, %64 : vector<1x128xf32>
    %cst_35 = arith.constant 1.000000e+00 : f32
    %92 = vector.broadcast %cst_35 : f32 to vector<1x128xf32>
    %93 = arith.mulf %92, %89 : vector<1x128xf32>
    %94 = arith.addf %91, %93 : vector<1x128xf32>
    %cst_36 = arith.constant -1.000000e+00 : f32
    %95 = vector.broadcast %cst_36 : f32 to vector<1x128xf32>
    %96 = arith.mulf %95, %64 : vector<1x128xf32>
    %cst_37 = arith.constant 1.000000e+00 : f32
    %97 = vector.broadcast %cst_37 : f32 to vector<1x128xf32>
    %98 = arith.mulf %97, %87 : vector<1x128xf32>
    %99 = arith.addf %96, %98 : vector<1x128xf32>
    %cst_38 = arith.constant 0.000000e+00 : f32
    %100 = vector.broadcast %cst_38 : f32 to vector<1x128xf32>
    %101 = arith.select %11, %100, %99 : vector<1x128xi1>, vector<1x128xf32>
    %102 = vector.broadcast %6 : f32 to vector<1x128xf32>
    %103 = arith.mulf %85, %102 : vector<1x128xf32>
    %104 = arith.addf %94, %101 : vector<1x128xf32>
    %105 = arith.mulf %103, %104 : vector<1x128xf32>
    %cst_39 = arith.constant 5.000000e-01 : f32
    %106 = arith.mulf %cst_39, %19 : f32
    %107 = vector.broadcast %106 : f32 to vector<1x128xf32>
    %108 = arith.mulf %107, %105 : vector<1x128xf32>
    %109 = arith.addf %12, %108 : vector<1x128xf32>
    %110 = vector.broadcast %0 : vector<32x1xf32> to vector<32x128xf32>
    %111 = vector.broadcast %109 : vector<1x128xf32> to vector<32x128xf32>
    %112 = arith.mulf %110, %111 : vector<32x128xf32>
    %113 = vector.broadcast %1 : vector<32x1xf32> to vector<32x128xf32>
    %114 = arith.addf %112, %113 : vector<32x128xf32>
    %115 = math.tanh %114 : vector<32x128xf32>
    %cst_40 = arith.constant dense<0.000000e+00> : vector<32x128xf32>
    %116 = tpu.matmul %2, %115, %cst_40 {dimension_numbers = #tpu.dot_dimension_numbers<[1], [0], [0], [1], [0, 0, 1, 1], [], []>} : vector<32x32xf32>, vector<32x128xf32>, vector<32x128xf32> -> vector<32x128xf32>
    %117 = vector.broadcast %3 : vector<32x1xf32> to vector<32x128xf32>
    %118 = arith.addf %116, %117 : vector<32x128xf32>
    %119 = math.tanh %118 : vector<32x128xf32>
    %120 = vector.broadcast %4 : vector<32x1xf32> to vector<32x128xf32>
    %121 = arith.mulf %120, %119 : vector<32x128xf32>
    %cst_41 = arith.constant dense<0.000000e+00> : vector<128xf32>
    %122 = vector.multi_reduction <add>, %121, %cst_41 [0] : vector<32x128xf32> to vector<128xf32>
    %123 = vector.shape_cast %122 : vector<128xf32> to vector<1x128xf32>
    %124 = vector.broadcast %5 : vector<1x1xf32> to vector<1x128xf32>
    %125 = arith.addf %123, %124 : vector<1x128xf32>
    %126 = arith.negf %125 : vector<1x128xf32>
    %127 = math.exp %126 : vector<1x128xf32>
    %cst_42 = arith.constant 1.000000e+00 : f32
    %128 = vector.broadcast %cst_42 : f32 to vector<1x128xf32>
    %129 = arith.addf %128, %127 : vector<1x128xf32>
    %130 = arith.divf %128, %129 : vector<1x128xf32>
    %c1_i32_43 = arith.constant 1 : i32
    %131 = tpu.dynamic_rotate %109 by %c1_i32_43 dim 1 : vector<1x128xf32>, i32 -> vector<1x128xf32>
    %c127_i32_44 = arith.constant 127 : i32
    %132 = tpu.dynamic_rotate %109 by %c127_i32_44 dim 1 : vector<1x128xf32>, i32 -> vector<1x128xf32>
    %cst_45 = arith.constant 1.000000e+00 : f32
    %133 = vector.broadcast %cst_45 : f32 to vector<1x128xf32>
    %134 = arith.select %9, %133, %131 : vector<1x128xi1>, vector<1x128xf32>
    %cst_46 = arith.constant -1.000000e+00 : f32
    %135 = vector.broadcast %cst_46 : f32 to vector<1x128xf32>
    %136 = arith.mulf %135, %109 : vector<1x128xf32>
    %cst_47 = arith.constant 1.000000e+00 : f32
    %137 = vector.broadcast %cst_47 : f32 to vector<1x128xf32>
    %138 = arith.mulf %137, %134 : vector<1x128xf32>
    %139 = arith.addf %136, %138 : vector<1x128xf32>
    %cst_48 = arith.constant -1.000000e+00 : f32
    %140 = vector.broadcast %cst_48 : f32 to vector<1x128xf32>
    %141 = arith.mulf %140, %109 : vector<1x128xf32>
    %cst_49 = arith.constant 1.000000e+00 : f32
    %142 = vector.broadcast %cst_49 : f32 to vector<1x128xf32>
    %143 = arith.mulf %142, %132 : vector<1x128xf32>
    %144 = arith.addf %141, %143 : vector<1x128xf32>
    %cst_50 = arith.constant 0.000000e+00 : f32
    %145 = vector.broadcast %cst_50 : f32 to vector<1x128xf32>
    %146 = arith.select %11, %145, %144 : vector<1x128xi1>, vector<1x128xf32>
    %147 = vector.broadcast %6 : f32 to vector<1x128xf32>
    %148 = arith.mulf %130, %147 : vector<1x128xf32>
    %149 = arith.addf %139, %146 : vector<1x128xf32>
    %150 = arith.mulf %148, %149 : vector<1x128xf32>
    %151 = vector.broadcast %19 : f32 to vector<1x128xf32>
    %152 = arith.mulf %151, %150 : vector<1x128xf32>
    %153 = arith.addf %12, %152 : vector<1x128xf32>
    %154 = vector.broadcast %0 : vector<32x1xf32> to vector<32x128xf32>
    %155 = vector.broadcast %153 : vector<1x128xf32> to vector<32x128xf32>
    %156 = arith.mulf %154, %155 : vector<32x128xf32>
    %157 = vector.broadcast %1 : vector<32x1xf32> to vector<32x128xf32>
    %158 = arith.addf %156, %157 : vector<32x128xf32>
    %159 = math.tanh %158 : vector<32x128xf32>
    %cst_51 = arith.constant dense<0.000000e+00> : vector<32x128xf32>
    %160 = tpu.matmul %2, %159, %cst_51 {dimension_numbers = #tpu.dot_dimension_numbers<[1], [0], [0], [1], [0, 0, 1, 1], [], []>} : vector<32x32xf32>, vector<32x128xf32>, vector<32x128xf32> -> vector<32x128xf32>
    %161 = vector.broadcast %3 : vector<32x1xf32> to vector<32x128xf32>
    %162 = arith.addf %160, %161 : vector<32x128xf32>
    %163 = math.tanh %162 : vector<32x128xf32>
    %164 = vector.broadcast %4 : vector<32x1xf32> to vector<32x128xf32>
    %165 = arith.mulf %164, %163 : vector<32x128xf32>
    %cst_52 = arith.constant dense<0.000000e+00> : vector<128xf32>
    %166 = vector.multi_reduction <add>, %165, %cst_52 [0] : vector<32x128xf32> to vector<128xf32>
    %167 = vector.shape_cast %166 : vector<128xf32> to vector<1x128xf32>
    %168 = vector.broadcast %5 : vector<1x1xf32> to vector<1x128xf32>
    %169 = arith.addf %167, %168 : vector<1x128xf32>
    %170 = arith.negf %169 : vector<1x128xf32>
    %171 = math.exp %170 : vector<1x128xf32>
    %cst_53 = arith.constant 1.000000e+00 : f32
    %172 = vector.broadcast %cst_53 : f32 to vector<1x128xf32>
    %173 = arith.addf %172, %171 : vector<1x128xf32>
    %174 = arith.divf %172, %173 : vector<1x128xf32>
    %c1_i32_54 = arith.constant 1 : i32
    %175 = tpu.dynamic_rotate %153 by %c1_i32_54 dim 1 : vector<1x128xf32>, i32 -> vector<1x128xf32>
    %c127_i32_55 = arith.constant 127 : i32
    %176 = tpu.dynamic_rotate %153 by %c127_i32_55 dim 1 : vector<1x128xf32>, i32 -> vector<1x128xf32>
    %cst_56 = arith.constant 1.000000e+00 : f32
    %177 = vector.broadcast %cst_56 : f32 to vector<1x128xf32>
    %178 = arith.select %9, %177, %175 : vector<1x128xi1>, vector<1x128xf32>
    %cst_57 = arith.constant -1.000000e+00 : f32
    %179 = vector.broadcast %cst_57 : f32 to vector<1x128xf32>
    %180 = arith.mulf %179, %153 : vector<1x128xf32>
    %cst_58 = arith.constant 1.000000e+00 : f32
    %181 = vector.broadcast %cst_58 : f32 to vector<1x128xf32>
    %182 = arith.mulf %181, %178 : vector<1x128xf32>
    %183 = arith.addf %180, %182 : vector<1x128xf32>
    %cst_59 = arith.constant -1.000000e+00 : f32
    %184 = vector.broadcast %cst_59 : f32 to vector<1x128xf32>
    %185 = arith.mulf %184, %153 : vector<1x128xf32>
    %cst_60 = arith.constant 1.000000e+00 : f32
    %186 = vector.broadcast %cst_60 : f32 to vector<1x128xf32>
    %187 = arith.mulf %186, %176 : vector<1x128xf32>
    %188 = arith.addf %185, %187 : vector<1x128xf32>
    %cst_61 = arith.constant 0.000000e+00 : f32
    %189 = vector.broadcast %cst_61 : f32 to vector<1x128xf32>
    %190 = arith.select %11, %189, %188 : vector<1x128xi1>, vector<1x128xf32>
    %191 = vector.broadcast %6 : f32 to vector<1x128xf32>
    %192 = arith.mulf %174, %191 : vector<1x128xf32>
    %193 = arith.addf %183, %190 : vector<1x128xf32>
    %194 = arith.mulf %192, %193 : vector<1x128xf32>
    %cst_62 = arith.constant 6.000000e+00 : f32
    %195 = arith.divf %19, %cst_62 : f32
    %196 = arith.addf %105, %150 : vector<1x128xf32>
    %cst_63 = arith.constant 2.000000e+00 : f32
    %197 = vector.broadcast %cst_63 : f32 to vector<1x128xf32>
    %198 = arith.mulf %197, %196 : vector<1x128xf32>
    %199 = arith.addf %60, %198 : vector<1x128xf32>
    %200 = arith.addf %199, %194 : vector<1x128xf32>
    %201 = vector.broadcast %195 : f32 to vector<1x128xf32>
    %202 = arith.mulf %201, %200 : vector<1x128xf32>
    %203 = arith.addf %12, %202 : vector<1x128xf32>
    %c1_i32_64 = arith.constant 1 : i32
    %204 = arith.addi %c0_i32_16, %c1_i32_64 : i32
    %205 = arith.index_cast %204 : i32 to index
    %c0_65 = arith.constant 0 : index
    %206 = vector.load %arg9[%205, %c0_65] : memref<8x128xf32, #tpu.memory_space<vmem>>, vector<1x128xf32>
    tpu.vector_store %arg9[%205, %c0_65], %203 {strides = array<i32>} : memref<8x128xf32, #tpu.memory_space<vmem>>, vector<1x128xf32>,
    %c1_i32_66 = arith.constant 1 : i32
    %207 = arith.index_cast %c1_i32_66 : i32 to index
    %208 = memref.load %arg0[%207] : memref<8xf32, #tpu.memory_space<smem>>
    %c1_i32_67 = arith.constant 1 : i32
    %209 = arith.addi %c1_i32_66, %c1_i32_67 : i32
    %210 = arith.index_cast %209 : i32 to index
    %211 = memref.load %arg0[%210] : memref<8xf32, #tpu.memory_space<smem>>
    %212 = arith.subf %211, %208 : f32
    %213 = vector.broadcast %0 : vector<32x1xf32> to vector<32x128xf32>
    %214 = vector.broadcast %203 : vector<1x128xf32> to vector<32x128xf32>
    %215 = arith.mulf %213, %214 : vector<32x128xf32>
    %216 = vector.broadcast %1 : vector<32x1xf32> to vector<32x128xf32>
    %217 = arith.addf %215, %216 : vector<32x128xf32>
    %218 = math.tanh %217 : vector<32x128xf32>
    %cst_68 = arith.constant dense<0.000000e+00> : vector<32x128xf32>
    %219 = tpu.matmul %2, %218, %cst_68 {dimension_numbers = #tpu.dot_dimension_numbers<[1], [0], [0], [1], [0, 0, 1, 1], [], []>} : vector<32x32xf32>, vector<32x128xf32>, vector<32x128xf32> -> vector<32x128xf32>
    %220 = vector.broadcast %3 : vector<32x1xf32> to vector<32x128xf32>
    %221 = arith.addf %219, %220 : vector<32x128xf32>
    %222 = math.tanh %221 : vector<32x128xf32>
    %223 = vector.broadcast %4 : vector<32x1xf32> to vector<32x128xf32>
    %224 = arith.mulf %223, %222 : vector<32x128xf32>
    %cst_69 = arith.constant dense<0.000000e+00> : vector<128xf32>
    %225 = vector.multi_reduction <add>, %224, %cst_69 [0] : vector<32x128xf32> to vector<128xf32>
    %226 = vector.shape_cast %225 : vector<128xf32> to vector<1x128xf32>
    %227 = vector.broadcast %5 : vector<1x1xf32> to vector<1x128xf32>
    %228 = arith.addf %226, %227 : vector<1x128xf32>
    %229 = arith.negf %228 : vector<1x128xf32>
    %230 = math.exp %229 : vector<1x128xf32>
    %cst_70 = arith.constant 1.000000e+00 : f32
    %231 = vector.broadcast %cst_70 : f32 to vector<1x128xf32>
    %232 = arith.addf %231, %230 : vector<1x128xf32>
    %233 = arith.divf %231, %232 : vector<1x128xf32>
    %c1_i32_71 = arith.constant 1 : i32
    %234 = tpu.dynamic_rotate %203 by %c1_i32_71 dim 1 : vector<1x128xf32>, i32 -> vector<1x128xf32>
    %c127_i32_72 = arith.constant 127 : i32
    %235 = tpu.dynamic_rotate %203 by %c127_i32_72 dim 1 : vector<1x128xf32>, i32 -> vector<1x128xf32>
    %cst_73 = arith.constant 1.000000e+00 : f32
    %236 = vector.broadcast %cst_73 : f32 to vector<1x128xf32>
    %237 = arith.select %9, %236, %234 : vector<1x128xi1>, vector<1x128xf32>
    %cst_74 = arith.constant -1.000000e+00 : f32
    %238 = vector.broadcast %cst_74 : f32 to vector<1x128xf32>
    %239 = arith.mulf %238, %203 : vector<1x128xf32>
    %cst_75 = arith.constant 1.000000e+00 : f32
    %240 = vector.broadcast %cst_75 : f32 to vector<1x128xf32>
    %241 = arith.mulf %240, %237 : vector<1x128xf32>
    %242 = arith.addf %239, %241 : vector<1x128xf32>
    %cst_76 = arith.constant -1.000000e+00 : f32
    %243 = vector.broadcast %cst_76 : f32 to vector<1x128xf32>
    %244 = arith.mulf %243, %203 : vector<1x128xf32>
    %cst_77 = arith.constant 1.000000e+00 : f32
    %245 = vector.broadcast %cst_77 : f32 to vector<1x128xf32>
    %246 = arith.mulf %245, %235 : vector<1x128xf32>
    %247 = arith.addf %244, %246 : vector<1x128xf32>
    %cst_78 = arith.constant 0.000000e+00 : f32
    %248 = vector.broadcast %cst_78 : f32 to vector<1x128xf32>
    %249 = arith.select %11, %248, %247 : vector<1x128xi1>, vector<1x128xf32>
    %250 = vector.broadcast %6 : f32 to vector<1x128xf32>
    %251 = arith.mulf %233, %250 : vector<1x128xf32>
    %252 = arith.addf %242, %249 : vector<1x128xf32>
    %253 = arith.mulf %251, %252 : vector<1x128xf32>
    %cst_79 = arith.constant 5.000000e-01 : f32
    %254 = arith.mulf %cst_79, %212 : f32
    %255 = vector.broadcast %254 : f32 to vector<1x128xf32>
    %256 = arith.mulf %255, %253 : vector<1x128xf32>
    %257 = arith.addf %203, %256 : vector<1x128xf32>
    %258 = vector.broadcast %0 : vector<32x1xf32> to vector<32x128xf32>
    %259 = vector.broadcast %257 : vector<1x128xf32> to vector<32x128xf32>
    %260 = arith.mulf %258, %259 : vector<32x128xf32>
    %261 = vector.broadcast %1 : vector<32x1xf32> to vector<32x128xf32>
    %262 = arith.addf %260, %261 : vector<32x128xf32>
    %263 = math.tanh %262 : vector<32x128xf32>
    %cst_80 = arith.constant dense<0.000000e+00> : vector<32x128xf32>
    %264 = tpu.matmul %2, %263, %cst_80 {dimension_numbers = #tpu.dot_dimension_numbers<[1], [0], [0], [1], [0, 0, 1, 1], [], []>} : vector<32x32xf32>, vector<32x128xf32>, vector<32x128xf32> -> vector<32x128xf32>
    %265 = vector.broadcast %3 : vector<32x1xf32> to vector<32x128xf32>
    %266 = arith.addf %264, %265 : vector<32x128xf32>
    %267 = math.tanh %266 : vector<32x128xf32>
    %268 = vector.broadcast %4 : vector<32x1xf32> to vector<32x128xf32>
    %269 = arith.mulf %268, %267 : vector<32x128xf32>
    %cst_81 = arith.constant dense<0.000000e+00> : vector<128xf32>
    %270 = vector.multi_reduction <add>, %269, %cst_81 [0] : vector<32x128xf32> to vector<128xf32>
    %271 = vector.shape_cast %270 : vector<128xf32> to vector<1x128xf32>
    %272 = vector.broadcast %5 : vector<1x1xf32> to vector<1x128xf32>
    %273 = arith.addf %271, %272 : vector<1x128xf32>
    %274 = arith.negf %273 : vector<1x128xf32>
    %275 = math.exp %274 : vector<1x128xf32>
    %cst_82 = arith.constant 1.000000e+00 : f32
    %276 = vector.broadcast %cst_82 : f32 to vector<1x128xf32>
    %277 = arith.addf %276, %275 : vector<1x128xf32>
    %278 = arith.divf %276, %277 : vector<1x128xf32>
    %c1_i32_83 = arith.constant 1 : i32
    %279 = tpu.dynamic_rotate %257 by %c1_i32_83 dim 1 : vector<1x128xf32>, i32 -> vector<1x128xf32>
    %c127_i32_84 = arith.constant 127 : i32
    %280 = tpu.dynamic_rotate %257 by %c127_i32_84 dim 1 : vector<1x128xf32>, i32 -> vector<1x128xf32>
    %cst_85 = arith.constant 1.000000e+00 : f32
    %281 = vector.broadcast %cst_85 : f32 to vector<1x128xf32>
    %282 = arith.select %9, %281, %279 : vector<1x128xi1>, vector<1x128xf32>
    %cst_86 = arith.constant -1.000000e+00 : f32
    %283 = vector.broadcast %cst_86 : f32 to vector<1x128xf32>
    %284 = arith.mulf %283, %257 : vector<1x128xf32>
    %cst_87 = arith.constant 1.000000e+00 : f32
    %285 = vector.broadcast %cst_87 : f32 to vector<1x128xf32>
    %286 = arith.mulf %285, %282 : vector<1x128xf32>
    %287 = arith.addf %284, %286 : vector<1x128xf32>
    %cst_88 = arith.constant -1.000000e+00 : f32
    %288 = vector.broadcast %cst_88 : f32 to vector<1x128xf32>
    %289 = arith.mulf %288, %257 : vector<1x128xf32>
    %cst_89 = arith.constant 1.000000e+00 : f32
    %290 = vector.broadcast %cst_89 : f32 to vector<1x128xf32>
    %291 = arith.mulf %290, %280 : vector<1x128xf32>
    %292 = arith.addf %289, %291 : vector<1x128xf32>
    %cst_90 = arith.constant 0.000000e+00 : f32
    %293 = vector.broadcast %cst_90 : f32 to vector<1x128xf32>
    %294 = arith.select %11, %293, %292 : vector<1x128xi1>, vector<1x128xf32>
    %295 = vector.broadcast %6 : f32 to vector<1x128xf32>
    %296 = arith.mulf %278, %295 : vector<1x128xf32>
    %297 = arith.addf %287, %294 : vector<1x128xf32>
    %298 = arith.mulf %296, %297 : vector<1x128xf32>
    %cst_91 = arith.constant 5.000000e-01 : f32
    %299 = arith.mulf %cst_91, %212 : f32
    %300 = vector.broadcast %299 : f32 to vector<1x128xf32>
    %301 = arith.mulf %300, %298 : vector<1x128xf32>
    %302 = arith.addf %203, %301 : vector<1x128xf32>
    %303 = vector.broadcast %0 : vector<32x1xf32> to vector<32x128xf32>
    %304 = vector.broadcast %302 : vector<1x128xf32> to vector<32x128xf32>
    %305 = arith.mulf %303, %304 : vector<32x128xf32>
    %306 = vector.broadcast %1 : vector<32x1xf32> to vector<32x128xf32>
    %307 = arith.addf %305, %306 : vector<32x128xf32>
    %308 = math.tanh %307 : vector<32x128xf32>
    %cst_92 = arith.constant dense<0.000000e+00> : vector<32x128xf32>
    %309 = tpu.matmul %2, %308, %cst_92 {dimension_numbers = #tpu.dot_dimension_numbers<[1], [0], [0], [1], [0, 0, 1, 1], [], []>} : vector<32x32xf32>, vector<32x128xf32>, vector<32x128xf32> -> vector<32x128xf32>
    %310 = vector.broadcast %3 : vector<32x1xf32> to vector<32x128xf32>
    %311 = arith.addf %309, %310 : vector<32x128xf32>
    %312 = math.tanh %311 : vector<32x128xf32>
    %313 = vector.broadcast %4 : vector<32x1xf32> to vector<32x128xf32>
    %314 = arith.mulf %313, %312 : vector<32x128xf32>
    %cst_93 = arith.constant dense<0.000000e+00> : vector<128xf32>
    %315 = vector.multi_reduction <add>, %314, %cst_93 [0] : vector<32x128xf32> to vector<128xf32>
    %316 = vector.shape_cast %315 : vector<128xf32> to vector<1x128xf32>
    %317 = vector.broadcast %5 : vector<1x1xf32> to vector<1x128xf32>
    %318 = arith.addf %316, %317 : vector<1x128xf32>
    %319 = arith.negf %318 : vector<1x128xf32>
    %320 = math.exp %319 : vector<1x128xf32>
    %cst_94 = arith.constant 1.000000e+00 : f32
    %321 = vector.broadcast %cst_94 : f32 to vector<1x128xf32>
    %322 = arith.addf %321, %320 : vector<1x128xf32>
    %323 = arith.divf %321, %322 : vector<1x128xf32>
    %c1_i32_95 = arith.constant 1 : i32
    %324 = tpu.dynamic_rotate %302 by %c1_i32_95 dim 1 : vector<1x128xf32>, i32 -> vector<1x128xf32>
    %c127_i32_96 = arith.constant 127 : i32
    %325 = tpu.dynamic_rotate %302 by %c127_i32_96 dim 1 : vector<1x128xf32>, i32 -> vector<1x128xf32>
    %cst_97 = arith.constant 1.000000e+00 : f32
    %326 = vector.broadcast %cst_97 : f32 to vector<1x128xf32>
    %327 = arith.select %9, %326, %324 : vector<1x128xi1>, vector<1x128xf32>
    %cst_98 = arith.constant -1.000000e+00 : f32
    %328 = vector.broadcast %cst_98 : f32 to vector<1x128xf32>
    %329 = arith.mulf %328, %302 : vector<1x128xf32>
    %cst_99 = arith.constant 1.000000e+00 : f32
    %330 = vector.broadcast %cst_99 : f32 to vector<1x128xf32>
    %331 = arith.mulf %330, %327 : vector<1x128xf32>
    %332 = arith.addf %329, %331 : vector<1x128xf32>
    %cst_100 = arith.constant -1.000000e+00 : f32
    %333 = vector.broadcast %cst_100 : f32 to vector<1x128xf32>
    %334 = arith.mulf %333, %302 : vector<1x128xf32>
    %cst_101 = arith.constant 1.000000e+00 : f32
    %335 = vector.broadcast %cst_101 : f32 to vector<1x128xf32>
    %336 = arith.mulf %335, %325 : vector<1x128xf32>
    %337 = arith.addf %334, %336 : vector<1x128xf32>
    %cst_102 = arith.constant 0.000000e+00 : f32
    %338 = vector.broadcast %cst_102 : f32 to vector<1x128xf32>
    %339 = arith.select %11, %338, %337 : vector<1x128xi1>, vector<1x128xf32>
    %340 = vector.broadcast %6 : f32 to vector<1x128xf32>
    %341 = arith.mulf %323, %340 : vector<1x128xf32>
    %342 = arith.addf %332, %339 : vector<1x128xf32>
    %343 = arith.mulf %341, %342 : vector<1x128xf32>
    %344 = vector.broadcast %212 : f32 to vector<1x128xf32>
    %345 = arith.mulf %344, %343 : vector<1x128xf32>
    %346 = arith.addf %203, %345 : vector<1x128xf32>
    %347 = vector.broadcast %0 : vector<32x1xf32> to vector<32x128xf32>
    %348 = vector.broadcast %346 : vector<1x128xf32> to vector<32x128xf32>
    %349 = arith.mulf %347, %348 : vector<32x128xf32>
    %350 = vector.broadcast %1 : vector<32x1xf32> to vector<32x128xf32>
    %351 = arith.addf %349, %350 : vector<32x128xf32>
    %352 = math.tanh %351 : vector<32x128xf32>
    %cst_103 = arith.constant dense<0.000000e+00> : vector<32x128xf32>
    %353 = tpu.matmul %2, %352, %cst_103 {dimension_numbers = #tpu.dot_dimension_numbers<[1], [0], [0], [1], [0, 0, 1, 1], [], []>} : vector<32x32xf32>, vector<32x128xf32>, vector<32x128xf32> -> vector<32x128xf32>
    %354 = vector.broadcast %3 : vector<32x1xf32> to vector<32x128xf32>
    %355 = arith.addf %353, %354 : vector<32x128xf32>
    %356 = math.tanh %355 : vector<32x128xf32>
    %357 = vector.broadcast %4 : vector<32x1xf32> to vector<32x128xf32>
    %358 = arith.mulf %357, %356 : vector<32x128xf32>
    %cst_104 = arith.constant dense<0.000000e+00> : vector<128xf32>
    %359 = vector.multi_reduction <add>, %358, %cst_104 [0] : vector<32x128xf32> to vector<128xf32>
    %360 = vector.shape_cast %359 : vector<128xf32> to vector<1x128xf32>
    %361 = vector.broadcast %5 : vector<1x1xf32> to vector<1x128xf32>
    %362 = arith.addf %360, %361 : vector<1x128xf32>
    %363 = arith.negf %362 : vector<1x128xf32>
    %364 = math.exp %363 : vector<1x128xf32>
    %cst_105 = arith.constant 1.000000e+00 : f32
    %365 = vector.broadcast %cst_105 : f32 to vector<1x128xf32>
    %366 = arith.addf %365, %364 : vector<1x128xf32>
    %367 = arith.divf %365, %366 : vector<1x128xf32>
    %c1_i32_106 = arith.constant 1 : i32
    %368 = tpu.dynamic_rotate %346 by %c1_i32_106 dim 1 : vector<1x128xf32>, i32 -> vector<1x128xf32>
    %c127_i32_107 = arith.constant 127 : i32
    %369 = tpu.dynamic_rotate %346 by %c127_i32_107 dim 1 : vector<1x128xf32>, i32 -> vector<1x128xf32>
    %cst_108 = arith.constant 1.000000e+00 : f32
    %370 = vector.broadcast %cst_108 : f32 to vector<1x128xf32>
    %371 = arith.select %9, %370, %368 : vector<1x128xi1>, vector<1x128xf32>
    %cst_109 = arith.constant -1.000000e+00 : f32
    %372 = vector.broadcast %cst_109 : f32 to vector<1x128xf32>
    %373 = arith.mulf %372, %346 : vector<1x128xf32>
    %cst_110 = arith.constant 1.000000e+00 : f32
    %374 = vector.broadcast %cst_110 : f32 to vector<1x128xf32>
    %375 = arith.mulf %374, %371 : vector<1x128xf32>
    %376 = arith.addf %373, %375 : vector<1x128xf32>
    %cst_111 = arith.constant -1.000000e+00 : f32
    %377 = vector.broadcast %cst_111 : f32 to vector<1x128xf32>
    %378 = arith.mulf %377, %346 : vector<1x128xf32>
    %cst_112 = arith.constant 1.000000e+00 : f32
    %379 = vector.broadcast %cst_112 : f32 to vector<1x128xf32>
    %380 = arith.mulf %379, %369 : vector<1x128xf32>
    %381 = arith.addf %378, %380 : vector<1x128xf32>
    %cst_113 = arith.constant 0.000000e+00 : f32
    %382 = vector.broadcast %cst_113 : f32 to vector<1x128xf32>
    %383 = arith.select %11, %382, %381 : vector<1x128xi1>, vector<1x128xf32>
    %384 = vector.broadcast %6 : f32 to vector<1x128xf32>
    %385 = arith.mulf %367, %384 : vector<1x128xf32>
    %386 = arith.addf %376, %383 : vector<1x128xf32>
    %387 = arith.mulf %385, %386 : vector<1x128xf32>
    %cst_114 = arith.constant 6.000000e+00 : f32
    %388 = arith.divf %212, %cst_114 : f32
    %389 = arith.addf %298, %343 : vector<1x128xf32>
    %cst_115 = arith.constant 2.000000e+00 : f32
    %390 = vector.broadcast %cst_115 : f32 to vector<1x128xf32>
    %391 = arith.mulf %390, %389 : vector<1x128xf32>
    %392 = arith.addf %253, %391 : vector<1x128xf32>
    %393 = arith.addf %392, %387 : vector<1x128xf32>
    %394 = vector.broadcast %388 : f32 to vector<1x128xf32>
    %395 = arith.mulf %394, %393 : vector<1x128xf32>
    %396 = arith.addf %203, %395 : vector<1x128xf32>
    %c1_i32_116 = arith.constant 1 : i32
    %397 = arith.addi %c1_i32_66, %c1_i32_116 : i32
    %398 = arith.index_cast %397 : i32 to index
    %c0_117 = arith.constant 0 : index
    %399 = vector.load %arg9[%398, %c0_117] : memref<8x128xf32, #tpu.memory_space<vmem>>, vector<1x128xf32>
    tpu.vector_store %arg9[%398, %c0_117], %396 {strides = array<i32>} : memref<8x128xf32, #tpu.memory_space<vmem>>, vector<1x128xf32>,
    %c2_i32 = arith.constant 2 : i32
    %400 = arith.index_cast %c2_i32 : i32 to index
    %401 = memref.load %arg0[%400] : memref<8xf32, #tpu.memory_space<smem>>
    %c1_i32_118 = arith.constant 1 : i32
    %402 = arith.addi %c2_i32, %c1_i32_118 : i32
    %403 = arith.index_cast %402 : i32 to index
    %404 = memref.load %arg0[%403] : memref<8xf32, #tpu.memory_space<smem>>
    %405 = arith.subf %404, %401 : f32
    %406 = vector.broadcast %0 : vector<32x1xf32> to vector<32x128xf32>
    %407 = vector.broadcast %396 : vector<1x128xf32> to vector<32x128xf32>
    %408 = arith.mulf %406, %407 : vector<32x128xf32>
    %409 = vector.broadcast %1 : vector<32x1xf32> to vector<32x128xf32>
    %410 = arith.addf %408, %409 : vector<32x128xf32>
    %411 = math.tanh %410 : vector<32x128xf32>
    %cst_119 = arith.constant dense<0.000000e+00> : vector<32x128xf32>
    %412 = tpu.matmul %2, %411, %cst_119 {dimension_numbers = #tpu.dot_dimension_numbers<[1], [0], [0], [1], [0, 0, 1, 1], [], []>} : vector<32x32xf32>, vector<32x128xf32>, vector<32x128xf32> -> vector<32x128xf32>
    %413 = vector.broadcast %3 : vector<32x1xf32> to vector<32x128xf32>
    %414 = arith.addf %412, %413 : vector<32x128xf32>
    %415 = math.tanh %414 : vector<32x128xf32>
    %416 = vector.broadcast %4 : vector<32x1xf32> to vector<32x128xf32>
    %417 = arith.mulf %416, %415 : vector<32x128xf32>
    %cst_120 = arith.constant dense<0.000000e+00> : vector<128xf32>
    %418 = vector.multi_reduction <add>, %417, %cst_120 [0] : vector<32x128xf32> to vector<128xf32>
    %419 = vector.shape_cast %418 : vector<128xf32> to vector<1x128xf32>
    %420 = vector.broadcast %5 : vector<1x1xf32> to vector<1x128xf32>
    %421 = arith.addf %419, %420 : vector<1x128xf32>
    %422 = arith.negf %421 : vector<1x128xf32>
    %423 = math.exp %422 : vector<1x128xf32>
    %cst_121 = arith.constant 1.000000e+00 : f32
    %424 = vector.broadcast %cst_121 : f32 to vector<1x128xf32>
    %425 = arith.addf %424, %423 : vector<1x128xf32>
    %426 = arith.divf %424, %425 : vector<1x128xf32>
    %c1_i32_122 = arith.constant 1 : i32
    %427 = tpu.dynamic_rotate %396 by %c1_i32_122 dim 1 : vector<1x128xf32>, i32 -> vector<1x128xf32>
    %c127_i32_123 = arith.constant 127 : i32
    %428 = tpu.dynamic_rotate %396 by %c127_i32_123 dim 1 : vector<1x128xf32>, i32 -> vector<1x128xf32>
    %cst_124 = arith.constant 1.000000e+00 : f32
    %429 = vector.broadcast %cst_124 : f32 to vector<1x128xf32>
    %430 = arith.select %9, %429, %427 : vector<1x128xi1>, vector<1x128xf32>
    %cst_125 = arith.constant -1.000000e+00 : f32
    %431 = vector.broadcast %cst_125 : f32 to vector<1x128xf32>
    %432 = arith.mulf %431, %396 : vector<1x128xf32>
    %cst_126 = arith.constant 1.000000e+00 : f32
    %433 = vector.broadcast %cst_126 : f32 to vector<1x128xf32>
    %434 = arith.mulf %433, %430 : vector<1x128xf32>
    %435 = arith.addf %432, %434 : vector<1x128xf32>
    %cst_127 = arith.constant -1.000000e+00 : f32
    %436 = vector.broadcast %cst_127 : f32 to vector<1x128xf32>
    %437 = arith.mulf %436, %396 : vector<1x128xf32>
    %cst_128 = arith.constant 1.000000e+00 : f32
    %438 = vector.broadcast %cst_128 : f32 to vector<1x128xf32>
    %439 = arith.mulf %438, %428 : vector<1x128xf32>
    %440 = arith.addf %437, %439 : vector<1x128xf32>
    %cst_129 = arith.constant 0.000000e+00 : f32
    %441 = vector.broadcast %cst_129 : f32 to vector<1x128xf32>
    %442 = arith.select %11, %441, %440 : vector<1x128xi1>, vector<1x128xf32>
    %443 = vector.broadcast %6 : f32 to vector<1x128xf32>
    %444 = arith.mulf %426, %443 : vector<1x128xf32>
    %445 = arith.addf %435, %442 : vector<1x128xf32>
    %446 = arith.mulf %444, %445 : vector<1x128xf32>
    %cst_130 = arith.constant 5.000000e-01 : f32
    %447 = arith.mulf %cst_130, %405 : f32
    %448 = vector.broadcast %447 : f32 to vector<1x128xf32>
    %449 = arith.mulf %448, %446 : vector<1x128xf32>
    %450 = arith.addf %396, %449 : vector<1x128xf32>
    %451 = vector.broadcast %0 : vector<32x1xf32> to vector<32x128xf32>
    %452 = vector.broadcast %450 : vector<1x128xf32> to vector<32x128xf32>
    %453 = arith.mulf %451, %452 : vector<32x128xf32>
    %454 = vector.broadcast %1 : vector<32x1xf32> to vector<32x128xf32>
    %455 = arith.addf %453, %454 : vector<32x128xf32>
    %456 = math.tanh %455 : vector<32x128xf32>
    %cst_131 = arith.constant dense<0.000000e+00> : vector<32x128xf32>
    %457 = tpu.matmul %2, %456, %cst_131 {dimension_numbers = #tpu.dot_dimension_numbers<[1], [0], [0], [1], [0, 0, 1, 1], [], []>} : vector<32x32xf32>, vector<32x128xf32>, vector<32x128xf32> -> vector<32x128xf32>
    %458 = vector.broadcast %3 : vector<32x1xf32> to vector<32x128xf32>
    %459 = arith.addf %457, %458 : vector<32x128xf32>
    %460 = math.tanh %459 : vector<32x128xf32>
    %461 = vector.broadcast %4 : vector<32x1xf32> to vector<32x128xf32>
    %462 = arith.mulf %461, %460 : vector<32x128xf32>
    %cst_132 = arith.constant dense<0.000000e+00> : vector<128xf32>
    %463 = vector.multi_reduction <add>, %462, %cst_132 [0] : vector<32x128xf32> to vector<128xf32>
    %464 = vector.shape_cast %463 : vector<128xf32> to vector<1x128xf32>
    %465 = vector.broadcast %5 : vector<1x1xf32> to vector<1x128xf32>
    %466 = arith.addf %464, %465 : vector<1x128xf32>
    %467 = arith.negf %466 : vector<1x128xf32>
    %468 = math.exp %467 : vector<1x128xf32>
    %cst_133 = arith.constant 1.000000e+00 : f32
    %469 = vector.broadcast %cst_133 : f32 to vector<1x128xf32>
    %470 = arith.addf %469, %468 : vector<1x128xf32>
    %471 = arith.divf %469, %470 : vector<1x128xf32>
    %c1_i32_134 = arith.constant 1 : i32
    %472 = tpu.dynamic_rotate %450 by %c1_i32_134 dim 1 : vector<1x128xf32>, i32 -> vector<1x128xf32>
    %c127_i32_135 = arith.constant 127 : i32
    %473 = tpu.dynamic_rotate %450 by %c127_i32_135 dim 1 : vector<1x128xf32>, i32 -> vector<1x128xf32>
    %cst_136 = arith.constant 1.000000e+00 : f32
    %474 = vector.broadcast %cst_136 : f32 to vector<1x128xf32>
    %475 = arith.select %9, %474, %472 : vector<1x128xi1>, vector<1x128xf32>
    %cst_137 = arith.constant -1.000000e+00 : f32
    %476 = vector.broadcast %cst_137 : f32 to vector<1x128xf32>
    %477 = arith.mulf %476, %450 : vector<1x128xf32>
    %cst_138 = arith.constant 1.000000e+00 : f32
    %478 = vector.broadcast %cst_138 : f32 to vector<1x128xf32>
    %479 = arith.mulf %478, %475 : vector<1x128xf32>
    %480 = arith.addf %477, %479 : vector<1x128xf32>
    %cst_139 = arith.constant -1.000000e+00 : f32
    %481 = vector.broadcast %cst_139 : f32 to vector<1x128xf32>
    %482 = arith.mulf %481, %450 : vector<1x128xf32>
    %cst_140 = arith.constant 1.000000e+00 : f32
    %483 = vector.broadcast %cst_140 : f32 to vector<1x128xf32>
    %484 = arith.mulf %483, %473 : vector<1x128xf32>
    %485 = arith.addf %482, %484 : vector<1x128xf32>
    %cst_141 = arith.constant 0.000000e+00 : f32
    %486 = vector.broadcast %cst_141 : f32 to vector<1x128xf32>
    %487 = arith.select %11, %486, %485 : vector<1x128xi1>, vector<1x128xf32>
    %488 = vector.broadcast %6 : f32 to vector<1x128xf32>
    %489 = arith.mulf %471, %488 : vector<1x128xf32>
    %490 = arith.addf %480, %487 : vector<1x128xf32>
    %491 = arith.mulf %489, %490 : vector<1x128xf32>
    %cst_142 = arith.constant 5.000000e-01 : f32
    %492 = arith.mulf %cst_142, %405 : f32
    %493 = vector.broadcast %492 : f32 to vector<1x128xf32>
    %494 = arith.mulf %493, %491 : vector<1x128xf32>
    %495 = arith.addf %396, %494 : vector<1x128xf32>
    %496 = vector.broadcast %0 : vector<32x1xf32> to vector<32x128xf32>
    %497 = vector.broadcast %495 : vector<1x128xf32> to vector<32x128xf32>
    %498 = arith.mulf %496, %497 : vector<32x128xf32>
    %499 = vector.broadcast %1 : vector<32x1xf32> to vector<32x128xf32>
    %500 = arith.addf %498, %499 : vector<32x128xf32>
    %501 = math.tanh %500 : vector<32x128xf32>
    %cst_143 = arith.constant dense<0.000000e+00> : vector<32x128xf32>
    %502 = tpu.matmul %2, %501, %cst_143 {dimension_numbers = #tpu.dot_dimension_numbers<[1], [0], [0], [1], [0, 0, 1, 1], [], []>} : vector<32x32xf32>, vector<32x128xf32>, vector<32x128xf32> -> vector<32x128xf32>
    %503 = vector.broadcast %3 : vector<32x1xf32> to vector<32x128xf32>
    %504 = arith.addf %502, %503 : vector<32x128xf32>
    %505 = math.tanh %504 : vector<32x128xf32>
    %506 = vector.broadcast %4 : vector<32x1xf32> to vector<32x128xf32>
    %507 = arith.mulf %506, %505 : vector<32x128xf32>
    %cst_144 = arith.constant dense<0.000000e+00> : vector<128xf32>
    %508 = vector.multi_reduction <add>, %507, %cst_144 [0] : vector<32x128xf32> to vector<128xf32>
    %509 = vector.shape_cast %508 : vector<128xf32> to vector<1x128xf32>
    %510 = vector.broadcast %5 : vector<1x1xf32> to vector<1x128xf32>
    %511 = arith.addf %509, %510 : vector<1x128xf32>
    %512 = arith.negf %511 : vector<1x128xf32>
    %513 = math.exp %512 : vector<1x128xf32>
    %cst_145 = arith.constant 1.000000e+00 : f32
    %514 = vector.broadcast %cst_145 : f32 to vector<1x128xf32>
    %515 = arith.addf %514, %513 : vector<1x128xf32>
    %516 = arith.divf %514, %515 : vector<1x128xf32>
    %c1_i32_146 = arith.constant 1 : i32
    %517 = tpu.dynamic_rotate %495 by %c1_i32_146 dim 1 : vector<1x128xf32>, i32 -> vector<1x128xf32>
    %c127_i32_147 = arith.constant 127 : i32
    %518 = tpu.dynamic_rotate %495 by %c127_i32_147 dim 1 : vector<1x128xf32>, i32 -> vector<1x128xf32>
    %cst_148 = arith.constant 1.000000e+00 : f32
    %519 = vector.broadcast %cst_148 : f32 to vector<1x128xf32>
    %520 = arith.select %9, %519, %517 : vector<1x128xi1>, vector<1x128xf32>
    %cst_149 = arith.constant -1.000000e+00 : f32
    %521 = vector.broadcast %cst_149 : f32 to vector<1x128xf32>
    %522 = arith.mulf %521, %495 : vector<1x128xf32>
    %cst_150 = arith.constant 1.000000e+00 : f32
    %523 = vector.broadcast %cst_150 : f32 to vector<1x128xf32>
    %524 = arith.mulf %523, %520 : vector<1x128xf32>
    %525 = arith.addf %522, %524 : vector<1x128xf32>
    %cst_151 = arith.constant -1.000000e+00 : f32
    %526 = vector.broadcast %cst_151 : f32 to vector<1x128xf32>
    %527 = arith.mulf %526, %495 : vector<1x128xf32>
    %cst_152 = arith.constant 1.000000e+00 : f32
    %528 = vector.broadcast %cst_152 : f32 to vector<1x128xf32>
    %529 = arith.mulf %528, %518 : vector<1x128xf32>
    %530 = arith.addf %527, %529 : vector<1x128xf32>
    %cst_153 = arith.constant 0.000000e+00 : f32
    %531 = vector.broadcast %cst_153 : f32 to vector<1x128xf32>
    %532 = arith.select %11, %531, %530 : vector<1x128xi1>, vector<1x128xf32>
    %533 = vector.broadcast %6 : f32 to vector<1x128xf32>
    %534 = arith.mulf %516, %533 : vector<1x128xf32>
    %535 = arith.addf %525, %532 : vector<1x128xf32>
    %536 = arith.mulf %534, %535 : vector<1x128xf32>
    %537 = vector.broadcast %405 : f32 to vector<1x128xf32>
    %538 = arith.mulf %537, %536 : vector<1x128xf32>
    %539 = arith.addf %396, %538 : vector<1x128xf32>
    %540 = vector.broadcast %0 : vector<32x1xf32> to vector<32x128xf32>
    %541 = vector.broadcast %539 : vector<1x128xf32> to vector<32x128xf32>
    %542 = arith.mulf %540, %541 : vector<32x128xf32>
    %543 = vector.broadcast %1 : vector<32x1xf32> to vector<32x128xf32>
    %544 = arith.addf %542, %543 : vector<32x128xf32>
    %545 = math.tanh %544 : vector<32x128xf32>
    %cst_154 = arith.constant dense<0.000000e+00> : vector<32x128xf32>
    %546 = tpu.matmul %2, %545, %cst_154 {dimension_numbers = #tpu.dot_dimension_numbers<[1], [0], [0], [1], [0, 0, 1, 1], [], []>} : vector<32x32xf32>, vector<32x128xf32>, vector<32x128xf32> -> vector<32x128xf32>
    %547 = vector.broadcast %3 : vector<32x1xf32> to vector<32x128xf32>
    %548 = arith.addf %546, %547 : vector<32x128xf32>
    %549 = math.tanh %548 : vector<32x128xf32>
    %550 = vector.broadcast %4 : vector<32x1xf32> to vector<32x128xf32>
    %551 = arith.mulf %550, %549 : vector<32x128xf32>
    %cst_155 = arith.constant dense<0.000000e+00> : vector<128xf32>
    %552 = vector.multi_reduction <add>, %551, %cst_155 [0] : vector<32x128xf32> to vector<128xf32>
    %553 = vector.shape_cast %552 : vector<128xf32> to vector<1x128xf32>
    %554 = vector.broadcast %5 : vector<1x1xf32> to vector<1x128xf32>
    %555 = arith.addf %553, %554 : vector<1x128xf32>
    %556 = arith.negf %555 : vector<1x128xf32>
    %557 = math.exp %556 : vector<1x128xf32>
    %cst_156 = arith.constant 1.000000e+00 : f32
    %558 = vector.broadcast %cst_156 : f32 to vector<1x128xf32>
    %559 = arith.addf %558, %557 : vector<1x128xf32>
    %560 = arith.divf %558, %559 : vector<1x128xf32>
    %c1_i32_157 = arith.constant 1 : i32
    %561 = tpu.dynamic_rotate %539 by %c1_i32_157 dim 1 : vector<1x128xf32>, i32 -> vector<1x128xf32>
    %c127_i32_158 = arith.constant 127 : i32
    %562 = tpu.dynamic_rotate %539 by %c127_i32_158 dim 1 : vector<1x128xf32>, i32 -> vector<1x128xf32>
    %cst_159 = arith.constant 1.000000e+00 : f32
    %563 = vector.broadcast %cst_159 : f32 to vector<1x128xf32>
    %564 = arith.select %9, %563, %561 : vector<1x128xi1>, vector<1x128xf32>
    %cst_160 = arith.constant -1.000000e+00 : f32
    %565 = vector.broadcast %cst_160 : f32 to vector<1x128xf32>
    %566 = arith.mulf %565, %539 : vector<1x128xf32>
    %cst_161 = arith.constant 1.000000e+00 : f32
    %567 = vector.broadcast %cst_161 : f32 to vector<1x128xf32>
    %568 = arith.mulf %567, %564 : vector<1x128xf32>
    %569 = arith.addf %566, %568 : vector<1x128xf32>
    %cst_162 = arith.constant -1.000000e+00 : f32
    %570 = vector.broadcast %cst_162 : f32 to vector<1x128xf32>
    %571 = arith.mulf %570, %539 : vector<1x128xf32>
    %cst_163 = arith.constant 1.000000e+00 : f32
    %572 = vector.broadcast %cst_163 : f32 to vector<1x128xf32>
    %573 = arith.mulf %572, %562 : vector<1x128xf32>
    %574 = arith.addf %571, %573 : vector<1x128xf32>
    %cst_164 = arith.constant 0.000000e+00 : f32
    %575 = vector.broadcast %cst_164 : f32 to vector<1x128xf32>
    %576 = arith.select %11, %575, %574 : vector<1x128xi1>, vector<1x128xf32>
    %577 = vector.broadcast %6 : f32 to vector<1x128xf32>
    %578 = arith.mulf %560, %577 : vector<1x128xf32>
    %579 = arith.addf %569, %576 : vector<1x128xf32>
    %580 = arith.mulf %578, %579 : vector<1x128xf32>
    %cst_165 = arith.constant 6.000000e+00 : f32
    %581 = arith.divf %405, %cst_165 : f32
    %582 = arith.addf %491, %536 : vector<1x128xf32>
    %cst_166 = arith.constant 2.000000e+00 : f32
    %583 = vector.broadcast %cst_166 : f32 to vector<1x128xf32>
    %584 = arith.mulf %583, %582 : vector<1x128xf32>
    %585 = arith.addf %446, %584 : vector<1x128xf32>
    %586 = arith.addf %585, %580 : vector<1x128xf32>
    %587 = vector.broadcast %581 : f32 to vector<1x128xf32>
    %588 = arith.mulf %587, %586 : vector<1x128xf32>
    %589 = arith.addf %396, %588 : vector<1x128xf32>
    %c1_i32_167 = arith.constant 1 : i32
    %590 = arith.addi %c2_i32, %c1_i32_167 : i32
    %591 = arith.index_cast %590 : i32 to index
    %c0_168 = arith.constant 0 : index
    %592 = vector.load %arg9[%591, %c0_168] : memref<8x128xf32, #tpu.memory_space<vmem>>, vector<1x128xf32>
    tpu.vector_store %arg9[%591, %c0_168], %589 {strides = array<i32>} : memref<8x128xf32, #tpu.memory_space<vmem>>, vector<1x128xf32>,
    %c3_i32 = arith.constant 3 : i32
    %593 = arith.index_cast %c3_i32 : i32 to index
    %594 = memref.load %arg0[%593] : memref<8xf32, #tpu.memory_space<smem>>
    %c1_i32_169 = arith.constant 1 : i32
    %595 = arith.addi %c3_i32, %c1_i32_169 : i32
    %596 = arith.index_cast %595 : i32 to index
    %597 = memref.load %arg0[%596] : memref<8xf32, #tpu.memory_space<smem>>
    %598 = arith.subf %597, %594 : f32
    %599 = vector.broadcast %0 : vector<32x1xf32> to vector<32x128xf32>
    %600 = vector.broadcast %589 : vector<1x128xf32> to vector<32x128xf32>
    %601 = arith.mulf %599, %600 : vector<32x128xf32>
    %602 = vector.broadcast %1 : vector<32x1xf32> to vector<32x128xf32>
    %603 = arith.addf %601, %602 : vector<32x128xf32>
    %604 = math.tanh %603 : vector<32x128xf32>
    %cst_170 = arith.constant dense<0.000000e+00> : vector<32x128xf32>
    %605 = tpu.matmul %2, %604, %cst_170 {dimension_numbers = #tpu.dot_dimension_numbers<[1], [0], [0], [1], [0, 0, 1, 1], [], []>} : vector<32x32xf32>, vector<32x128xf32>, vector<32x128xf32> -> vector<32x128xf32>
    %606 = vector.broadcast %3 : vector<32x1xf32> to vector<32x128xf32>
    %607 = arith.addf %605, %606 : vector<32x128xf32>
    %608 = math.tanh %607 : vector<32x128xf32>
    %609 = vector.broadcast %4 : vector<32x1xf32> to vector<32x128xf32>
    %610 = arith.mulf %609, %608 : vector<32x128xf32>
    %cst_171 = arith.constant dense<0.000000e+00> : vector<128xf32>
    %611 = vector.multi_reduction <add>, %610, %cst_171 [0] : vector<32x128xf32> to vector<128xf32>
    %612 = vector.shape_cast %611 : vector<128xf32> to vector<1x128xf32>
    %613 = vector.broadcast %5 : vector<1x1xf32> to vector<1x128xf32>
    %614 = arith.addf %612, %613 : vector<1x128xf32>
    %615 = arith.negf %614 : vector<1x128xf32>
    %616 = math.exp %615 : vector<1x128xf32>
    %cst_172 = arith.constant 1.000000e+00 : f32
    %617 = vector.broadcast %cst_172 : f32 to vector<1x128xf32>
    %618 = arith.addf %617, %616 : vector<1x128xf32>
    %619 = arith.divf %617, %618 : vector<1x128xf32>
    %c1_i32_173 = arith.constant 1 : i32
    %620 = tpu.dynamic_rotate %589 by %c1_i32_173 dim 1 : vector<1x128xf32>, i32 -> vector<1x128xf32>
    %c127_i32_174 = arith.constant 127 : i32
    %621 = tpu.dynamic_rotate %589 by %c127_i32_174 dim 1 : vector<1x128xf32>, i32 -> vector<1x128xf32>
    %cst_175 = arith.constant 1.000000e+00 : f32
    %622 = vector.broadcast %cst_175 : f32 to vector<1x128xf32>
    %623 = arith.select %9, %622, %620 : vector<1x128xi1>, vector<1x128xf32>
    %cst_176 = arith.constant -1.000000e+00 : f32
    %624 = vector.broadcast %cst_176 : f32 to vector<1x128xf32>
    %625 = arith.mulf %624, %589 : vector<1x128xf32>
    %cst_177 = arith.constant 1.000000e+00 : f32
    %626 = vector.broadcast %cst_177 : f32 to vector<1x128xf32>
    %627 = arith.mulf %626, %623 : vector<1x128xf32>
    %628 = arith.addf %625, %627 : vector<1x128xf32>
    %cst_178 = arith.constant -1.000000e+00 : f32
    %629 = vector.broadcast %cst_178 : f32 to vector<1x128xf32>
    %630 = arith.mulf %629, %589 : vector<1x128xf32>
    %cst_179 = arith.constant 1.000000e+00 : f32
    %631 = vector.broadcast %cst_179 : f32 to vector<1x128xf32>
    %632 = arith.mulf %631, %621 : vector<1x128xf32>
    %633 = arith.addf %630, %632 : vector<1x128xf32>
    %cst_180 = arith.constant 0.000000e+00 : f32
    %634 = vector.broadcast %cst_180 : f32 to vector<1x128xf32>
    %635 = arith.select %11, %634, %633 : vector<1x128xi1>, vector<1x128xf32>
    %636 = vector.broadcast %6 : f32 to vector<1x128xf32>
    %637 = arith.mulf %619, %636 : vector<1x128xf32>
    %638 = arith.addf %628, %635 : vector<1x128xf32>
    %639 = arith.mulf %637, %638 : vector<1x128xf32>
    %cst_181 = arith.constant 5.000000e-01 : f32
    %640 = arith.mulf %cst_181, %598 : f32
    %641 = vector.broadcast %640 : f32 to vector<1x128xf32>
    %642 = arith.mulf %641, %639 : vector<1x128xf32>
    %643 = arith.addf %589, %642 : vector<1x128xf32>
    %644 = vector.broadcast %0 : vector<32x1xf32> to vector<32x128xf32>
    %645 = vector.broadcast %643 : vector<1x128xf32> to vector<32x128xf32>
    %646 = arith.mulf %644, %645 : vector<32x128xf32>
    %647 = vector.broadcast %1 : vector<32x1xf32> to vector<32x128xf32>
    %648 = arith.addf %646, %647 : vector<32x128xf32>
    %649 = math.tanh %648 : vector<32x128xf32>
    %cst_182 = arith.constant dense<0.000000e+00> : vector<32x128xf32>
    %650 = tpu.matmul %2, %649, %cst_182 {dimension_numbers = #tpu.dot_dimension_numbers<[1], [0], [0], [1], [0, 0, 1, 1], [], []>} : vector<32x32xf32>, vector<32x128xf32>, vector<32x128xf32> -> vector<32x128xf32>
    %651 = vector.broadcast %3 : vector<32x1xf32> to vector<32x128xf32>
    %652 = arith.addf %650, %651 : vector<32x128xf32>
    %653 = math.tanh %652 : vector<32x128xf32>
    %654 = vector.broadcast %4 : vector<32x1xf32> to vector<32x128xf32>
    %655 = arith.mulf %654, %653 : vector<32x128xf32>
    %cst_183 = arith.constant dense<0.000000e+00> : vector<128xf32>
    %656 = vector.multi_reduction <add>, %655, %cst_183 [0] : vector<32x128xf32> to vector<128xf32>
    %657 = vector.shape_cast %656 : vector<128xf32> to vector<1x128xf32>
    %658 = vector.broadcast %5 : vector<1x1xf32> to vector<1x128xf32>
    %659 = arith.addf %657, %658 : vector<1x128xf32>
    %660 = arith.negf %659 : vector<1x128xf32>
    %661 = math.exp %660 : vector<1x128xf32>
    %cst_184 = arith.constant 1.000000e+00 : f32
    %662 = vector.broadcast %cst_184 : f32 to vector<1x128xf32>
    %663 = arith.addf %662, %661 : vector<1x128xf32>
    %664 = arith.divf %662, %663 : vector<1x128xf32>
    %c1_i32_185 = arith.constant 1 : i32
    %665 = tpu.dynamic_rotate %643 by %c1_i32_185 dim 1 : vector<1x128xf32>, i32 -> vector<1x128xf32>
    %c127_i32_186 = arith.constant 127 : i32
    %666 = tpu.dynamic_rotate %643 by %c127_i32_186 dim 1 : vector<1x128xf32>, i32 -> vector<1x128xf32>
    %cst_187 = arith.constant 1.000000e+00 : f32
    %667 = vector.broadcast %cst_187 : f32 to vector<1x128xf32>
    %668 = arith.select %9, %667, %665 : vector<1x128xi1>, vector<1x128xf32>
    %cst_188 = arith.constant -1.000000e+00 : f32
    %669 = vector.broadcast %cst_188 : f32 to vector<1x128xf32>
    %670 = arith.mulf %669, %643 : vector<1x128xf32>
    %cst_189 = arith.constant 1.000000e+00 : f32
    %671 = vector.broadcast %cst_189 : f32 to vector<1x128xf32>
    %672 = arith.mulf %671, %668 : vector<1x128xf32>
    %673 = arith.addf %670, %672 : vector<1x128xf32>
    %cst_190 = arith.constant -1.000000e+00 : f32
    %674 = vector.broadcast %cst_190 : f32 to vector<1x128xf32>
    %675 = arith.mulf %674, %643 : vector<1x128xf32>
    %cst_191 = arith.constant 1.000000e+00 : f32
    %676 = vector.broadcast %cst_191 : f32 to vector<1x128xf32>
    %677 = arith.mulf %676, %666 : vector<1x128xf32>
    %678 = arith.addf %675, %677 : vector<1x128xf32>
    %cst_192 = arith.constant 0.000000e+00 : f32
    %679 = vector.broadcast %cst_192 : f32 to vector<1x128xf32>
    %680 = arith.select %11, %679, %678 : vector<1x128xi1>, vector<1x128xf32>
    %681 = vector.broadcast %6 : f32 to vector<1x128xf32>
    %682 = arith.mulf %664, %681 : vector<1x128xf32>
    %683 = arith.addf %673, %680 : vector<1x128xf32>
    %684 = arith.mulf %682, %683 : vector<1x128xf32>
    %cst_193 = arith.constant 5.000000e-01 : f32
    %685 = arith.mulf %cst_193, %598 : f32
    %686 = vector.broadcast %685 : f32 to vector<1x128xf32>
    %687 = arith.mulf %686, %684 : vector<1x128xf32>
    %688 = arith.addf %589, %687 : vector<1x128xf32>
    %689 = vector.broadcast %0 : vector<32x1xf32> to vector<32x128xf32>
    %690 = vector.broadcast %688 : vector<1x128xf32> to vector<32x128xf32>
    %691 = arith.mulf %689, %690 : vector<32x128xf32>
    %692 = vector.broadcast %1 : vector<32x1xf32> to vector<32x128xf32>
    %693 = arith.addf %691, %692 : vector<32x128xf32>
    %694 = math.tanh %693 : vector<32x128xf32>
    %cst_194 = arith.constant dense<0.000000e+00> : vector<32x128xf32>
    %695 = tpu.matmul %2, %694, %cst_194 {dimension_numbers = #tpu.dot_dimension_numbers<[1], [0], [0], [1], [0, 0, 1, 1], [], []>} : vector<32x32xf32>, vector<32x128xf32>, vector<32x128xf32> -> vector<32x128xf32>
    %696 = vector.broadcast %3 : vector<32x1xf32> to vector<32x128xf32>
    %697 = arith.addf %695, %696 : vector<32x128xf32>
    %698 = math.tanh %697 : vector<32x128xf32>
    %699 = vector.broadcast %4 : vector<32x1xf32> to vector<32x128xf32>
    %700 = arith.mulf %699, %698 : vector<32x128xf32>
    %cst_195 = arith.constant dense<0.000000e+00> : vector<128xf32>
    %701 = vector.multi_reduction <add>, %700, %cst_195 [0] : vector<32x128xf32> to vector<128xf32>
    %702 = vector.shape_cast %701 : vector<128xf32> to vector<1x128xf32>
    %703 = vector.broadcast %5 : vector<1x1xf32> to vector<1x128xf32>
    %704 = arith.addf %702, %703 : vector<1x128xf32>
    %705 = arith.negf %704 : vector<1x128xf32>
    %706 = math.exp %705 : vector<1x128xf32>
    %cst_196 = arith.constant 1.000000e+00 : f32
    %707 = vector.broadcast %cst_196 : f32 to vector<1x128xf32>
    %708 = arith.addf %707, %706 : vector<1x128xf32>
    %709 = arith.divf %707, %708 : vector<1x128xf32>
    %c1_i32_197 = arith.constant 1 : i32
    %710 = tpu.dynamic_rotate %688 by %c1_i32_197 dim 1 : vector<1x128xf32>, i32 -> vector<1x128xf32>
    %c127_i32_198 = arith.constant 127 : i32
    %711 = tpu.dynamic_rotate %688 by %c127_i32_198 dim 1 : vector<1x128xf32>, i32 -> vector<1x128xf32>
    %cst_199 = arith.constant 1.000000e+00 : f32
    %712 = vector.broadcast %cst_199 : f32 to vector<1x128xf32>
    %713 = arith.select %9, %712, %710 : vector<1x128xi1>, vector<1x128xf32>
    %cst_200 = arith.constant -1.000000e+00 : f32
    %714 = vector.broadcast %cst_200 : f32 to vector<1x128xf32>
    %715 = arith.mulf %714, %688 : vector<1x128xf32>
    %cst_201 = arith.constant 1.000000e+00 : f32
    %716 = vector.broadcast %cst_201 : f32 to vector<1x128xf32>
    %717 = arith.mulf %716, %713 : vector<1x128xf32>
    %718 = arith.addf %715, %717 : vector<1x128xf32>
    %cst_202 = arith.constant -1.000000e+00 : f32
    %719 = vector.broadcast %cst_202 : f32 to vector<1x128xf32>
    %720 = arith.mulf %719, %688 : vector<1x128xf32>
    %cst_203 = arith.constant 1.000000e+00 : f32
    %721 = vector.broadcast %cst_203 : f32 to vector<1x128xf32>
    %722 = arith.mulf %721, %711 : vector<1x128xf32>
    %723 = arith.addf %720, %722 : vector<1x128xf32>
    %cst_204 = arith.constant 0.000000e+00 : f32
    %724 = vector.broadcast %cst_204 : f32 to vector<1x128xf32>
    %725 = arith.select %11, %724, %723 : vector<1x128xi1>, vector<1x128xf32>
    %726 = vector.broadcast %6 : f32 to vector<1x128xf32>
    %727 = arith.mulf %709, %726 : vector<1x128xf32>
    %728 = arith.addf %718, %725 : vector<1x128xf32>
    %729 = arith.mulf %727, %728 : vector<1x128xf32>
    %730 = vector.broadcast %598 : f32 to vector<1x128xf32>
    %731 = arith.mulf %730, %729 : vector<1x128xf32>
    %732 = arith.addf %589, %731 : vector<1x128xf32>
    %733 = vector.broadcast %0 : vector<32x1xf32> to vector<32x128xf32>
    %734 = vector.broadcast %732 : vector<1x128xf32> to vector<32x128xf32>
    %735 = arith.mulf %733, %734 : vector<32x128xf32>
    %736 = vector.broadcast %1 : vector<32x1xf32> to vector<32x128xf32>
    %737 = arith.addf %735, %736 : vector<32x128xf32>
    %738 = math.tanh %737 : vector<32x128xf32>
    %cst_205 = arith.constant dense<0.000000e+00> : vector<32x128xf32>
    %739 = tpu.matmul %2, %738, %cst_205 {dimension_numbers = #tpu.dot_dimension_numbers<[1], [0], [0], [1], [0, 0, 1, 1], [], []>} : vector<32x32xf32>, vector<32x128xf32>, vector<32x128xf32> -> vector<32x128xf32>
    %740 = vector.broadcast %3 : vector<32x1xf32> to vector<32x128xf32>
    %741 = arith.addf %739, %740 : vector<32x128xf32>
    %742 = math.tanh %741 : vector<32x128xf32>
    %743 = vector.broadcast %4 : vector<32x1xf32> to vector<32x128xf32>
    %744 = arith.mulf %743, %742 : vector<32x128xf32>
    %cst_206 = arith.constant dense<0.000000e+00> : vector<128xf32>
    %745 = vector.multi_reduction <add>, %744, %cst_206 [0] : vector<32x128xf32> to vector<128xf32>
    %746 = vector.shape_cast %745 : vector<128xf32> to vector<1x128xf32>
    %747 = vector.broadcast %5 : vector<1x1xf32> to vector<1x128xf32>
    %748 = arith.addf %746, %747 : vector<1x128xf32>
    %749 = arith.negf %748 : vector<1x128xf32>
    %750 = math.exp %749 : vector<1x128xf32>
    %cst_207 = arith.constant 1.000000e+00 : f32
    %751 = vector.broadcast %cst_207 : f32 to vector<1x128xf32>
    %752 = arith.addf %751, %750 : vector<1x128xf32>
    %753 = arith.divf %751, %752 : vector<1x128xf32>
    %c1_i32_208 = arith.constant 1 : i32
    %754 = tpu.dynamic_rotate %732 by %c1_i32_208 dim 1 : vector<1x128xf32>, i32 -> vector<1x128xf32>
    %c127_i32_209 = arith.constant 127 : i32
    %755 = tpu.dynamic_rotate %732 by %c127_i32_209 dim 1 : vector<1x128xf32>, i32 -> vector<1x128xf32>
    %cst_210 = arith.constant 1.000000e+00 : f32
    %756 = vector.broadcast %cst_210 : f32 to vector<1x128xf32>
    %757 = arith.select %9, %756, %754 : vector<1x128xi1>, vector<1x128xf32>
    %cst_211 = arith.constant -1.000000e+00 : f32
    %758 = vector.broadcast %cst_211 : f32 to vector<1x128xf32>
    %759 = arith.mulf %758, %732 : vector<1x128xf32>
    %cst_212 = arith.constant 1.000000e+00 : f32
    %760 = vector.broadcast %cst_212 : f32 to vector<1x128xf32>
    %761 = arith.mulf %760, %757 : vector<1x128xf32>
    %762 = arith.addf %759, %761 : vector<1x128xf32>
    %cst_213 = arith.constant -1.000000e+00 : f32
    %763 = vector.broadcast %cst_213 : f32 to vector<1x128xf32>
    %764 = arith.mulf %763, %732 : vector<1x128xf32>
    %cst_214 = arith.constant 1.000000e+00 : f32
    %765 = vector.broadcast %cst_214 : f32 to vector<1x128xf32>
    %766 = arith.mulf %765, %755 : vector<1x128xf32>
    %767 = arith.addf %764, %766 : vector<1x128xf32>
    %cst_215 = arith.constant 0.000000e+00 : f32
    %768 = vector.broadcast %cst_215 : f32 to vector<1x128xf32>
    %769 = arith.select %11, %768, %767 : vector<1x128xi1>, vector<1x128xf32>
    %770 = vector.broadcast %6 : f32 to vector<1x128xf32>
    %771 = arith.mulf %753, %770 : vector<1x128xf32>
    %772 = arith.addf %762, %769 : vector<1x128xf32>
    %773 = arith.mulf %771, %772 : vector<1x128xf32>
    %cst_216 = arith.constant 6.000000e+00 : f32
    %774 = arith.divf %598, %cst_216 : f32
    %775 = arith.addf %684, %729 : vector<1x128xf32>
    %cst_217 = arith.constant 2.000000e+00 : f32
    %776 = vector.broadcast %cst_217 : f32 to vector<1x128xf32>
    %777 = arith.mulf %776, %775 : vector<1x128xf32>
    %778 = arith.addf %639, %777 : vector<1x128xf32>
    %779 = arith.addf %778, %773 : vector<1x128xf32>
    %780 = vector.broadcast %774 : f32 to vector<1x128xf32>
    %781 = arith.mulf %780, %779 : vector<1x128xf32>
    %782 = arith.addf %589, %781 : vector<1x128xf32>
    %c1_i32_218 = arith.constant 1 : i32
    %783 = arith.addi %c3_i32, %c1_i32_218 : i32
    %784 = arith.index_cast %783 : i32 to index
    %c0_219 = arith.constant 0 : index
    %785 = vector.load %arg9[%784, %c0_219] : memref<8x128xf32, #tpu.memory_space<vmem>>, vector<1x128xf32>
    tpu.vector_store %arg9[%784, %c0_219], %782 {strides = array<i32>} : memref<8x128xf32, #tpu.memory_space<vmem>>, vector<1x128xf32>,
    %c4_i32 = arith.constant 4 : i32
    %786 = arith.index_cast %c4_i32 : i32 to index
    %787 = memref.load %arg0[%786] : memref<8xf32, #tpu.memory_space<smem>>
    %c1_i32_220 = arith.constant 1 : i32
    %788 = arith.addi %c4_i32, %c1_i32_220 : i32
    %789 = arith.index_cast %788 : i32 to index
    %790 = memref.load %arg0[%789] : memref<8xf32, #tpu.memory_space<smem>>
    %791 = arith.subf %790, %787 : f32
    %792 = vector.broadcast %0 : vector<32x1xf32> to vector<32x128xf32>
    %793 = vector.broadcast %782 : vector<1x128xf32> to vector<32x128xf32>
    %794 = arith.mulf %792, %793 : vector<32x128xf32>
    %795 = vector.broadcast %1 : vector<32x1xf32> to vector<32x128xf32>
    %796 = arith.addf %794, %795 : vector<32x128xf32>
    %797 = math.tanh %796 : vector<32x128xf32>
    %cst_221 = arith.constant dense<0.000000e+00> : vector<32x128xf32>
    %798 = tpu.matmul %2, %797, %cst_221 {dimension_numbers = #tpu.dot_dimension_numbers<[1], [0], [0], [1], [0, 0, 1, 1], [], []>} : vector<32x32xf32>, vector<32x128xf32>, vector<32x128xf32> -> vector<32x128xf32>
    %799 = vector.broadcast %3 : vector<32x1xf32> to vector<32x128xf32>
    %800 = arith.addf %798, %799 : vector<32x128xf32>
    %801 = math.tanh %800 : vector<32x128xf32>
    %802 = vector.broadcast %4 : vector<32x1xf32> to vector<32x128xf32>
    %803 = arith.mulf %802, %801 : vector<32x128xf32>
    %cst_222 = arith.constant dense<0.000000e+00> : vector<128xf32>
    %804 = vector.multi_reduction <add>, %803, %cst_222 [0] : vector<32x128xf32> to vector<128xf32>
    %805 = vector.shape_cast %804 : vector<128xf32> to vector<1x128xf32>
    %806 = vector.broadcast %5 : vector<1x1xf32> to vector<1x128xf32>
    %807 = arith.addf %805, %806 : vector<1x128xf32>
    %808 = arith.negf %807 : vector<1x128xf32>
    %809 = math.exp %808 : vector<1x128xf32>
    %cst_223 = arith.constant 1.000000e+00 : f32
    %810 = vector.broadcast %cst_223 : f32 to vector<1x128xf32>
    %811 = arith.addf %810, %809 : vector<1x128xf32>
    %812 = arith.divf %810, %811 : vector<1x128xf32>
    %c1_i32_224 = arith.constant 1 : i32
    %813 = tpu.dynamic_rotate %782 by %c1_i32_224 dim 1 : vector<1x128xf32>, i32 -> vector<1x128xf32>
    %c127_i32_225 = arith.constant 127 : i32
    %814 = tpu.dynamic_rotate %782 by %c127_i32_225 dim 1 : vector<1x128xf32>, i32 -> vector<1x128xf32>
    %cst_226 = arith.constant 1.000000e+00 : f32
    %815 = vector.broadcast %cst_226 : f32 to vector<1x128xf32>
    %816 = arith.select %9, %815, %813 : vector<1x128xi1>, vector<1x128xf32>
    %cst_227 = arith.constant -1.000000e+00 : f32
    %817 = vector.broadcast %cst_227 : f32 to vector<1x128xf32>
    %818 = arith.mulf %817, %782 : vector<1x128xf32>
    %cst_228 = arith.constant 1.000000e+00 : f32
    %819 = vector.broadcast %cst_228 : f32 to vector<1x128xf32>
    %820 = arith.mulf %819, %816 : vector<1x128xf32>
    %821 = arith.addf %818, %820 : vector<1x128xf32>
    %cst_229 = arith.constant -1.000000e+00 : f32
    %822 = vector.broadcast %cst_229 : f32 to vector<1x128xf32>
    %823 = arith.mulf %822, %782 : vector<1x128xf32>
    %cst_230 = arith.constant 1.000000e+00 : f32
    %824 = vector.broadcast %cst_230 : f32 to vector<1x128xf32>
    %825 = arith.mulf %824, %814 : vector<1x128xf32>
    %826 = arith.addf %823, %825 : vector<1x128xf32>
    %cst_231 = arith.constant 0.000000e+00 : f32
    %827 = vector.broadcast %cst_231 : f32 to vector<1x128xf32>
    %828 = arith.select %11, %827, %826 : vector<1x128xi1>, vector<1x128xf32>
    %829 = vector.broadcast %6 : f32 to vector<1x128xf32>
    %830 = arith.mulf %812, %829 : vector<1x128xf32>
    %831 = arith.addf %821, %828 : vector<1x128xf32>
    %832 = arith.mulf %830, %831 : vector<1x128xf32>
    %cst_232 = arith.constant 5.000000e-01 : f32
    %833 = arith.mulf %cst_232, %791 : f32
    %834 = vector.broadcast %833 : f32 to vector<1x128xf32>
    %835 = arith.mulf %834, %832 : vector<1x128xf32>
    %836 = arith.addf %782, %835 : vector<1x128xf32>
    %837 = vector.broadcast %0 : vector<32x1xf32> to vector<32x128xf32>
    %838 = vector.broadcast %836 : vector<1x128xf32> to vector<32x128xf32>
    %839 = arith.mulf %837, %838 : vector<32x128xf32>
    %840 = vector.broadcast %1 : vector<32x1xf32> to vector<32x128xf32>
    %841 = arith.addf %839, %840 : vector<32x128xf32>
    %842 = math.tanh %841 : vector<32x128xf32>
    %cst_233 = arith.constant dense<0.000000e+00> : vector<32x128xf32>
    %843 = tpu.matmul %2, %842, %cst_233 {dimension_numbers = #tpu.dot_dimension_numbers<[1], [0], [0], [1], [0, 0, 1, 1], [], []>} : vector<32x32xf32>, vector<32x128xf32>, vector<32x128xf32> -> vector<32x128xf32>
    %844 = vector.broadcast %3 : vector<32x1xf32> to vector<32x128xf32>
    %845 = arith.addf %843, %844 : vector<32x128xf32>
    %846 = math.tanh %845 : vector<32x128xf32>
    %847 = vector.broadcast %4 : vector<32x1xf32> to vector<32x128xf32>
    %848 = arith.mulf %847, %846 : vector<32x128xf32>
    %cst_234 = arith.constant dense<0.000000e+00> : vector<128xf32>
    %849 = vector.multi_reduction <add>, %848, %cst_234 [0] : vector<32x128xf32> to vector<128xf32>
    %850 = vector.shape_cast %849 : vector<128xf32> to vector<1x128xf32>
    %851 = vector.broadcast %5 : vector<1x1xf32> to vector<1x128xf32>
    %852 = arith.addf %850, %851 : vector<1x128xf32>
    %853 = arith.negf %852 : vector<1x128xf32>
    %854 = math.exp %853 : vector<1x128xf32>
    %cst_235 = arith.constant 1.000000e+00 : f32
    %855 = vector.broadcast %cst_235 : f32 to vector<1x128xf32>
    %856 = arith.addf %855, %854 : vector<1x128xf32>
    %857 = arith.divf %855, %856 : vector<1x128xf32>
    %c1_i32_236 = arith.constant 1 : i32
    %858 = tpu.dynamic_rotate %836 by %c1_i32_236 dim 1 : vector<1x128xf32>, i32 -> vector<1x128xf32>
    %c127_i32_237 = arith.constant 127 : i32
    %859 = tpu.dynamic_rotate %836 by %c127_i32_237 dim 1 : vector<1x128xf32>, i32 -> vector<1x128xf32>
    %cst_238 = arith.constant 1.000000e+00 : f32
    %860 = vector.broadcast %cst_238 : f32 to vector<1x128xf32>
    %861 = arith.select %9, %860, %858 : vector<1x128xi1>, vector<1x128xf32>
    %cst_239 = arith.constant -1.000000e+00 : f32
    %862 = vector.broadcast %cst_239 : f32 to vector<1x128xf32>
    %863 = arith.mulf %862, %836 : vector<1x128xf32>
    %cst_240 = arith.constant 1.000000e+00 : f32
    %864 = vector.broadcast %cst_240 : f32 to vector<1x128xf32>
    %865 = arith.mulf %864, %861 : vector<1x128xf32>
    %866 = arith.addf %863, %865 : vector<1x128xf32>
    %cst_241 = arith.constant -1.000000e+00 : f32
    %867 = vector.broadcast %cst_241 : f32 to vector<1x128xf32>
    %868 = arith.mulf %867, %836 : vector<1x128xf32>
    %cst_242 = arith.constant 1.000000e+00 : f32
    %869 = vector.broadcast %cst_242 : f32 to vector<1x128xf32>
    %870 = arith.mulf %869, %859 : vector<1x128xf32>
    %871 = arith.addf %868, %870 : vector<1x128xf32>
    %cst_243 = arith.constant 0.000000e+00 : f32
    %872 = vector.broadcast %cst_243 : f32 to vector<1x128xf32>
    %873 = arith.select %11, %872, %871 : vector<1x128xi1>, vector<1x128xf32>
    %874 = vector.broadcast %6 : f32 to vector<1x128xf32>
    %875 = arith.mulf %857, %874 : vector<1x128xf32>
    %876 = arith.addf %866, %873 : vector<1x128xf32>
    %877 = arith.mulf %875, %876 : vector<1x128xf32>
    %cst_244 = arith.constant 5.000000e-01 : f32
    %878 = arith.mulf %cst_244, %791 : f32
    %879 = vector.broadcast %878 : f32 to vector<1x128xf32>
    %880 = arith.mulf %879, %877 : vector<1x128xf32>
    %881 = arith.addf %782, %880 : vector<1x128xf32>
    %882 = vector.broadcast %0 : vector<32x1xf32> to vector<32x128xf32>
    %883 = vector.broadcast %881 : vector<1x128xf32> to vector<32x128xf32>
    %884 = arith.mulf %882, %883 : vector<32x128xf32>
    %885 = vector.broadcast %1 : vector<32x1xf32> to vector<32x128xf32>
    %886 = arith.addf %884, %885 : vector<32x128xf32>
    %887 = math.tanh %886 : vector<32x128xf32>
    %cst_245 = arith.constant dense<0.000000e+00> : vector<32x128xf32>
    %888 = tpu.matmul %2, %887, %cst_245 {dimension_numbers = #tpu.dot_dimension_numbers<[1], [0], [0], [1], [0, 0, 1, 1], [], []>} : vector<32x32xf32>, vector<32x128xf32>, vector<32x128xf32> -> vector<32x128xf32>
    %889 = vector.broadcast %3 : vector<32x1xf32> to vector<32x128xf32>
    %890 = arith.addf %888, %889 : vector<32x128xf32>
    %891 = math.tanh %890 : vector<32x128xf32>
    %892 = vector.broadcast %4 : vector<32x1xf32> to vector<32x128xf32>
    %893 = arith.mulf %892, %891 : vector<32x128xf32>
    %cst_246 = arith.constant dense<0.000000e+00> : vector<128xf32>
    %894 = vector.multi_reduction <add>, %893, %cst_246 [0] : vector<32x128xf32> to vector<128xf32>
    %895 = vector.shape_cast %894 : vector<128xf32> to vector<1x128xf32>
    %896 = vector.broadcast %5 : vector<1x1xf32> to vector<1x128xf32>
    %897 = arith.addf %895, %896 : vector<1x128xf32>
    %898 = arith.negf %897 : vector<1x128xf32>
    %899 = math.exp %898 : vector<1x128xf32>
    %cst_247 = arith.constant 1.000000e+00 : f32
    %900 = vector.broadcast %cst_247 : f32 to vector<1x128xf32>
    %901 = arith.addf %900, %899 : vector<1x128xf32>
    %902 = arith.divf %900, %901 : vector<1x128xf32>
    %c1_i32_248 = arith.constant 1 : i32
    %903 = tpu.dynamic_rotate %881 by %c1_i32_248 dim 1 : vector<1x128xf32>, i32 -> vector<1x128xf32>
    %c127_i32_249 = arith.constant 127 : i32
    %904 = tpu.dynamic_rotate %881 by %c127_i32_249 dim 1 : vector<1x128xf32>, i32 -> vector<1x128xf32>
    %cst_250 = arith.constant 1.000000e+00 : f32
    %905 = vector.broadcast %cst_250 : f32 to vector<1x128xf32>
    %906 = arith.select %9, %905, %903 : vector<1x128xi1>, vector<1x128xf32>
    %cst_251 = arith.constant -1.000000e+00 : f32
    %907 = vector.broadcast %cst_251 : f32 to vector<1x128xf32>
    %908 = arith.mulf %907, %881 : vector<1x128xf32>
    %cst_252 = arith.constant 1.000000e+00 : f32
    %909 = vector.broadcast %cst_252 : f32 to vector<1x128xf32>
    %910 = arith.mulf %909, %906 : vector<1x128xf32>
    %911 = arith.addf %908, %910 : vector<1x128xf32>
    %cst_253 = arith.constant -1.000000e+00 : f32
    %912 = vector.broadcast %cst_253 : f32 to vector<1x128xf32>
    %913 = arith.mulf %912, %881 : vector<1x128xf32>
    %cst_254 = arith.constant 1.000000e+00 : f32
    %914 = vector.broadcast %cst_254 : f32 to vector<1x128xf32>
    %915 = arith.mulf %914, %904 : vector<1x128xf32>
    %916 = arith.addf %913, %915 : vector<1x128xf32>
    %cst_255 = arith.constant 0.000000e+00 : f32
    %917 = vector.broadcast %cst_255 : f32 to vector<1x128xf32>
    %918 = arith.select %11, %917, %916 : vector<1x128xi1>, vector<1x128xf32>
    %919 = vector.broadcast %6 : f32 to vector<1x128xf32>
    %920 = arith.mulf %902, %919 : vector<1x128xf32>
    %921 = arith.addf %911, %918 : vector<1x128xf32>
    %922 = arith.mulf %920, %921 : vector<1x128xf32>
    %923 = vector.broadcast %791 : f32 to vector<1x128xf32>
    %924 = arith.mulf %923, %922 : vector<1x128xf32>
    %925 = arith.addf %782, %924 : vector<1x128xf32>
    %926 = vector.broadcast %0 : vector<32x1xf32> to vector<32x128xf32>
    %927 = vector.broadcast %925 : vector<1x128xf32> to vector<32x128xf32>
    %928 = arith.mulf %926, %927 : vector<32x128xf32>
    %929 = vector.broadcast %1 : vector<32x1xf32> to vector<32x128xf32>
    %930 = arith.addf %928, %929 : vector<32x128xf32>
    %931 = math.tanh %930 : vector<32x128xf32>
    %cst_256 = arith.constant dense<0.000000e+00> : vector<32x128xf32>
    %932 = tpu.matmul %2, %931, %cst_256 {dimension_numbers = #tpu.dot_dimension_numbers<[1], [0], [0], [1], [0, 0, 1, 1], [], []>} : vector<32x32xf32>, vector<32x128xf32>, vector<32x128xf32> -> vector<32x128xf32>
    %933 = vector.broadcast %3 : vector<32x1xf32> to vector<32x128xf32>
    %934 = arith.addf %932, %933 : vector<32x128xf32>
    %935 = math.tanh %934 : vector<32x128xf32>
    %936 = vector.broadcast %4 : vector<32x1xf32> to vector<32x128xf32>
    %937 = arith.mulf %936, %935 : vector<32x128xf32>
    %cst_257 = arith.constant dense<0.000000e+00> : vector<128xf32>
    %938 = vector.multi_reduction <add>, %937, %cst_257 [0] : vector<32x128xf32> to vector<128xf32>
    %939 = vector.shape_cast %938 : vector<128xf32> to vector<1x128xf32>
    %940 = vector.broadcast %5 : vector<1x1xf32> to vector<1x128xf32>
    %941 = arith.addf %939, %940 : vector<1x128xf32>
    %942 = arith.negf %941 : vector<1x128xf32>
    %943 = math.exp %942 : vector<1x128xf32>
    %cst_258 = arith.constant 1.000000e+00 : f32
    %944 = vector.broadcast %cst_258 : f32 to vector<1x128xf32>
    %945 = arith.addf %944, %943 : vector<1x128xf32>
    %946 = arith.divf %944, %945 : vector<1x128xf32>
    %c1_i32_259 = arith.constant 1 : i32
    %947 = tpu.dynamic_rotate %925 by %c1_i32_259 dim 1 : vector<1x128xf32>, i32 -> vector<1x128xf32>
    %c127_i32_260 = arith.constant 127 : i32
    %948 = tpu.dynamic_rotate %925 by %c127_i32_260 dim 1 : vector<1x128xf32>, i32 -> vector<1x128xf32>
    %cst_261 = arith.constant 1.000000e+00 : f32
    %949 = vector.broadcast %cst_261 : f32 to vector<1x128xf32>
    %950 = arith.select %9, %949, %947 : vector<1x128xi1>, vector<1x128xf32>
    %cst_262 = arith.constant -1.000000e+00 : f32
    %951 = vector.broadcast %cst_262 : f32 to vector<1x128xf32>
    %952 = arith.mulf %951, %925 : vector<1x128xf32>
    %cst_263 = arith.constant 1.000000e+00 : f32
    %953 = vector.broadcast %cst_263 : f32 to vector<1x128xf32>
    %954 = arith.mulf %953, %950 : vector<1x128xf32>
    %955 = arith.addf %952, %954 : vector<1x128xf32>
    %cst_264 = arith.constant -1.000000e+00 : f32
    %956 = vector.broadcast %cst_264 : f32 to vector<1x128xf32>
    %957 = arith.mulf %956, %925 : vector<1x128xf32>
    %cst_265 = arith.constant 1.000000e+00 : f32
    %958 = vector.broadcast %cst_265 : f32 to vector<1x128xf32>
    %959 = arith.mulf %958, %948 : vector<1x128xf32>
    %960 = arith.addf %957, %959 : vector<1x128xf32>
    %cst_266 = arith.constant 0.000000e+00 : f32
    %961 = vector.broadcast %cst_266 : f32 to vector<1x128xf32>
    %962 = arith.select %11, %961, %960 : vector<1x128xi1>, vector<1x128xf32>
    %963 = vector.broadcast %6 : f32 to vector<1x128xf32>
    %964 = arith.mulf %946, %963 : vector<1x128xf32>
    %965 = arith.addf %955, %962 : vector<1x128xf32>
    %966 = arith.mulf %964, %965 : vector<1x128xf32>
    %cst_267 = arith.constant 6.000000e+00 : f32
    %967 = arith.divf %791, %cst_267 : f32
    %968 = arith.addf %877, %922 : vector<1x128xf32>
    %cst_268 = arith.constant 2.000000e+00 : f32
    %969 = vector.broadcast %cst_268 : f32 to vector<1x128xf32>
    %970 = arith.mulf %969, %968 : vector<1x128xf32>
    %971 = arith.addf %832, %970 : vector<1x128xf32>
    %972 = arith.addf %971, %966 : vector<1x128xf32>
    %973 = vector.broadcast %967 : f32 to vector<1x128xf32>
    %974 = arith.mulf %973, %972 : vector<1x128xf32>
    %975 = arith.addf %782, %974 : vector<1x128xf32>
    %c1_i32_269 = arith.constant 1 : i32
    %976 = arith.addi %c4_i32, %c1_i32_269 : i32
    %977 = arith.index_cast %976 : i32 to index
    %c0_270 = arith.constant 0 : index
    %978 = vector.load %arg9[%977, %c0_270] : memref<8x128xf32, #tpu.memory_space<vmem>>, vector<1x128xf32>
    tpu.vector_store %arg9[%977, %c0_270], %975 {strides = array<i32>} : memref<8x128xf32, #tpu.memory_space<vmem>>, vector<1x128xf32>,
    %c5_i32 = arith.constant 5 : i32
    %979 = arith.index_cast %c5_i32 : i32 to index
    %980 = memref.load %arg0[%979] : memref<8xf32, #tpu.memory_space<smem>>
    %c1_i32_271 = arith.constant 1 : i32
    %981 = arith.addi %c5_i32, %c1_i32_271 : i32
    %982 = arith.index_cast %981 : i32 to index
    %983 = memref.load %arg0[%982] : memref<8xf32, #tpu.memory_space<smem>>
    %984 = arith.subf %983, %980 : f32
    %985 = vector.broadcast %0 : vector<32x1xf32> to vector<32x128xf32>
    %986 = vector.broadcast %975 : vector<1x128xf32> to vector<32x128xf32>
    %987 = arith.mulf %985, %986 : vector<32x128xf32>
    %988 = vector.broadcast %1 : vector<32x1xf32> to vector<32x128xf32>
    %989 = arith.addf %987, %988 : vector<32x128xf32>
    %990 = math.tanh %989 : vector<32x128xf32>
    %cst_272 = arith.constant dense<0.000000e+00> : vector<32x128xf32>
    %991 = tpu.matmul %2, %990, %cst_272 {dimension_numbers = #tpu.dot_dimension_numbers<[1], [0], [0], [1], [0, 0, 1, 1], [], []>} : vector<32x32xf32>, vector<32x128xf32>, vector<32x128xf32> -> vector<32x128xf32>
    %992 = vector.broadcast %3 : vector<32x1xf32> to vector<32x128xf32>
    %993 = arith.addf %991, %992 : vector<32x128xf32>
    %994 = math.tanh %993 : vector<32x128xf32>
    %995 = vector.broadcast %4 : vector<32x1xf32> to vector<32x128xf32>
    %996 = arith.mulf %995, %994 : vector<32x128xf32>
    %cst_273 = arith.constant dense<0.000000e+00> : vector<128xf32>
    %997 = vector.multi_reduction <add>, %996, %cst_273 [0] : vector<32x128xf32> to vector<128xf32>
    %998 = vector.shape_cast %997 : vector<128xf32> to vector<1x128xf32>
    %999 = vector.broadcast %5 : vector<1x1xf32> to vector<1x128xf32>
    %1000 = arith.addf %998, %999 : vector<1x128xf32>
    %1001 = arith.negf %1000 : vector<1x128xf32>
    %1002 = math.exp %1001 : vector<1x128xf32>
    %cst_274 = arith.constant 1.000000e+00 : f32
    %1003 = vector.broadcast %cst_274 : f32 to vector<1x128xf32>
    %1004 = arith.addf %1003, %1002 : vector<1x128xf32>
    %1005 = arith.divf %1003, %1004 : vector<1x128xf32>
    %c1_i32_275 = arith.constant 1 : i32
    %1006 = tpu.dynamic_rotate %975 by %c1_i32_275 dim 1 : vector<1x128xf32>, i32 -> vector<1x128xf32>
    %c127_i32_276 = arith.constant 127 : i32
    %1007 = tpu.dynamic_rotate %975 by %c127_i32_276 dim 1 : vector<1x128xf32>, i32 -> vector<1x128xf32>
    %cst_277 = arith.constant 1.000000e+00 : f32
    %1008 = vector.broadcast %cst_277 : f32 to vector<1x128xf32>
    %1009 = arith.select %9, %1008, %1006 : vector<1x128xi1>, vector<1x128xf32>
    %cst_278 = arith.constant -1.000000e+00 : f32
    %1010 = vector.broadcast %cst_278 : f32 to vector<1x128xf32>
    %1011 = arith.mulf %1010, %975 : vector<1x128xf32>
    %cst_279 = arith.constant 1.000000e+00 : f32
    %1012 = vector.broadcast %cst_279 : f32 to vector<1x128xf32>
    %1013 = arith.mulf %1012, %1009 : vector<1x128xf32>
    %1014 = arith.addf %1011, %1013 : vector<1x128xf32>
    %cst_280 = arith.constant -1.000000e+00 : f32
    %1015 = vector.broadcast %cst_280 : f32 to vector<1x128xf32>
    %1016 = arith.mulf %1015, %975 : vector<1x128xf32>
    %cst_281 = arith.constant 1.000000e+00 : f32
    %1017 = vector.broadcast %cst_281 : f32 to vector<1x128xf32>
    %1018 = arith.mulf %1017, %1007 : vector<1x128xf32>
    %1019 = arith.addf %1016, %1018 : vector<1x128xf32>
    %cst_282 = arith.constant 0.000000e+00 : f32
    %1020 = vector.broadcast %cst_282 : f32 to vector<1x128xf32>
    %1021 = arith.select %11, %1020, %1019 : vector<1x128xi1>, vector<1x128xf32>
    %1022 = vector.broadcast %6 : f32 to vector<1x128xf32>
    %1023 = arith.mulf %1005, %1022 : vector<1x128xf32>
    %1024 = arith.addf %1014, %1021 : vector<1x128xf32>
    %1025 = arith.mulf %1023, %1024 : vector<1x128xf32>
    %cst_283 = arith.constant 5.000000e-01 : f32
    %1026 = arith.mulf %cst_283, %984 : f32
    %1027 = vector.broadcast %1026 : f32 to vector<1x128xf32>
    %1028 = arith.mulf %1027, %1025 : vector<1x128xf32>
    %1029 = arith.addf %975, %1028 : vector<1x128xf32>
    %1030 = vector.broadcast %0 : vector<32x1xf32> to vector<32x128xf32>
    %1031 = vector.broadcast %1029 : vector<1x128xf32> to vector<32x128xf32>
    %1032 = arith.mulf %1030, %1031 : vector<32x128xf32>
    %1033 = vector.broadcast %1 : vector<32x1xf32> to vector<32x128xf32>
    %1034 = arith.addf %1032, %1033 : vector<32x128xf32>
    %1035 = math.tanh %1034 : vector<32x128xf32>
    %cst_284 = arith.constant dense<0.000000e+00> : vector<32x128xf32>
    %1036 = tpu.matmul %2, %1035, %cst_284 {dimension_numbers = #tpu.dot_dimension_numbers<[1], [0], [0], [1], [0, 0, 1, 1], [], []>} : vector<32x32xf32>, vector<32x128xf32>, vector<32x128xf32> -> vector<32x128xf32>
    %1037 = vector.broadcast %3 : vector<32x1xf32> to vector<32x128xf32>
    %1038 = arith.addf %1036, %1037 : vector<32x128xf32>
    %1039 = math.tanh %1038 : vector<32x128xf32>
    %1040 = vector.broadcast %4 : vector<32x1xf32> to vector<32x128xf32>
    %1041 = arith.mulf %1040, %1039 : vector<32x128xf32>
    %cst_285 = arith.constant dense<0.000000e+00> : vector<128xf32>
    %1042 = vector.multi_reduction <add>, %1041, %cst_285 [0] : vector<32x128xf32> to vector<128xf32>
    %1043 = vector.shape_cast %1042 : vector<128xf32> to vector<1x128xf32>
    %1044 = vector.broadcast %5 : vector<1x1xf32> to vector<1x128xf32>
    %1045 = arith.addf %1043, %1044 : vector<1x128xf32>
    %1046 = arith.negf %1045 : vector<1x128xf32>
    %1047 = math.exp %1046 : vector<1x128xf32>
    %cst_286 = arith.constant 1.000000e+00 : f32
    %1048 = vector.broadcast %cst_286 : f32 to vector<1x128xf32>
    %1049 = arith.addf %1048, %1047 : vector<1x128xf32>
    %1050 = arith.divf %1048, %1049 : vector<1x128xf32>
    %c1_i32_287 = arith.constant 1 : i32
    %1051 = tpu.dynamic_rotate %1029 by %c1_i32_287 dim 1 : vector<1x128xf32>, i32 -> vector<1x128xf32>
    %c127_i32_288 = arith.constant 127 : i32
    %1052 = tpu.dynamic_rotate %1029 by %c127_i32_288 dim 1 : vector<1x128xf32>, i32 -> vector<1x128xf32>
    %cst_289 = arith.constant 1.000000e+00 : f32
    %1053 = vector.broadcast %cst_289 : f32 to vector<1x128xf32>
    %1054 = arith.select %9, %1053, %1051 : vector<1x128xi1>, vector<1x128xf32>
    %cst_290 = arith.constant -1.000000e+00 : f32
    %1055 = vector.broadcast %cst_290 : f32 to vector<1x128xf32>
    %1056 = arith.mulf %1055, %1029 : vector<1x128xf32>
    %cst_291 = arith.constant 1.000000e+00 : f32
    %1057 = vector.broadcast %cst_291 : f32 to vector<1x128xf32>
    %1058 = arith.mulf %1057, %1054 : vector<1x128xf32>
    %1059 = arith.addf %1056, %1058 : vector<1x128xf32>
    %cst_292 = arith.constant -1.000000e+00 : f32
    %1060 = vector.broadcast %cst_292 : f32 to vector<1x128xf32>
    %1061 = arith.mulf %1060, %1029 : vector<1x128xf32>
    %cst_293 = arith.constant 1.000000e+00 : f32
    %1062 = vector.broadcast %cst_293 : f32 to vector<1x128xf32>
    %1063 = arith.mulf %1062, %1052 : vector<1x128xf32>
    %1064 = arith.addf %1061, %1063 : vector<1x128xf32>
    %cst_294 = arith.constant 0.000000e+00 : f32
    %1065 = vector.broadcast %cst_294 : f32 to vector<1x128xf32>
    %1066 = arith.select %11, %1065, %1064 : vector<1x128xi1>, vector<1x128xf32>
    %1067 = vector.broadcast %6 : f32 to vector<1x128xf32>
    %1068 = arith.mulf %1050, %1067 : vector<1x128xf32>
    %1069 = arith.addf %1059, %1066 : vector<1x128xf32>
    %1070 = arith.mulf %1068, %1069 : vector<1x128xf32>
    %cst_295 = arith.constant 5.000000e-01 : f32
    %1071 = arith.mulf %cst_295, %984 : f32
    %1072 = vector.broadcast %1071 : f32 to vector<1x128xf32>
    %1073 = arith.mulf %1072, %1070 : vector<1x128xf32>
    %1074 = arith.addf %975, %1073 : vector<1x128xf32>
    %1075 = vector.broadcast %0 : vector<32x1xf32> to vector<32x128xf32>
    %1076 = vector.broadcast %1074 : vector<1x128xf32> to vector<32x128xf32>
    %1077 = arith.mulf %1075, %1076 : vector<32x128xf32>
    %1078 = vector.broadcast %1 : vector<32x1xf32> to vector<32x128xf32>
    %1079 = arith.addf %1077, %1078 : vector<32x128xf32>
    %1080 = math.tanh %1079 : vector<32x128xf32>
    %cst_296 = arith.constant dense<0.000000e+00> : vector<32x128xf32>
    %1081 = tpu.matmul %2, %1080, %cst_296 {dimension_numbers = #tpu.dot_dimension_numbers<[1], [0], [0], [1], [0, 0, 1, 1], [], []>} : vector<32x32xf32>, vector<32x128xf32>, vector<32x128xf32> -> vector<32x128xf32>
    %1082 = vector.broadcast %3 : vector<32x1xf32> to vector<32x128xf32>
    %1083 = arith.addf %1081, %1082 : vector<32x128xf32>
    %1084 = math.tanh %1083 : vector<32x128xf32>
    %1085 = vector.broadcast %4 : vector<32x1xf32> to vector<32x128xf32>
    %1086 = arith.mulf %1085, %1084 : vector<32x128xf32>
    %cst_297 = arith.constant dense<0.000000e+00> : vector<128xf32>
    %1087 = vector.multi_reduction <add>, %1086, %cst_297 [0] : vector<32x128xf32> to vector<128xf32>
    %1088 = vector.shape_cast %1087 : vector<128xf32> to vector<1x128xf32>
    %1089 = vector.broadcast %5 : vector<1x1xf32> to vector<1x128xf32>
    %1090 = arith.addf %1088, %1089 : vector<1x128xf32>
    %1091 = arith.negf %1090 : vector<1x128xf32>
    %1092 = math.exp %1091 : vector<1x128xf32>
    %cst_298 = arith.constant 1.000000e+00 : f32
    %1093 = vector.broadcast %cst_298 : f32 to vector<1x128xf32>
    %1094 = arith.addf %1093, %1092 : vector<1x128xf32>
    %1095 = arith.divf %1093, %1094 : vector<1x128xf32>
    %c1_i32_299 = arith.constant 1 : i32
    %1096 = tpu.dynamic_rotate %1074 by %c1_i32_299 dim 1 : vector<1x128xf32>, i32 -> vector<1x128xf32>
    %c127_i32_300 = arith.constant 127 : i32
    %1097 = tpu.dynamic_rotate %1074 by %c127_i32_300 dim 1 : vector<1x128xf32>, i32 -> vector<1x128xf32>
    %cst_301 = arith.constant 1.000000e+00 : f32
    %1098 = vector.broadcast %cst_301 : f32 to vector<1x128xf32>
    %1099 = arith.select %9, %1098, %1096 : vector<1x128xi1>, vector<1x128xf32>
    %cst_302 = arith.constant -1.000000e+00 : f32
    %1100 = vector.broadcast %cst_302 : f32 to vector<1x128xf32>
    %1101 = arith.mulf %1100, %1074 : vector<1x128xf32>
    %cst_303 = arith.constant 1.000000e+00 : f32
    %1102 = vector.broadcast %cst_303 : f32 to vector<1x128xf32>
    %1103 = arith.mulf %1102, %1099 : vector<1x128xf32>
    %1104 = arith.addf %1101, %1103 : vector<1x128xf32>
    %cst_304 = arith.constant -1.000000e+00 : f32
    %1105 = vector.broadcast %cst_304 : f32 to vector<1x128xf32>
    %1106 = arith.mulf %1105, %1074 : vector<1x128xf32>
    %cst_305 = arith.constant 1.000000e+00 : f32
    %1107 = vector.broadcast %cst_305 : f32 to vector<1x128xf32>
    %1108 = arith.mulf %1107, %1097 : vector<1x128xf32>
    %1109 = arith.addf %1106, %1108 : vector<1x128xf32>
    %cst_306 = arith.constant 0.000000e+00 : f32
    %1110 = vector.broadcast %cst_306 : f32 to vector<1x128xf32>
    %1111 = arith.select %11, %1110, %1109 : vector<1x128xi1>, vector<1x128xf32>
    %1112 = vector.broadcast %6 : f32 to vector<1x128xf32>
    %1113 = arith.mulf %1095, %1112 : vector<1x128xf32>
    %1114 = arith.addf %1104, %1111 : vector<1x128xf32>
    %1115 = arith.mulf %1113, %1114 : vector<1x128xf32>
    %1116 = vector.broadcast %984 : f32 to vector<1x128xf32>
    %1117 = arith.mulf %1116, %1115 : vector<1x128xf32>
    %1118 = arith.addf %975, %1117 : vector<1x128xf32>
    %1119 = vector.broadcast %0 : vector<32x1xf32> to vector<32x128xf32>
    %1120 = vector.broadcast %1118 : vector<1x128xf32> to vector<32x128xf32>
    %1121 = arith.mulf %1119, %1120 : vector<32x128xf32>
    %1122 = vector.broadcast %1 : vector<32x1xf32> to vector<32x128xf32>
    %1123 = arith.addf %1121, %1122 : vector<32x128xf32>
    %1124 = math.tanh %1123 : vector<32x128xf32>
    %cst_307 = arith.constant dense<0.000000e+00> : vector<32x128xf32>
    %1125 = tpu.matmul %2, %1124, %cst_307 {dimension_numbers = #tpu.dot_dimension_numbers<[1], [0], [0], [1], [0, 0, 1, 1], [], []>} : vector<32x32xf32>, vector<32x128xf32>, vector<32x128xf32> -> vector<32x128xf32>
    %1126 = vector.broadcast %3 : vector<32x1xf32> to vector<32x128xf32>
    %1127 = arith.addf %1125, %1126 : vector<32x128xf32>
    %1128 = math.tanh %1127 : vector<32x128xf32>
    %1129 = vector.broadcast %4 : vector<32x1xf32> to vector<32x128xf32>
    %1130 = arith.mulf %1129, %1128 : vector<32x128xf32>
    %cst_308 = arith.constant dense<0.000000e+00> : vector<128xf32>
    %1131 = vector.multi_reduction <add>, %1130, %cst_308 [0] : vector<32x128xf32> to vector<128xf32>
    %1132 = vector.shape_cast %1131 : vector<128xf32> to vector<1x128xf32>
    %1133 = vector.broadcast %5 : vector<1x1xf32> to vector<1x128xf32>
    %1134 = arith.addf %1132, %1133 : vector<1x128xf32>
    %1135 = arith.negf %1134 : vector<1x128xf32>
    %1136 = math.exp %1135 : vector<1x128xf32>
    %cst_309 = arith.constant 1.000000e+00 : f32
    %1137 = vector.broadcast %cst_309 : f32 to vector<1x128xf32>
    %1138 = arith.addf %1137, %1136 : vector<1x128xf32>
    %1139 = arith.divf %1137, %1138 : vector<1x128xf32>
    %c1_i32_310 = arith.constant 1 : i32
    %1140 = tpu.dynamic_rotate %1118 by %c1_i32_310 dim 1 : vector<1x128xf32>, i32 -> vector<1x128xf32>
    %c127_i32_311 = arith.constant 127 : i32
    %1141 = tpu.dynamic_rotate %1118 by %c127_i32_311 dim 1 : vector<1x128xf32>, i32 -> vector<1x128xf32>
    %cst_312 = arith.constant 1.000000e+00 : f32
    %1142 = vector.broadcast %cst_312 : f32 to vector<1x128xf32>
    %1143 = arith.select %9, %1142, %1140 : vector<1x128xi1>, vector<1x128xf32>
    %cst_313 = arith.constant -1.000000e+00 : f32
    %1144 = vector.broadcast %cst_313 : f32 to vector<1x128xf32>
    %1145 = arith.mulf %1144, %1118 : vector<1x128xf32>
    %cst_314 = arith.constant 1.000000e+00 : f32
    %1146 = vector.broadcast %cst_314 : f32 to vector<1x128xf32>
    %1147 = arith.mulf %1146, %1143 : vector<1x128xf32>
    %1148 = arith.addf %1145, %1147 : vector<1x128xf32>
    %cst_315 = arith.constant -1.000000e+00 : f32
    %1149 = vector.broadcast %cst_315 : f32 to vector<1x128xf32>
    %1150 = arith.mulf %1149, %1118 : vector<1x128xf32>
    %cst_316 = arith.constant 1.000000e+00 : f32
    %1151 = vector.broadcast %cst_316 : f32 to vector<1x128xf32>
    %1152 = arith.mulf %1151, %1141 : vector<1x128xf32>
    %1153 = arith.addf %1150, %1152 : vector<1x128xf32>
    %cst_317 = arith.constant 0.000000e+00 : f32
    %1154 = vector.broadcast %cst_317 : f32 to vector<1x128xf32>
    %1155 = arith.select %11, %1154, %1153 : vector<1x128xi1>, vector<1x128xf32>
    %1156 = vector.broadcast %6 : f32 to vector<1x128xf32>
    %1157 = arith.mulf %1139, %1156 : vector<1x128xf32>
    %1158 = arith.addf %1148, %1155 : vector<1x128xf32>
    %1159 = arith.mulf %1157, %1158 : vector<1x128xf32>
    %cst_318 = arith.constant 6.000000e+00 : f32
    %1160 = arith.divf %984, %cst_318 : f32
    %1161 = arith.addf %1070, %1115 : vector<1x128xf32>
    %cst_319 = arith.constant 2.000000e+00 : f32
    %1162 = vector.broadcast %cst_319 : f32 to vector<1x128xf32>
    %1163 = arith.mulf %1162, %1161 : vector<1x128xf32>
    %1164 = arith.addf %1025, %1163 : vector<1x128xf32>
    %1165 = arith.addf %1164, %1159 : vector<1x128xf32>
    %1166 = vector.broadcast %1160 : f32 to vector<1x128xf32>
    %1167 = arith.mulf %1166, %1165 : vector<1x128xf32>
    %1168 = arith.addf %975, %1167 : vector<1x128xf32>
    %c1_i32_320 = arith.constant 1 : i32
    %1169 = arith.addi %c5_i32, %c1_i32_320 : i32
    %1170 = arith.index_cast %1169 : i32 to index
    %c0_321 = arith.constant 0 : index
    %1171 = vector.load %arg9[%1170, %c0_321] : memref<8x128xf32, #tpu.memory_space<vmem>>, vector<1x128xf32>
    tpu.vector_store %arg9[%1170, %c0_321], %1168 {strides = array<i32>} : memref<8x128xf32, #tpu.memory_space<vmem>>, vector<1x128xf32>,
    %c6_i32 = arith.constant 6 : i32
    %1172 = arith.index_cast %c6_i32 : i32 to index
    %1173 = memref.load %arg0[%1172] : memref<8xf32, #tpu.memory_space<smem>>
    %c1_i32_322 = arith.constant 1 : i32
    %1174 = arith.addi %c6_i32, %c1_i32_322 : i32
    %1175 = arith.index_cast %1174 : i32 to index
    %1176 = memref.load %arg0[%1175] : memref<8xf32, #tpu.memory_space<smem>>
    %1177 = arith.subf %1176, %1173 : f32
    %1178 = vector.broadcast %0 : vector<32x1xf32> to vector<32x128xf32>
    %1179 = vector.broadcast %1168 : vector<1x128xf32> to vector<32x128xf32>
    %1180 = arith.mulf %1178, %1179 : vector<32x128xf32>
    %1181 = vector.broadcast %1 : vector<32x1xf32> to vector<32x128xf32>
    %1182 = arith.addf %1180, %1181 : vector<32x128xf32>
    %1183 = math.tanh %1182 : vector<32x128xf32>
    %cst_323 = arith.constant dense<0.000000e+00> : vector<32x128xf32>
    %1184 = tpu.matmul %2, %1183, %cst_323 {dimension_numbers = #tpu.dot_dimension_numbers<[1], [0], [0], [1], [0, 0, 1, 1], [], []>} : vector<32x32xf32>, vector<32x128xf32>, vector<32x128xf32> -> vector<32x128xf32>
    %1185 = vector.broadcast %3 : vector<32x1xf32> to vector<32x128xf32>
    %1186 = arith.addf %1184, %1185 : vector<32x128xf32>
    %1187 = math.tanh %1186 : vector<32x128xf32>
    %1188 = vector.broadcast %4 : vector<32x1xf32> to vector<32x128xf32>
    %1189 = arith.mulf %1188, %1187 : vector<32x128xf32>
    %cst_324 = arith.constant dense<0.000000e+00> : vector<128xf32>
    %1190 = vector.multi_reduction <add>, %1189, %cst_324 [0] : vector<32x128xf32> to vector<128xf32>
    %1191 = vector.shape_cast %1190 : vector<128xf32> to vector<1x128xf32>
    %1192 = vector.broadcast %5 : vector<1x1xf32> to vector<1x128xf32>
    %1193 = arith.addf %1191, %1192 : vector<1x128xf32>
    %1194 = arith.negf %1193 : vector<1x128xf32>
    %1195 = math.exp %1194 : vector<1x128xf32>
    %cst_325 = arith.constant 1.000000e+00 : f32
    %1196 = vector.broadcast %cst_325 : f32 to vector<1x128xf32>
    %1197 = arith.addf %1196, %1195 : vector<1x128xf32>
    %1198 = arith.divf %1196, %1197 : vector<1x128xf32>
    %c1_i32_326 = arith.constant 1 : i32
    %1199 = tpu.dynamic_rotate %1168 by %c1_i32_326 dim 1 : vector<1x128xf32>, i32 -> vector<1x128xf32>
    %c127_i32_327 = arith.constant 127 : i32
    %1200 = tpu.dynamic_rotate %1168 by %c127_i32_327 dim 1 : vector<1x128xf32>, i32 -> vector<1x128xf32>
    %cst_328 = arith.constant 1.000000e+00 : f32
    %1201 = vector.broadcast %cst_328 : f32 to vector<1x128xf32>
    %1202 = arith.select %9, %1201, %1199 : vector<1x128xi1>, vector<1x128xf32>
    %cst_329 = arith.constant -1.000000e+00 : f32
    %1203 = vector.broadcast %cst_329 : f32 to vector<1x128xf32>
    %1204 = arith.mulf %1203, %1168 : vector<1x128xf32>
    %cst_330 = arith.constant 1.000000e+00 : f32
    %1205 = vector.broadcast %cst_330 : f32 to vector<1x128xf32>
    %1206 = arith.mulf %1205, %1202 : vector<1x128xf32>
    %1207 = arith.addf %1204, %1206 : vector<1x128xf32>
    %cst_331 = arith.constant -1.000000e+00 : f32
    %1208 = vector.broadcast %cst_331 : f32 to vector<1x128xf32>
    %1209 = arith.mulf %1208, %1168 : vector<1x128xf32>
    %cst_332 = arith.constant 1.000000e+00 : f32
    %1210 = vector.broadcast %cst_332 : f32 to vector<1x128xf32>
    %1211 = arith.mulf %1210, %1200 : vector<1x128xf32>
    %1212 = arith.addf %1209, %1211 : vector<1x128xf32>
    %cst_333 = arith.constant 0.000000e+00 : f32
    %1213 = vector.broadcast %cst_333 : f32 to vector<1x128xf32>
    %1214 = arith.select %11, %1213, %1212 : vector<1x128xi1>, vector<1x128xf32>
    %1215 = vector.broadcast %6 : f32 to vector<1x128xf32>
    %1216 = arith.mulf %1198, %1215 : vector<1x128xf32>
    %1217 = arith.addf %1207, %1214 : vector<1x128xf32>
    %1218 = arith.mulf %1216, %1217 : vector<1x128xf32>
    %cst_334 = arith.constant 5.000000e-01 : f32
    %1219 = arith.mulf %cst_334, %1177 : f32
    %1220 = vector.broadcast %1219 : f32 to vector<1x128xf32>
    %1221 = arith.mulf %1220, %1218 : vector<1x128xf32>
    %1222 = arith.addf %1168, %1221 : vector<1x128xf32>
    %1223 = vector.broadcast %0 : vector<32x1xf32> to vector<32x128xf32>
    %1224 = vector.broadcast %1222 : vector<1x128xf32> to vector<32x128xf32>
    %1225 = arith.mulf %1223, %1224 : vector<32x128xf32>
    %1226 = vector.broadcast %1 : vector<32x1xf32> to vector<32x128xf32>
    %1227 = arith.addf %1225, %1226 : vector<32x128xf32>
    %1228 = math.tanh %1227 : vector<32x128xf32>
    %cst_335 = arith.constant dense<0.000000e+00> : vector<32x128xf32>
    %1229 = tpu.matmul %2, %1228, %cst_335 {dimension_numbers = #tpu.dot_dimension_numbers<[1], [0], [0], [1], [0, 0, 1, 1], [], []>} : vector<32x32xf32>, vector<32x128xf32>, vector<32x128xf32> -> vector<32x128xf32>
    %1230 = vector.broadcast %3 : vector<32x1xf32> to vector<32x128xf32>
    %1231 = arith.addf %1229, %1230 : vector<32x128xf32>
    %1232 = math.tanh %1231 : vector<32x128xf32>
    %1233 = vector.broadcast %4 : vector<32x1xf32> to vector<32x128xf32>
    %1234 = arith.mulf %1233, %1232 : vector<32x128xf32>
    %cst_336 = arith.constant dense<0.000000e+00> : vector<128xf32>
    %1235 = vector.multi_reduction <add>, %1234, %cst_336 [0] : vector<32x128xf32> to vector<128xf32>
    %1236 = vector.shape_cast %1235 : vector<128xf32> to vector<1x128xf32>
    %1237 = vector.broadcast %5 : vector<1x1xf32> to vector<1x128xf32>
    %1238 = arith.addf %1236, %1237 : vector<1x128xf32>
    %1239 = arith.negf %1238 : vector<1x128xf32>
    %1240 = math.exp %1239 : vector<1x128xf32>
    %cst_337 = arith.constant 1.000000e+00 : f32
    %1241 = vector.broadcast %cst_337 : f32 to vector<1x128xf32>
    %1242 = arith.addf %1241, %1240 : vector<1x128xf32>
    %1243 = arith.divf %1241, %1242 : vector<1x128xf32>
    %c1_i32_338 = arith.constant 1 : i32
    %1244 = tpu.dynamic_rotate %1222 by %c1_i32_338 dim 1 : vector<1x128xf32>, i32 -> vector<1x128xf32>
    %c127_i32_339 = arith.constant 127 : i32
    %1245 = tpu.dynamic_rotate %1222 by %c127_i32_339 dim 1 : vector<1x128xf32>, i32 -> vector<1x128xf32>
    %cst_340 = arith.constant 1.000000e+00 : f32
    %1246 = vector.broadcast %cst_340 : f32 to vector<1x128xf32>
    %1247 = arith.select %9, %1246, %1244 : vector<1x128xi1>, vector<1x128xf32>
    %cst_341 = arith.constant -1.000000e+00 : f32
    %1248 = vector.broadcast %cst_341 : f32 to vector<1x128xf32>
    %1249 = arith.mulf %1248, %1222 : vector<1x128xf32>
    %cst_342 = arith.constant 1.000000e+00 : f32
    %1250 = vector.broadcast %cst_342 : f32 to vector<1x128xf32>
    %1251 = arith.mulf %1250, %1247 : vector<1x128xf32>
    %1252 = arith.addf %1249, %1251 : vector<1x128xf32>
    %cst_343 = arith.constant -1.000000e+00 : f32
    %1253 = vector.broadcast %cst_343 : f32 to vector<1x128xf32>
    %1254 = arith.mulf %1253, %1222 : vector<1x128xf32>
    %cst_344 = arith.constant 1.000000e+00 : f32
    %1255 = vector.broadcast %cst_344 : f32 to vector<1x128xf32>
    %1256 = arith.mulf %1255, %1245 : vector<1x128xf32>
    %1257 = arith.addf %1254, %1256 : vector<1x128xf32>
    %cst_345 = arith.constant 0.000000e+00 : f32
    %1258 = vector.broadcast %cst_345 : f32 to vector<1x128xf32>
    %1259 = arith.select %11, %1258, %1257 : vector<1x128xi1>, vector<1x128xf32>
    %1260 = vector.broadcast %6 : f32 to vector<1x128xf32>
    %1261 = arith.mulf %1243, %1260 : vector<1x128xf32>
    %1262 = arith.addf %1252, %1259 : vector<1x128xf32>
    %1263 = arith.mulf %1261, %1262 : vector<1x128xf32>
    %cst_346 = arith.constant 5.000000e-01 : f32
    %1264 = arith.mulf %cst_346, %1177 : f32
    %1265 = vector.broadcast %1264 : f32 to vector<1x128xf32>
    %1266 = arith.mulf %1265, %1263 : vector<1x128xf32>
    %1267 = arith.addf %1168, %1266 : vector<1x128xf32>
    %1268 = vector.broadcast %0 : vector<32x1xf32> to vector<32x128xf32>
    %1269 = vector.broadcast %1267 : vector<1x128xf32> to vector<32x128xf32>
    %1270 = arith.mulf %1268, %1269 : vector<32x128xf32>
    %1271 = vector.broadcast %1 : vector<32x1xf32> to vector<32x128xf32>
    %1272 = arith.addf %1270, %1271 : vector<32x128xf32>
    %1273 = math.tanh %1272 : vector<32x128xf32>
    %cst_347 = arith.constant dense<0.000000e+00> : vector<32x128xf32>
    %1274 = tpu.matmul %2, %1273, %cst_347 {dimension_numbers = #tpu.dot_dimension_numbers<[1], [0], [0], [1], [0, 0, 1, 1], [], []>} : vector<32x32xf32>, vector<32x128xf32>, vector<32x128xf32> -> vector<32x128xf32>
    %1275 = vector.broadcast %3 : vector<32x1xf32> to vector<32x128xf32>
    %1276 = arith.addf %1274, %1275 : vector<32x128xf32>
    %1277 = math.tanh %1276 : vector<32x128xf32>
    %1278 = vector.broadcast %4 : vector<32x1xf32> to vector<32x128xf32>
    %1279 = arith.mulf %1278, %1277 : vector<32x128xf32>
    %cst_348 = arith.constant dense<0.000000e+00> : vector<128xf32>
    %1280 = vector.multi_reduction <add>, %1279, %cst_348 [0] : vector<32x128xf32> to vector<128xf32>
    %1281 = vector.shape_cast %1280 : vector<128xf32> to vector<1x128xf32>
    %1282 = vector.broadcast %5 : vector<1x1xf32> to vector<1x128xf32>
    %1283 = arith.addf %1281, %1282 : vector<1x128xf32>
    %1284 = arith.negf %1283 : vector<1x128xf32>
    %1285 = math.exp %1284 : vector<1x128xf32>
    %cst_349 = arith.constant 1.000000e+00 : f32
    %1286 = vector.broadcast %cst_349 : f32 to vector<1x128xf32>
    %1287 = arith.addf %1286, %1285 : vector<1x128xf32>
    %1288 = arith.divf %1286, %1287 : vector<1x128xf32>
    %c1_i32_350 = arith.constant 1 : i32
    %1289 = tpu.dynamic_rotate %1267 by %c1_i32_350 dim 1 : vector<1x128xf32>, i32 -> vector<1x128xf32>
    %c127_i32_351 = arith.constant 127 : i32
    %1290 = tpu.dynamic_rotate %1267 by %c127_i32_351 dim 1 : vector<1x128xf32>, i32 -> vector<1x128xf32>
    %cst_352 = arith.constant 1.000000e+00 : f32
    %1291 = vector.broadcast %cst_352 : f32 to vector<1x128xf32>
    %1292 = arith.select %9, %1291, %1289 : vector<1x128xi1>, vector<1x128xf32>
    %cst_353 = arith.constant -1.000000e+00 : f32
    %1293 = vector.broadcast %cst_353 : f32 to vector<1x128xf32>
    %1294 = arith.mulf %1293, %1267 : vector<1x128xf32>
    %cst_354 = arith.constant 1.000000e+00 : f32
    %1295 = vector.broadcast %cst_354 : f32 to vector<1x128xf32>
    %1296 = arith.mulf %1295, %1292 : vector<1x128xf32>
    %1297 = arith.addf %1294, %1296 : vector<1x128xf32>
    %cst_355 = arith.constant -1.000000e+00 : f32
    %1298 = vector.broadcast %cst_355 : f32 to vector<1x128xf32>
    %1299 = arith.mulf %1298, %1267 : vector<1x128xf32>
    %cst_356 = arith.constant 1.000000e+00 : f32
    %1300 = vector.broadcast %cst_356 : f32 to vector<1x128xf32>
    %1301 = arith.mulf %1300, %1290 : vector<1x128xf32>
    %1302 = arith.addf %1299, %1301 : vector<1x128xf32>
    %cst_357 = arith.constant 0.000000e+00 : f32
    %1303 = vector.broadcast %cst_357 : f32 to vector<1x128xf32>
    %1304 = arith.select %11, %1303, %1302 : vector<1x128xi1>, vector<1x128xf32>
    %1305 = vector.broadcast %6 : f32 to vector<1x128xf32>
    %1306 = arith.mulf %1288, %1305 : vector<1x128xf32>
    %1307 = arith.addf %1297, %1304 : vector<1x128xf32>
    %1308 = arith.mulf %1306, %1307 : vector<1x128xf32>
    %1309 = vector.broadcast %1177 : f32 to vector<1x128xf32>
    %1310 = arith.mulf %1309, %1308 : vector<1x128xf32>
    %1311 = arith.addf %1168, %1310 : vector<1x128xf32>
    %1312 = vector.broadcast %0 : vector<32x1xf32> to vector<32x128xf32>
    %1313 = vector.broadcast %1311 : vector<1x128xf32> to vector<32x128xf32>
    %1314 = arith.mulf %1312, %1313 : vector<32x128xf32>
    %1315 = vector.broadcast %1 : vector<32x1xf32> to vector<32x128xf32>
    %1316 = arith.addf %1314, %1315 : vector<32x128xf32>
    %1317 = math.tanh %1316 : vector<32x128xf32>
    %cst_358 = arith.constant dense<0.000000e+00> : vector<32x128xf32>
    %1318 = tpu.matmul %2, %1317, %cst_358 {dimension_numbers = #tpu.dot_dimension_numbers<[1], [0], [0], [1], [0, 0, 1, 1], [], []>} : vector<32x32xf32>, vector<32x128xf32>, vector<32x128xf32> -> vector<32x128xf32>
    %1319 = vector.broadcast %3 : vector<32x1xf32> to vector<32x128xf32>
    %1320 = arith.addf %1318, %1319 : vector<32x128xf32>
    %1321 = math.tanh %1320 : vector<32x128xf32>
    %1322 = vector.broadcast %4 : vector<32x1xf32> to vector<32x128xf32>
    %1323 = arith.mulf %1322, %1321 : vector<32x128xf32>
    %cst_359 = arith.constant dense<0.000000e+00> : vector<128xf32>
    %1324 = vector.multi_reduction <add>, %1323, %cst_359 [0] : vector<32x128xf32> to vector<128xf32>
    %1325 = vector.shape_cast %1324 : vector<128xf32> to vector<1x128xf32>
    %1326 = vector.broadcast %5 : vector<1x1xf32> to vector<1x128xf32>
    %1327 = arith.addf %1325, %1326 : vector<1x128xf32>
    %1328 = arith.negf %1327 : vector<1x128xf32>
    %1329 = math.exp %1328 : vector<1x128xf32>
    %cst_360 = arith.constant 1.000000e+00 : f32
    %1330 = vector.broadcast %cst_360 : f32 to vector<1x128xf32>
    %1331 = arith.addf %1330, %1329 : vector<1x128xf32>
    %1332 = arith.divf %1330, %1331 : vector<1x128xf32>
    %c1_i32_361 = arith.constant 1 : i32
    %1333 = tpu.dynamic_rotate %1311 by %c1_i32_361 dim 1 : vector<1x128xf32>, i32 -> vector<1x128xf32>
    %c127_i32_362 = arith.constant 127 : i32
    %1334 = tpu.dynamic_rotate %1311 by %c127_i32_362 dim 1 : vector<1x128xf32>, i32 -> vector<1x128xf32>
    %cst_363 = arith.constant 1.000000e+00 : f32
    %1335 = vector.broadcast %cst_363 : f32 to vector<1x128xf32>
    %1336 = arith.select %9, %1335, %1333 : vector<1x128xi1>, vector<1x128xf32>
    %cst_364 = arith.constant -1.000000e+00 : f32
    %1337 = vector.broadcast %cst_364 : f32 to vector<1x128xf32>
    %1338 = arith.mulf %1337, %1311 : vector<1x128xf32>
    %cst_365 = arith.constant 1.000000e+00 : f32
    %1339 = vector.broadcast %cst_365 : f32 to vector<1x128xf32>
    %1340 = arith.mulf %1339, %1336 : vector<1x128xf32>
    %1341 = arith.addf %1338, %1340 : vector<1x128xf32>
    %cst_366 = arith.constant -1.000000e+00 : f32
    %1342 = vector.broadcast %cst_366 : f32 to vector<1x128xf32>
    %1343 = arith.mulf %1342, %1311 : vector<1x128xf32>
    %cst_367 = arith.constant 1.000000e+00 : f32
    %1344 = vector.broadcast %cst_367 : f32 to vector<1x128xf32>
    %1345 = arith.mulf %1344, %1334 : vector<1x128xf32>
    %1346 = arith.addf %1343, %1345 : vector<1x128xf32>
    %cst_368 = arith.constant 0.000000e+00 : f32
    %1347 = vector.broadcast %cst_368 : f32 to vector<1x128xf32>
    %1348 = arith.select %11, %1347, %1346 : vector<1x128xi1>, vector<1x128xf32>
    %1349 = vector.broadcast %6 : f32 to vector<1x128xf32>
    %1350 = arith.mulf %1332, %1349 : vector<1x128xf32>
    %1351 = arith.addf %1341, %1348 : vector<1x128xf32>
    %1352 = arith.mulf %1350, %1351 : vector<1x128xf32>
    %cst_369 = arith.constant 6.000000e+00 : f32
    %1353 = arith.divf %1177, %cst_369 : f32
    %1354 = arith.addf %1263, %1308 : vector<1x128xf32>
    %cst_370 = arith.constant 2.000000e+00 : f32
    %1355 = vector.broadcast %cst_370 : f32 to vector<1x128xf32>
    %1356 = arith.mulf %1355, %1354 : vector<1x128xf32>
    %1357 = arith.addf %1218, %1356 : vector<1x128xf32>
    %1358 = arith.addf %1357, %1352 : vector<1x128xf32>
    %1359 = vector.broadcast %1353 : f32 to vector<1x128xf32>
    %1360 = arith.mulf %1359, %1358 : vector<1x128xf32>
    %1361 = arith.addf %1168, %1360 : vector<1x128xf32>
    %c1_i32_371 = arith.constant 1 : i32
    %1362 = arith.addi %c6_i32, %c1_i32_371 : i32
    %1363 = arith.index_cast %1362 : i32 to index
    %c0_372 = arith.constant 0 : index
    %1364 = vector.load %arg9[%1363, %c0_372] : memref<8x128xf32, #tpu.memory_space<vmem>>, vector<1x128xf32>
    tpu.vector_store %arg9[%1363, %c0_372], %1361 {strides = array<i32>} : memref<8x128xf32, #tpu.memory_space<vmem>>, vector<1x128xf32>,
    %c7_i32 = arith.constant 7 : i32
    return
  }
}

</mosaic_0001>

<llo_original>
// kernel: concentration_predictor_forward.1
$region0: #{concentration_predictor_forward.1}
  #allocation0 [shape = 'u32[]', space=smem, size = 0x4, offset = 0x4, fixed_abs, tag = 'smem constant byte address 0x4 - core index']
  #allocation1 [shape = 'u32[144,128]{1,0:T(1,128)}', space=vmem, size = 0x12000, scoped, tag = 'internal scratch']
  #allocation2 [shape = 'f32[1]{0:T(128)S(6)}', space=smem, size = 0x200, scoped, tag = 'scoped memory for concentration_predictor_forward.1']
  #allocation3 [shape = 'f32[1,1]{1,0:T(1,128)S(1)}', space=vmem, size = 0x200, scoped, tag = 'scoped memory for concentration_predictor_forward.1']
  %s0 = inlined_call_operand.vmem [shape: f32[8], index: 0, kind: input, shape index: {}]
  %s1 = inlined_call_operand.<no memory space> [shape: f32[1], index: 1, kind: input, shape index: {}]
  %s2 = inlined_call_operand.vmem [shape: f32[1,128], index: 2, kind: input, shape index: {}]
  %s3 = inlined_call_operand.vmem [shape: f32[32,1], index: 3, kind: input, shape index: {}]
  %s4 = inlined_call_operand.vmem [shape: f32[32,1], index: 4, kind: input, shape index: {}]
  %s5 = inlined_call_operand.vmem [shape: f32[32,32], index: 5, kind: input, shape index: {}]
  %s6 = inlined_call_operand.vmem [shape: f32[32,1], index: 6, kind: input, shape index: {}]
  %s7 = inlined_call_operand.vmem [shape: f32[32,1], index: 7, kind: input, shape index: {}]
  %s8 = inlined_call_operand.<no memory space> [shape: f32[1,1], index: 8, kind: input, shape index: {}]
  %s9 = inlined_call_operand.hbm [shape: f32[8,128], index: 9, kind: output, shape index: {}]
  %s10 = sld [smem:[#allocation0]]
  $region50: #{concentration_predictor_forward.1} parent=0
    _
  %s12 = ssub.s32 1, %s10
  %s13 = scalar_select 0, %s12, %s10
  %14 = sst [smem:[#allocation2]] %s1
  %v15 = vstv %s8
  %16 = vst [vmem:[#allocation3] sm:$0x1] %v15
  $region1: #{concentration_predictor_forward.1} parent=0
    #allocation4 [shape = 'u8[512]{0}', space=smem, size = 0x200, scoped, tag = 'input window, operand 0, single buffered']
    #allocation5 [shape = 's32[1]{0}', space=sflag, size = 0x4, scoped, tag = 'scoped memory for concentration_predictor_forward.1']
    #allocation6 [shape = 's32[1]{0}', space=sflag, size = 0x4, scoped, tag = 'scoped memory for concentration_predictor_forward.1']
    #allocation7 [shape = 'u8[4096]{0}', space=vmem, size = 0x1000, scoped, tag = 'output window, operand 0, single buffered']
    %17 = vsyncpa [#allocation6], 0
    %18 = vsyncpa [#allocation5], 0
    // Predicated region
    $region2: #{concentration_predictor_forward.1} parent=1 // pred_check
      _
    $region3: #{concentration_predictor_forward.1} parent=1 // pred_check_branch
      %20 = sbr.rel (0) target = $region5
    $region4: #{concentration_predictor_forward.1} parent=1 // pred_region
      %s22 = ssub.s32 16, 16
      %23 = vsyncadd [#allocation6], %s22
      %s25 = sshll.u32 %s0, 4
      %s26 = int_to_ptr.vmem [resolvable:$true] %s25
      %28 = dma.vmem_to_smem %s26, 16, [#allocation4], [#allocation6]
    $region5: #{concentration_predictor_forward.1} parent=1 // pred_fallthru
      _
    // Predicated region
    $region6: #{concentration_predictor_forward.1} parent=1 // pred_check
      _
    $region7: #{concentration_predictor_forward.1} parent=1 // pred_check_branch
      %30 = sbr.rel (0) target = $region9
    $region8: #{concentration_predictor_forward.1} parent=1 // pred_region
      _
    $region9: #{concentration_predictor_forward.1} parent=1 // pred_fallthru
      _
    // Predicated region
    $region10: #{concentration_predictor_forward.1} parent=1 // pred_check
      _
    $region11: #{concentration_predictor_forward.1} parent=1 // pred_check_branch
      %32 = sbr.rel (0) target = $region13
    $region12: #{concentration_predictor_forward.1} parent=1 // pred_region
      _
    $region13: #{concentration_predictor_forward.1} parent=1 // pred_fallthru
      _
    // Predicated region
    $region14: #{concentration_predictor_forward.1} parent=1 // pred_check
      _
    $region15: #{concentration_predictor_forward.1} parent=1 // pred_check_branch
      %34 = sbr.rel (0) target = $region17
    $region16: #{concentration_predictor_forward.1} parent=1 // pred_region
      _
    $region17: #{concentration_predictor_forward.1} parent=1 // pred_fallthru
      _
    // Predicated region
    $region18: #{concentration_predictor_forward.1} parent=1 // pred_check
      _
    $region19: #{concentration_predictor_forward.1} parent=1 // pred_check_branch
      %36 = sbr.rel (0) target = $region21
    $region20: #{concentration_predictor_forward.1} parent=1 // pred_region
      _
    $region21: #{concentration_predictor_forward.1} parent=1 // pred_fallthru
      _
    // Predicated region
    $region22: #{concentration_predictor_forward.1} parent=1 // pred_check
      _
    $region23: #{concentration_predictor_forward.1} parent=1 // pred_check_branch
      %38 = sbr.rel (0) target = $region25
    $region24: #{concentration_predictor_forward.1} parent=1 // pred_region
      _
    $region25: #{concentration_predictor_forward.1} parent=1 // pred_fallthru
      _
    // Predicated region
    $region26: #{concentration_predictor_forward.1} parent=1 // pred_check
      _
    $region27: #{concentration_predictor_forward.1} parent=1 // pred_check_branch
      %40 = sbr.rel (0) target = $region29
    $region28: #{concentration_predictor_forward.1} parent=1 // pred_region
      _
    $region29: #{concentration_predictor_forward.1} parent=1 // pred_fallthru
      _
    // Predicated region
    $region30: #{concentration_predictor_forward.1} parent=1 // pred_check
      _
    $region31: #{concentration_predictor_forward.1} parent=1 // pred_check_branch
      %42 = sbr.rel (0) target = $region33
    $region32: #{concentration_predictor_forward.1} parent=1 // pred_region
      _
    $region33: #{concentration_predictor_forward.1} parent=1 // pred_fallthru
      _
    // Predicated region
    $region34: #{concentration_predictor_forward.1} parent=1 // pred_check
      _
    $region35: #{concentration_predictor_forward.1} parent=1 // pred_check_branch
      %44 = sbr.rel (0) target = $region37
    $region36: #{concentration_predictor_forward.1} parent=1 // pred_region
      _
    $region37: #{concentration_predictor_forward.1} parent=1 // pred_fallthru
      _
    // Predicated region
    $region38: #{concentration_predictor_forward.1} parent=1 // pred_check
      _
    $region39: #{concentration_predictor_forward.1} parent=1 // pred_check_branch
      %46 = sbr.rel (0) target = $region41
    $region40: #{concentration_predictor_forward.1} parent=1 // pred_region
      %47 = dma.done [#allocation6], 16
    $region41: #{concentration_predictor_forward.1} parent=1 // pred_fallthru
      _
    %48 = sfence
    %v49 = vld [vmem:[%s3] sm:$0xff]
    %v50 = vld [vmem:[%s3 + $0x8] sm:$0xff]
    %v51 = vld [vmem:[%s3 + $0x10] sm:$0xff]
    %v52 = vld [vmem:[%s3 + $0x18] sm:$0xff]
    %v53 = vld [vmem:[%s4] sm:$0xff]
    %v54 = vld [vmem:[%s4 + $0x8] sm:$0xff]
    %v55 = vld [vmem:[%s4 + $0x10] sm:$0xff]
    %v56 = vld [vmem:[%s4 + $0x18] sm:$0xff]
    %v57 = vld [vmem:[%s5] sm:$0xff]
    %v58 = vld [vmem:[%s5 + $0x8] sm:$0xff]
    %v59 = vld [vmem:[%s5 + $0x10] sm:$0xff]
    %v60 = vld [vmem:[%s5 + $0x18] sm:$0xff]
    %v61 = vld [vmem:[%s6] sm:$0xff]
    %v62 = vld [vmem:[%s6 + $0x8] sm:$0xff]
    %v63 = vld [vmem:[%s6 + $0x10] sm:$0xff]
    %v64 = vld [vmem:[%s6 + $0x18] sm:$0xff]
    %v65 = vld [vmem:[%s7] sm:$0xff]
    %v66 = vld [vmem:[%s7 + $0x8] sm:$0xff]
    %v67 = vld [vmem:[%s7 + $0x10] sm:$0xff]
    %v68 = vld [vmem:[%s7 + $0x18] sm:$0xff]
    %v69 = vld [vmem:[#allocation3] sm:$0x1]
    %s70 = sld [smem:[#allocation2]]
    %v71 = vlaneseq
    %v72 = vand.u32 %v71, 127
    %vm73 = vcmp.eq.s32.totalorder %v72, 0
    %vm74 = vcmp.eq.s32.totalorder %v72, 127
    %v75 = vld [vmem:[%s2] sm:$0x1]
    %76 = vst [vmem:[#allocation7] sm:$0x1] %v75
    %s77 = sld [smem:[#allocation4]]
    %s78 = sld [smem:[#allocation4 + $0x1]]
    %s79 = ssub.f32 %s78, %s77
    %81 = vset.pattern.permute.xlu0 0
    %82 = vperm.xlu0 %81, %v49
    %v83 = vpop.permute.xlu0 %82
    %86 = vset.pattern.permute.xlu0 0
    %87 = vperm.xlu0 %86, %v50
    %v88 = vpop.permute.xlu0 %87
    %91 = vset.pattern.permute.xlu0 0
    %92 = vperm.xlu0 %91, %v51
    %v93 = vpop.permute.xlu0 %92
    %96 = vset.pattern.permute.xlu0 0
    %97 = vperm.xlu0 %96, %v52
    %v98 = vpop.permute.xlu0 %97
    %v101 = vlaneseq
    %v102 = vshrl.u32 %v101, 7
    %v103 = vsub.s32 0, %v102
    %v104 = vrot.slane %v75, %v103
    %v106 = vmul.f32 %v83, %v104
    %v107 = vmul.f32 %v88, %v104
    %v108 = vmul.f32 %v93, %v104
    %v109 = vmul.f32 %v98, %v104
    %111 = vset.pattern.permute.xlu0 0
    %112 = vperm.xlu0 %111, %v53
    %v113 = vpop.permute.xlu0 %112
    %116 = vset.pattern.permute.xlu0 0
    %117 = vperm.xlu0 %116, %v54
    %v118 = vpop.permute.xlu0 %117
    %121 = vset.pattern.permute.xlu0 0
    %122 = vperm.xlu0 %121, %v55
    %v123 = vpop.permute.xlu0 %122
    %126 = vset.pattern.permute.xlu0 0
    %127 = vperm.xlu0 %126, %v56
    %v128 = vpop.permute.xlu0 %127
    %v130 = vadd.f32 %v106, %v113
    %v131 = vadd.f32 %v107, %v118
    %v132 = vadd.f32 %v108, %v123
    %v133 = vadd.f32 %v109, %v128
    %v134 = vtanh.pop %v130
    %v135 = vtanh.pop %v131
    %v136 = vtanh.pop %v132
    %v137 = vtanh.pop %v133
    %139 = vset.pattern.permute.xlu0 0
    %140 = vperm.xlu0 %139, %v61
    %v141 = vpop.permute.xlu0 %140
    %144 = vset.pattern.permute.xlu0 0
    %145 = vperm.xlu0 %144, %v62
    %v146 = vpop.permute.xlu0 %145
    %149 = vset.pattern.permute.xlu0 0
    %150 = vperm.xlu0 %149, %v63
    %v151 = vpop.permute.xlu0 %150
    %154 = vset.pattern.permute.xlu0 0
    %155 = vperm.xlu0 %154, %v64
    %v156 = vpop.permute.xlu0 %155
    %vm158 = vcmask 261120
    %v160 = vsel %vm158, %v57, 0
    %v163 = vsel %vm158, %v58, 0
    %v166 = vsel %vm158, %v59, 0
    %v169 = vsel %vm158, %v60, 0
    %171 = vmatprep.subr.mxu0 0.0
    %172 = vmatpush1.msra.mxu0 %v134
    %173 = vmatprep.subr.mxu0 0.0
    %174 = vmatpush1.msra.mxu0 %v135
    %175 = vmatprep.subr.mxu0 0.0
    %176 = vmatpush1.msra.mxu0 %v136
    %177 = vmatprep.subr.mxu0 0.0
    %178 = vmatpush1.msra.mxu0 %v137
    %179 = vmatprep.subr.mxu0 0.0
    %180 = vmatpush1.msra.mxu0 0.0
    %181 = vmatprep.subr.mxu0 0.0
    %182 = vmatpush1.msra.mxu0 0.0
    %183 = vmatprep.subr.mxu0 0.0
    %184 = vmatpush1.msra.mxu0 0.0
    %185 = vmatprep.subr.mxu0 0.0
    %186 = vmatpush1.msra.mxu0 0.0
    %187 = vmatprep.subr.mxu0 0.0
    %188 = vmatpush1.msra.mxu0 0.0
    %189 = vmatprep.subr.mxu0 0.0
    %190 = vmatpush1.msra.mxu0 0.0
    %191 = vmatprep.subr.mxu0 0.0
    %192 = vmatpush1.msra.mxu0 0.0
    %193 = vmatprep.subr.mxu0 0.0
    %194 = vmatpush1.msra.mxu0 0.0
    %195 = vmatprep.subr.mxu0 0.0
    %196 = vmatpush1.msra.mxu0 0.0
    %197 = vmatprep.subr.mxu0 0.0
    %198 = vmatpush1.msra.mxu0 0.0
    %199 = vmatprep.subr.mxu0 0.0
    %200 = vmatpush1.msra.mxu0 0.0
    %201 = vmatprep.subr.mxu0 0.0
    %202 = vmatpush1.msra.mxu0 0.0
    %203 = vmatprep.subr.mxu0 0.0
    %204 = vmatpush1.msra.mxu0 0.0
    %205 = vmatprep.subr.mxu0 0.0
    %206 = vmatpush1.msra.mxu0 0.0
    %207 = vmatprep.subr.mxu0 0.0
    %208 = vmatpush1.msra.mxu0 0.0
    %209 = vmatprep.subr.mxu0 0.0
    %210 = vmatpush1.msra.mxu0 0.0
    %211 = vmatprep.subr.mxu0 0.0
    %212 = vmatpush1.msra.mxu0 0.0
    %213 = vmatprep.subr.mxu0 0.0
    %214 = vmatpush1.msra.mxu0 0.0
    %215 = vmatprep.subr.mxu0 0.0
    %216 = vmatpush1.msra.mxu0 0.0
    %217 = vmatprep.subr.mxu0 0.0
    %218 = vmatpush1.msra.mxu0 0.0
    %219 = vmatprep.subr.mxu0 0.0
    %220 = vmatpush1.msra.mxu0 0.0
    %221 = vmatprep.subr.mxu0 0.0
    %222 = vmatpush1.msra.mxu0 0.0
    %223 = vmatprep.subr.mxu0 0.0
    %224 = vmatpush1.msra.mxu0 0.0
    %225 = vmatprep.subr.mxu0 0.0
    %226 = vmatpush1.msra.mxu0 0.0
    %227 = vmatprep.subr.mxu0 0.0
    %228 = vmatpush1.msra.mxu0 0.0
    %229 = vmatprep.subr.mxu0 0.0
    %230 = vmatpush1.msra.mxu0 0.0
    %231 = vmatprep.subr.mxu0 0.0
    %232 = vmatpush1.msra.mxu0 0.0
    %233 = vmatprep.subr.mxu0 0.0
    %234 = vmatpush1.msra.mxu0 0.0
    %235 = vmatprep.mubr.f32.mxu0 0.0
    %236 = vmatmul.mubr.f32.gmra.mrb[0].mxu0 %v160
    %v237 = vpop.f32.mrb[0].mxu0
    %v238 = vadd.f32 %v141, %v237
    %v239 = vpop.f32.mrb[0].mxu0
    %240 = vmatprep.mubr.f32.mxu0 0.0
    %241 = vmatmul.mubr.f32.gmra.mrb[0].mxu0 %v163
    %v242 = vpop.f32.mrb[0].mxu0
    %v243 = vadd.f32 %v146, %v242
    %v244 = vpop.f32.mrb[0].mxu0
    %245 = vmatprep.mubr.f32.mxu0 0.0
    %246 = vmatmul.mubr.f32.gmra.mrb[0].mxu0 %v166
    %v247 = vpop.f32.mrb[0].mxu0
    %v248 = vadd.f32 %v151, %v247
    %v249 = vpop.f32.mrb[0].mxu0
    %250 = vmatprep.mubr.f32.mxu0 0.0
    %251 = vmatmul.mubr.f32.gmra.mrb[0].mxu0 %v169
    %v252 = vpop.f32.mrb[0].mxu0
    %v253 = vadd.f32 %v156, %v252
    %v254 = vpop.f32.mrb[0].mxu0
    %255 = vdwg.mxu0
    %v256 = vtanh.pop %v238
    %v257 = vtanh.pop %v243
    %v258 = vtanh.pop %v248
    %v259 = vtanh.pop %v253
    %261 = vset.pattern.permute.xlu0 0
    %262 = vperm.xlu0 %261, %v65
    %v263 = vpop.permute.xlu0 %262
    %266 = vset.pattern.permute.xlu0 0
    %267 = vperm.xlu0 %266, %v66
    %v268 = vpop.permute.xlu0 %267
    %271 = vset.pattern.permute.xlu0 0
    %272 = vperm.xlu0 %271, %v67
    %v273 = vpop.permute.xlu0 %272
    %276 = vset.pattern.permute.xlu0 0
    %277 = vperm.xlu0 %276, %v68
    %v278 = vpop.permute.xlu0 %277
    %v280 = vmul.f32 %v263, %v256
    %v281 = vmul.f32 %v268, %v257
    %v282 = vmul.f32 %v273, %v258
    %v283 = vmul.f32 %v278, %v259
    %v284 = vadd.f32 %v280, %v281
    %v285 = vadd.f32 %v284, %v282
    %v286 = vadd.f32 %v285, %v283
    %v287 = vrot.slane %v286, 4
    %v288 = vadd.f32 %v286, %v287
    %v289 = vrot.slane %v288, 2
    %v290 = vadd.f32 %v288, %v289
    %v291 = vrot.slane %v290, 1
    %v292 = vadd.f32 %v290, %v291
    %294 = vset.pattern.permute.xlu0 0
    %295 = vperm.xlu0 %294, %v69
    %v296 = vpop.permute.xlu0 %295
    %v298 = vlaneseq
    %v299 = vshrl.u32 %v298, 7
    %v300 = vsub.s32 0, %v299
    %v301 = vrot.slane %v296, %v300
    %v302 = vadd.f32 %v292, %v301
    %v303 = vxor.u32 %v302, 2147483648
    %v304 = vmul.f32 %v303, 1.442695
    %v305 = vpow.pop %v304
    %v306 = vadd.f32 %v305, 1.0
    %v307 = vrcp.pop %v306
    %v308 = vmul.f32 1.0, %v307
    %309 = vrot.lane.b32.xlu0 %v75, 1
    %v310 = vpop.permute.xlu0 %309
    %311 = vrot.lane.b32.xlu0 %v75, 127
    %v312 = vpop.permute.xlu0 %311
    %v313 = vsel %vm73, 1.0, %v310
    %v314 = vmul.f32 %v75, -1.0
    %v315 = vadd.f32 %v314, %v313
    %v316 = vadd.f32 %v314, %v312
    %v317 = vsel %vm74, 0.0, %v316
    %v318 = vstv %s70
    %v319 = vmul.f32 %v308, %v318
    %v320 = vadd.f32 %v315, %v317
    %v321 = vmul.f32 %v319, %v320
    %s322 = smul.f32 %s79, 0.5
    %v323 = vstv %s322
    %v324 = vmul.f32 %v323, %v321
    %v325 = vadd.f32 %v75, %v324
    %v327 = vlaneseq
    %v328 = vshrl.u32 %v327, 7
    %v329 = vsub.s32 0, %v328
    %v330 = vrot.slane %v325, %v329
    %v332 = vmul.f32 %v83, %v330
    %v333 = vmul.f32 %v88, %v330
    %v334 = vmul.f32 %v93, %v330
    %v335 = vmul.f32 %v98, %v330
    %v336 = vadd.f32 %v332, %v113
    %v337 = vadd.f32 %v333, %v118
    %v338 = vadd.f32 %v334, %v123
    %v339 = vadd.f32 %v335, %v128
    %v340 = vtanh.pop %v336
    %v341 = vtanh.pop %v337
    %v342 = vtanh.pop %v338
    %v343 = vtanh.pop %v339
    %344 = vmatprep.subr.mxu0 0.0
    %345 = vmatpush1.msra.mxu0 %v340
    %346 = vmatprep.subr.mxu0 0.0
    %347 = vmatpush1.msra.mxu0 %v341
    %348 = vmatprep.subr.mxu0 0.0
    %349 = vmatpush1.msra.mxu0 %v342
    %350 = vmatprep.subr.mxu0 0.0
    %351 = vmatpush1.msra.mxu0 %v343
    %352 = vmatprep.subr.mxu0 0.0
    %353 = vmatpush1.msra.mxu0 0.0
    %354 = vmatprep.subr.mxu0 0.0
    %355 = vmatpush1.msra.mxu0 0.0
    %356 = vmatprep.subr.mxu0 0.0
    %357 = vmatpush1.msra.mxu0 0.0
    %358 = vmatprep.subr.mxu0 0.0
    %359 = vmatpush1.msra.mxu0 0.0
    %360 = vmatprep.subr.mxu0 0.0
    %361 = vmatpush1.msra.mxu0 0.0
    %362 = vmatprep.subr.mxu0 0.0
    %363 = vmatpush1.msra.mxu0 0.0
    %364 = vmatprep.subr.mxu0 0.0
    %365 = vmatpush1.msra.mxu0 0.0
    %366 = vmatprep.subr.mxu0 0.0
    %367 = vmatpush1.msra.mxu0 0.0
    %368 = vmatprep.subr.mxu0 0.0
    %369 = vmatpush1.msra.mxu0 0.0
    %370 = vmatprep.subr.mxu0 0.0
    %371 = vmatpush1.msra.mxu0 0.0
    %372 = vmatprep.subr.mxu0 0.0
    %373 = vmatpush1.msra.mxu0 0.0
    %374 = vmatprep.subr.mxu0 0.0
    %375 = vmatpush1.msra.mxu0 0.0
    %376 = vmatprep.subr.mxu0 0.0
    %377 = vmatpush1.msra.mxu0 0.0
    %378 = vmatprep.subr.mxu0 0.0
    %379 = vmatpush1.msra.mxu0 0.0
    %380 = vmatprep.subr.mxu0 0.0
    %381 = vmatpush1.msra.mxu0 0.0
    %382 = vmatprep.subr.mxu0 0.0
    %383 = vmatpush1.msra.mxu0 0.0
    %384 = vmatprep.subr.mxu0 0.0
    %385 = vmatpush1.msra.mxu0 0.0
    %386 = vmatprep.subr.mxu0 0.0
    %387 = vmatpush1.msra.mxu0 0.0
    %388 = vmatprep.subr.mxu0 0.0
    %389 = vmatpush1.msra.mxu0 0.0
    %390 = vmatprep.subr.mxu0 0.0
    %391 = vmatpush1.msra.mxu0 0.0
    %392 = vmatprep.subr.mxu0 0.0
    %393 = vmatpush1.msra.mxu0 0.0
    %394 = vmatprep.subr.mxu0 0.0
    %395 = vmatpush1.msra.mxu0 0.0
    %396 = vmatprep.subr.mxu0 0.0
    %397 = vmatpush1.msra.mxu0 0.0
    %398 = vmatprep.subr.mxu0 0.0
    %399 = vmatpush1.msra.mxu0 0.0
    %400 = vmatprep.subr.mxu0 0.0
    %401 = vmatpush1.msra.mxu0 0.0
    %402 = vmatprep.subr.mxu0 0.0
    %403 = vmatpush1.msra.mxu0 0.0
    %404 = vmatprep.subr.mxu0 0.0
    %405 = vmatpush1.msra.mxu0 0.0
    %406 = vmatprep.subr.mxu0 0.0
    %407 = vmatpush1.msra.mxu0 0.0
    %408 = vmatprep.mubr.f32.mxu0 0.0
    %409 = vmatmul.mubr.f32.gmra.mrb[0].mxu0 %v160
    %v410 = vpop.f32.mrb[0].mxu0
    %v411 = vadd.f32 %v141, %v410
    %v412 = vpop.f32.mrb[0].mxu0
    %413 = vmatprep.mubr.f32.mxu0 0.0
    %414 = vmatmul.mubr.f32.gmra.mrb[0].mxu0 %v163
    %v415 = vpop.f32.mrb[0].mxu0
    %v416 = vadd.f32 %v146, %v415
    %v417 = vpop.f32.mrb[0].mxu0
    %418 = vmatprep.mubr.f32.mxu0 0.0
    %419 = vmatmul.mubr.f32.gmra.mrb[0].mxu0 %v166
    %v420 = vpop.f32.mrb[0].mxu0
    %v421 = vadd.f32 %v151, %v420
    %v422 = vpop.f32.mrb[0].mxu0
    %423 = vmatprep.mubr.f32.mxu0 0.0
    %424 = vmatmul.mubr.f32.gmra.mrb[0].mxu0 %v169
    %v425 = vpop.f32.mrb[0].mxu0
    %v426 = vadd.f32 %v156, %v425
    %v427 = vpop.f32.mrb[0].mxu0
    %428 = vdwg.mxu0
    %v429 = vtanh.pop %v411
    %v430 = vtanh.pop %v416
    %v431 = vtanh.pop %v421
    %v432 = vtanh.pop %v426
    %v433 = vmul.f32 %v263, %v429
    %v434 = vmul.f32 %v268, %v430
    %v435 = vmul.f32 %v273, %v431
    %v436 = vmul.f32 %v278, %v432
    %v437 = vadd.f32 %v433, %v434
    %v438 = vadd.f32 %v437, %v435
    %v439 = vadd.f32 %v438, %v436
    %v440 = vrot.slane %v439, 4
    %v441 = vadd.f32 %v439, %v440
    %v442 = vrot.slane %v441, 2
    %v443 = vadd.f32 %v441, %v442
    %v444 = vrot.slane %v443, 1
    %v445 = vadd.f32 %v443, %v444
    %v446 = vadd.f32 %v445, %v301
    %v447 = vxor.u32 %v446, 2147483648
    %v448 = vmul.f32 %v447, 1.442695
    %v449 = vpow.pop %v448
    %v450 = vadd.f32 %v449, 1.0
    %v451 = vrcp.pop %v450
    %v452 = vmul.f32 1.0, %v451
    %453 = vrot.lane.b32.xlu0 %v325, 1
    %v454 = vpop.permute.xlu0 %453
    %455 = vrot.lane.b32.xlu0 %v325, 127
    %v456 = vpop.permute.xlu0 %455
    %v457 = vsel %vm73, 1.0, %v454
    %v458 = vmul.f32 %v325, -1.0
    %v459 = vadd.f32 %v458, %v457
    %v460 = vadd.f32 %v458, %v456
    %v461 = vsel %vm74, 0.0, %v460
    %v462 = vmul.f32 %v452, %v318
    %v463 = vadd.f32 %v459, %v461
    %v464 = vmul.f32 %v462, %v463
    %v465 = vmul.f32 %v323, %v464
    %v466 = vadd.f32 %v75, %v465
    %v468 = vlaneseq
    %v469 = vshrl.u32 %v468, 7
    %v470 = vsub.s32 0, %v469
    %v471 = vrot.slane %v466, %v470
    %v473 = vmul.f32 %v83, %v471
    %v474 = vmul.f32 %v88, %v471
    %v475 = vmul.f32 %v93, %v471
    %v476 = vmul.f32 %v98, %v471
    %v477 = vadd.f32 %v473, %v113
    %v478 = vadd.f32 %v474, %v118
    %v479 = vadd.f32 %v475, %v123
    %v480 = vadd.f32 %v476, %v128
    %v481 = vtanh.pop %v477
    %v482 = vtanh.pop %v478
    %v483 = vtanh.pop %v479
    %v484 = vtanh.pop %v480
    %485 = vmatprep.subr.mxu0 0.0
    %486 = vmatpush1.msra.mxu0 %v481
    %487 = vmatprep.subr.mxu0 0.0
    %488 = vmatpush1.msra.mxu0 %v482
    %489 = vmatprep.subr.mxu0 0.0
    %490 = vmatpush1.msra.mxu0 %v483
    %491 = vmatprep.subr.mxu0 0.0
    %492 = vmatpush1.msra.mxu0 %v484
    %493 = vmatprep.subr.mxu0 0.0
    %494 = vmatpush1.msra.mxu0 0.0
    %495 = vmatprep.subr.mxu0 0.0
    %496 = vmatpush1.msra.mxu0 0.0
    %497 = vmatprep.subr.mxu0 0.0
    %498 = vmatpush1.msra.mxu0 0.0
    %499 = vmatprep.subr.mxu0 0.0
    %500 = vmatpush1.msra.mxu0 0.0
    %501 = vmatprep.subr.mxu0 0.0
    %502 = vmatpush1.msra.mxu0 0.0
    %503 = vmatprep.subr.mxu0 0.0
    %504 = vmatpush1.msra.mxu0 0.0
    %505 = vmatprep.subr.mxu0 0.0
    %506 = vmatpush1.msra.mxu0 0.0
    %507 = vmatprep.subr.mxu0 0.0
    %508 = vmatpush1.msra.mxu0 0.0
    %509 = vmatprep.subr.mxu0 0.0
    %510 = vmatpush1.msra.mxu0 0.0
    %511 = vmatprep.subr.mxu0 0.0
    %512 = vmatpush1.msra.mxu0 0.0
    %513 = vmatprep.subr.mxu0 0.0
    %514 = vmatpush1.msra.mxu0 0.0
    %515 = vmatprep.subr.mxu0 0.0
    %516 = vmatpush1.msra.mxu0 0.0
    %517 = vmatprep.subr.mxu0 0.0
    %518 = vmatpush1.msra.mxu0 0.0
    %519 = vmatprep.subr.mxu0 0.0
    %520 = vmatpush1.msra.mxu0 0.0
    %521 = vmatprep.subr.mxu0 0.0
    %522 = vmatpush1.msra.mxu0 0.0
    %523 = vmatprep.subr.mxu0 0.0
    %524 = vmatpush1.msra.mxu0 0.0
    %525 = vmatprep.subr.mxu0 0.0
    %526 = vmatpush1.msra.mxu0 0.0
    %527 = vmatprep.subr.mxu0 0.0
    %528 = vmatpush1.msra.mxu0 0.0
    %529 = vmatprep.subr.mxu0 0.0
    %530 = vmatpush1.msra.mxu0 0.0
    %531 = vmatprep.subr.mxu0 0.0
    %532 = vmatpush1.msra.mxu0 0.0
    %533 = vmatprep.subr.mxu0 0.0
    %534 = vmatpush1.msra.mxu0 0.0
    %535 = vmatprep.subr.mxu0 0.0
    %536 = vmatpush1.msra.mxu0 0.0
    %537 = vmatprep.subr.mxu0 0.0
    %538 = vmatpush1.msra.mxu0 0.0
    %539 = vmatprep.subr.mxu0 0.0
    %540 = vmatpush1.msra.mxu0 0.0
    %541 = vmatprep.subr.mxu0 0.0
    %542 = vmatpush1.msra.mxu0 0.0
    %543 = vmatprep.subr.mxu0 0.0
    %544 = vmatpush1.msra.mxu0 0.0
    %545 = vmatprep.subr.mxu0 0.0
    %546 = vmatpush1.msra.mxu0 0.0
    %547 = vmatprep.subr.mxu0 0.0
    %548 = vmatpush1.msra.mxu0 0.0
    %549 = vmatprep.mubr.f32.mxu0 0.0
    %550 = vmatmul.mubr.f32.gmra.mrb[0].mxu0 %v160
    %v551 = vpop.f32.mrb[0].mxu0
    %v552 = vadd.f32 %v141, %v551
    %v553 = vpop.f32.mrb[0].mxu0
    %554 = vmatprep.mubr.f32.mxu0 0.0
    %555 = vmatmul.mubr.f32.gmra.mrb[0].mxu0 %v163
    %v556 = vpop.f32.mrb[0].mxu0
    %v557 = vadd.f32 %v146, %v556
    %v558 = vpop.f32.mrb[0].mxu0
    %559 = vmatprep.mubr.f32.mxu0 0.0
    %560 = vmatmul.mubr.f32.gmra.mrb[0].mxu0 %v166
    %v561 = vpop.f32.mrb[0].mxu0
    %v562 = vadd.f32 %v151, %v561
    %v563 = vpop.f32.mrb[0].mxu0
    %564 = vmatprep.mubr.f32.mxu0 0.0
    %565 = vmatmul.mubr.f32.gmra.mrb[0].mxu0 %v169
    %v566 = vpop.f32.mrb[0].mxu0
    %v567 = vadd.f32 %v156, %v566
    %v568 = vpop.f32.mrb[0].mxu0
    %569 = vdwg.mxu0
    %v570 = vtanh.pop %v552
    %v571 = vtanh.pop %v557
    %v572 = vtanh.pop %v562
    %v573 = vtanh.pop %v567
    %v574 = vmul.f32 %v263, %v570
    %v575 = vmul.f32 %v268, %v571
    %v576 = vmul.f32 %v273, %v572
    %v577 = vmul.f32 %v278, %v573
    %v578 = vadd.f32 %v574, %v575
    %v579 = vadd.f32 %v578, %v576
    %v580 = vadd.f32 %v579, %v577
    %v581 = vrot.slane %v580, 4
    %v582 = vadd.f32 %v580, %v581
    %v583 = vrot.slane %v582, 2
    %v584 = vadd.f32 %v582, %v583
    %v585 = vrot.slane %v584, 1
    %v586 = vadd.f32 %v584, %v585
    %v587 = vadd.f32 %v586, %v301
    %v588 = vxor.u32 %v587, 2147483648
    %v589 = vmul.f32 %v588, 1.442695
    %v590 = vpow.pop %v589
    %v591 = vadd.f32 %v590, 1.0
    %v592 = vrcp.pop %v591
    %v593 = vmul.f32 1.0, %v592
    %594 = vrot.lane.b32.xlu0 %v466, 1
    %v595 = vpop.permute.xlu0 %594
    %596 = vrot.lane.b32.xlu0 %v466, 127
    %v597 = vpop.permute.xlu0 %596
    %v598 = vsel %vm73, 1.0, %v595
    %v599 = vmul.f32 %v466, -1.0
    %v600 = vadd.f32 %v599, %v598
    %v601 = vadd.f32 %v599, %v597
    %v602 = vsel %vm74, 0.0, %v601
    %v603 = vmul.f32 %v593, %v318
    %v604 = vadd.f32 %v600, %v602
    %v605 = vmul.f32 %v603, %v604
    %v606 = vstv %s79
    %v607 = vmul.f32 %v606, %v605
    %v608 = vadd.f32 %v75, %v607
    %v610 = vlaneseq
    %v611 = vshrl.u32 %v610, 7
    %v612 = vsub.s32 0, %v611
    %v613 = vrot.slane %v608, %v612
    %v615 = vmul.f32 %v83, %v613
    %v616 = vmul.f32 %v88, %v613
    %v617 = vmul.f32 %v93, %v613
    %v618 = vmul.f32 %v98, %v613
    %v619 = vadd.f32 %v615, %v113
    %v620 = vadd.f32 %v616, %v118
    %v621 = vadd.f32 %v617, %v123
    %v622 = vadd.f32 %v618, %v128
    %v623 = vtanh.pop %v619
    %v624 = vtanh.pop %v620
    %v625 = vtanh.pop %v621
    %v626 = vtanh.pop %v622
    %627 = vmatprep.subr.mxu0 0.0
    %628 = vmatpush1.msra.mxu0 %v623
    %629 = vmatprep.subr.mxu0 0.0
    %630 = vmatpush1.msra.mxu0 %v624
    %631 = vmatprep.subr.mxu0 0.0
    %632 = vmatpush1.msra.mxu0 %v625
    %633 = vmatprep.subr.mxu0 0.0
    %634 = vmatpush1.msra.mxu0 %v626
    %635 = vmatprep.subr.mxu0 0.0
    %636 = vmatpush1.msra.mxu0 0.0
    %637 = vmatprep.subr.mxu0 0.0
    %638 = vmatpush1.msra.mxu0 0.0
    %639 = vmatprep.subr.mxu0 0.0
    %640 = vmatpush1.msra.mxu0 0.0
    %641 = vmatprep.subr.mxu0 0.0
    %642 = vmatpush1.msra.mxu0 0.0
    %643 = vmatprep.subr.mxu0 0.0
    %644 = vmatpush1.msra.mxu0 0.0
    %645 = vmatprep.subr.mxu0 0.0
    %646 = vmatpush1.msra.mxu0 0.0
    %647 = vmatprep.subr.mxu0 0.0
    %648 = vmatpush1.msra.mxu0 0.0
    %649 = vmatprep.subr.mxu0 0.0
    %650 = vmatpush1.msra.mxu0 0.0
    %651 = vmatprep.subr.mxu0 0.0
    %652 = vmatpush1.msra.mxu0 0.0
    %653 = vmatprep.subr.mxu0 0.0
    %654 = vmatpush1.msra.mxu0 0.0
    %655 = vmatprep.subr.mxu0 0.0
    %656 = vmatpush1.msra.mxu0 0.0
    %657 = vmatprep.subr.mxu0 0.0
    %658 = vmatpush1.msra.mxu0 0.0
    %659 = vmatprep.subr.mxu0 0.0
    %660 = vmatpush1.msra.mxu0 0.0
    %661 = vmatprep.subr.mxu0 0.0
    %662 = vmatpush1.msra.mxu0 0.0
    %663 = vmatprep.subr.mxu0 0.0
    %664 = vmatpush1.msra.mxu0 0.0
    %665 = vmatprep.subr.mxu0 0.0
    %666 = vmatpush1.msra.mxu0 0.0
    %667 = vmatprep.subr.mxu0 0.0
    %668 = vmatpush1.msra.mxu0 0.0
    %669 = vmatprep.subr.mxu0 0.0
    %670 = vmatpush1.msra.mxu0 0.0
    %671 = vmatprep.subr.mxu0 0.0
    %672 = vmatpush1.msra.mxu0 0.0
    %673 = vmatprep.subr.mxu0 0.0
    %674 = vmatpush1.msra.mxu0 0.0
    %675 = vmatprep.subr.mxu0 0.0
    %676 = vmatpush1.msra.mxu0 0.0
    %677 = vmatprep.subr.mxu0 0.0
    %678 = vmatpush1.msra.mxu0 0.0
    %679 = vmatprep.subr.mxu0 0.0
    %680 = vmatpush1.msra.mxu0 0.0
    %681 = vmatprep.subr.mxu0 0.0
    %682 = vmatpush1.msra.mxu0 0.0
    %683 = vmatprep.subr.mxu0 0.0
    %684 = vmatpush1.msra.mxu0 0.0
    %685 = vmatprep.subr.mxu0 0.0
    %686 = vmatpush1.msra.mxu0 0.0
    %687 = vmatprep.subr.mxu0 0.0
    %688 = vmatpush1.msra.mxu0 0.0
    %689 = vmatprep.subr.mxu0 0.0
    %690 = vmatpush1.msra.mxu0 0.0
    %691 = vmatprep.mubr.f32.mxu0 0.0
    %692 = vmatmul.mubr.f32.gmra.mrb[0].mxu0 %v160
    %v693 = vpop.f32.mrb[0].mxu0
    %v694 = vadd.f32 %v141, %v693
    %v695 = vpop.f32.mrb[0].mxu0
    %696 = vmatprep.mubr.f32.mxu0 0.0
    %697 = vmatmul.mubr.f32.gmra.mrb[0].mxu0 %v163
    %v698 = vpop.f32.mrb[0].mxu0
    %v699 = vadd.f32 %v146, %v698
    %v700 = vpop.f32.mrb[0].mxu0
    %701 = vmatprep.mubr.f32.mxu0 0.0
    %702 = vmatmul.mubr.f32.gmra.mrb[0].mxu0 %v166
    %v703 = vpop.f32.mrb[0].mxu0
    %v704 = vadd.f32 %v151, %v703
    %v705 = vpop.f32.mrb[0].mxu0
    %706 = vmatprep.mubr.f32.mxu0 0.0
    %707 = vmatmul.mubr.f32.gmra.mrb[0].mxu0 %v169
    %v708 = vpop.f32.mrb[0].mxu0
    %v709 = vadd.f32 %v156, %v708
    %v710 = vpop.f32.mrb[0].mxu0
    %711 = vdwg.mxu0
    %v712 = vtanh.pop %v694
    %v713 = vtanh.pop %v699
    %v714 = vtanh.pop %v704
    %v715 = vtanh.pop %v709
    %v716 = vmul.f32 %v263, %v712
    %v717 = vmul.f32 %v268, %v713
    %v718 = vmul.f32 %v273, %v714
    %v719 = vmul.f32 %v278, %v715
    %v720 = vadd.f32 %v716, %v717
    %v721 = vadd.f32 %v720, %v718
    %v722 = vadd.f32 %v721, %v719
    %v723 = vrot.slane %v722, 4
    %v724 = vadd.f32 %v722, %v723
    %v725 = vrot.slane %v724, 2
    %v726 = vadd.f32 %v724, %v725
    %v727 = vrot.slane %v726, 1
    %v728 = vadd.f32 %v726, %v727
    %v729 = vadd.f32 %v728, %v301
    %v730 = vxor.u32 %v729, 2147483648
    %v731 = vmul.f32 %v730, 1.442695
    %v732 = vpow.pop %v731
    %v733 = vadd.f32 %v732, 1.0
    %v734 = vrcp.pop %v733
    %v735 = vmul.f32 1.0, %v734
    %736 = vrot.lane.b32.xlu0 %v608, 1
    %v737 = vpop.permute.xlu0 %736
    %738 = vrot.lane.b32.xlu0 %v608, 127
    %v739 = vpop.permute.xlu0 %738
    %v740 = vsel %vm73, 1.0, %v737
    %v741 = vmul.f32 %v608, -1.0
    %v742 = vadd.f32 %v741, %v740
    %v743 = vadd.f32 %v741, %v739
    %v744 = vsel %vm74, 0.0, %v743
    %v745 = vmul.f32 %v735, %v318
    %v746 = vadd.f32 %v742, %v744
    %v747 = vmul.f32 %v745, %v746
    %v748 = vrcp.pop 6.0
    %s749 = vtos %v748
    %s750 = smul.f32 %s79, %s749
    %v751 = vadd.f32 %v464, %v605
    %v752 = vmul.f32 %v751, 2.0
    %v753 = vadd.f32 %v321, %v752
    %v754 = vadd.f32 %v753, %v747
    %v755 = vstv %s750
    %v756 = vmul.f32 %v755, %v754
    %v757 = vadd.f32 %v75, %v756
    %758 = vst [vmem:[#allocation7 + $0x1] sm:$0x1] %v757
    %s759 = sld [smem:[#allocation4 + $0x1]]
    %s760 = sld [smem:[#allocation4 + $0x2]]
    %s761 = ssub.f32 %s760, %s759
    %v763 = vlaneseq
    %v764 = vshrl.u32 %v763, 7
    %v765 = vsub.s32 0, %v764
    %v766 = vrot.slane %v757, %v765
    %v768 = vmul.f32 %v83, %v766
    %v769 = vmul.f32 %v88, %v766
    %v770 = vmul.f32 %v93, %v766
    %v771 = vmul.f32 %v98, %v766
    %v772 = vadd.f32 %v768, %v113
    %v773 = vadd.f32 %v769, %v118
    %v774 = vadd.f32 %v770, %v123
    %v775 = vadd.f32 %v771, %v128
    %v776 = vtanh.pop %v772
    %v777 = vtanh.pop %v773
    %v778 = vtanh.pop %v774
    %v779 = vtanh.pop %v775
    %780 = vmatprep.subr.mxu0 0.0
    %781 = vmatpush1.msra.mxu0 %v776
    %782 = vmatprep.subr.mxu0 0.0
    %783 = vmatpush1.msra.mxu0 %v777
    %784 = vmatprep.subr.mxu0 0.0
    %785 = vmatpush1.msra.mxu0 %v778
    %786 = vmatprep.subr.mxu0 0.0
    %787 = vmatpush1.msra.mxu0 %v779
    %788 = vmatprep.subr.mxu0 0.0
    %789 = vmatpush1.msra.mxu0 0.0
    %790 = vmatprep.subr.mxu0 0.0
    %791 = vmatpush1.msra.mxu0 0.0
    %792 = vmatprep.subr.mxu0 0.0
    %793 = vmatpush1.msra.mxu0 0.0
    %794 = vmatprep.subr.mxu0 0.0
    %795 = vmatpush1.msra.mxu0 0.0
    %796 = vmatprep.subr.mxu0 0.0
    %797 = vmatpush1.msra.mxu0 0.0
    %798 = vmatprep.subr.mxu0 0.0
    %799 = vmatpush1.msra.mxu0 0.0
    %800 = vmatprep.subr.mxu0 0.0
    %801 = vmatpush1.msra.mxu0 0.0
    %802 = vmatprep.subr.mxu0 0.0
    %803 = vmatpush1.msra.mxu0 0.0
    %804 = vmatprep.subr.mxu0 0.0
    %805 = vmatpush1.msra.mxu0 0.0
    %806 = vmatprep.subr.mxu0 0.0
    %807 = vmatpush1.msra.mxu0 0.0
    %808 = vmatprep.subr.mxu0 0.0
    %809 = vmatpush1.msra.mxu0 0.0
    %810 = vmatprep.subr.mxu0 0.0
    %811 = vmatpush1.msra.mxu0 0.0
    %812 = vmatprep.subr.mxu0 0.0
    %813 = vmatpush1.msra.mxu0 0.0
    %814 = vmatprep.subr.mxu0 0.0
    %815 = vmatpush1.msra.mxu0 0.0
    %816 = vmatprep.subr.mxu0 0.0
    %817 = vmatpush1.msra.mxu0 0.0
    %818 = vmatprep.subr.mxu0 0.0
    %819 = vmatpush1.msra.mxu0 0.0
    %820 = vmatprep.subr.mxu0 0.0
    %821 = vmatpush1.msra.mxu0 0.0
    %822 = vmatprep.subr.mxu0 0.0
    %823 = vmatpush1.msra.mxu0 0.0
    %824 = vmatprep.subr.mxu0 0.0
    %825 = vmatpush1.msra.mxu0 0.0
    %826 = vmatprep.subr.mxu0 0.0
    %827 = vmatpush1.msra.mxu0 0.0
    %828 = vmatprep.subr.mxu0 0.0
    %829 = vmatpush1.msra.mxu0 0.0
    %830 = vmatprep.subr.mxu0 0.0
    %831 = vmatpush1.msra.mxu0 0.0
    %832 = vmatprep.subr.mxu0 0.0
    %833 = vmatpush1.msra.mxu0 0.0
    %834 = vmatprep.subr.mxu0 0.0
    %835 = vmatpush1.msra.mxu0 0.0
    %836 = vmatprep.subr.mxu0 0.0
    %837 = vmatpush1.msra.mxu0 0.0
    %838 = vmatprep.subr.mxu0 0.0
    %839 = vmatpush1.msra.mxu0 0.0
    %840 = vmatprep.subr.mxu0 0.0
    %841 = vmatpush1.msra.mxu0 0.0
    %842 = vmatprep.subr.mxu0 0.0
    %843 = vmatpush1.msra.mxu0 0.0
    %844 = vmatprep.mubr.f32.mxu0 0.0
    %845 = vmatmul.mubr.f32.gmra.mrb[0].mxu0 %v160
    %v846 = vpop.f32.mrb[0].mxu0
    %v847 = vadd.f32 %v141, %v846
    %v848 = vpop.f32.mrb[0].mxu0
    %849 = vmatprep.mubr.f32.mxu0 0.0
    %850 = vmatmul.mubr.f32.gmra.mrb[0].mxu0 %v163
    %v851 = vpop.f32.mrb[0].mxu0
    %v852 = vadd.f32 %v146, %v851
    %v853 = vpop.f32.mrb[0].mxu0
    %854 = vmatprep.mubr.f32.mxu0 0.0
    %855 = vmatmul.mubr.f32.gmra.mrb[0].mxu0 %v166
    %v856 = vpop.f32.mrb[0].mxu0
    %v857 = vadd.f32 %v151, %v856
    %v858 = vpop.f32.mrb[0].mxu0
    %859 = vmatprep.mubr.f32.mxu0 0.0
    %860 = vmatmul.mubr.f32.gmra.mrb[0].mxu0 %v169
    %v861 = vpop.f32.mrb[0].mxu0
    %v862 = vadd.f32 %v156, %v861
    %v863 = vpop.f32.mrb[0].mxu0
    %864 = vdwg.mxu0
    %v865 = vtanh.pop %v847
    %v866 = vtanh.pop %v852
    %v867 = vtanh.pop %v857
    %v868 = vtanh.pop %v862
    %v869 = vmul.f32 %v263, %v865
    %v870 = vmul.f32 %v268, %v866
    %v871 = vmul.f32 %v273, %v867
    %v872 = vmul.f32 %v278, %v868
    %v873 = vadd.f32 %v869, %v870
    %v874 = vadd.f32 %v873, %v871
    %v875 = vadd.f32 %v874, %v872
    %v876 = vrot.slane %v875, 4
    %v877 = vadd.f32 %v875, %v876
    %v878 = vrot.slane %v877, 2
    %v879 = vadd.f32 %v877, %v878
    %v880 = vrot.slane %v879, 1
    %v881 = vadd.f32 %v879, %v880
    %v882 = vadd.f32 %v881, %v301
    %v883 = vxor.u32 %v882, 2147483648
    %v884 = vmul.f32 %v883, 1.442695
    %v885 = vpow.pop %v884
    %v886 = vadd.f32 %v885, 1.0
    %v887 = vrcp.pop %v886
    %v888 = vmul.f32 1.0, %v887
    %889 = vrot.lane.b32.xlu0 %v757, 1
    %v890 = vpop.permute.xlu0 %889
    %891 = vrot.lane.b32.xlu0 %v757, 127
    %v892 = vpop.permute.xlu0 %891
    %v893 = vsel %vm73, 1.0, %v890
    %v894 = vmul.f32 %v757, -1.0
    %v895 = vadd.f32 %v894, %v893
    %v896 = vadd.f32 %v894, %v892
    %v897 = vsel %vm74, 0.0, %v896
    %v898 = vmul.f32 %v888, %v318
    %v899 = vadd.f32 %v895, %v897
    %v900 = vmul.f32 %v898, %v899
    %s901 = smul.f32 %s761, 0.5
    %v902 = vstv %s901
    %v903 = vmul.f32 %v902, %v900
    %v904 = vadd.f32 %v757, %v903
    %v906 = vlaneseq
    %v907 = vshrl.u32 %v906, 7
    %v908 = vsub.s32 0, %v907
    %v909 = vrot.slane %v904, %v908
    %v911 = vmul.f32 %v83, %v909
    %v912 = vmul.f32 %v88, %v909
    %v913 = vmul.f32 %v93, %v909
    %v914 = vmul.f32 %v98, %v909
    %v915 = vadd.f32 %v911, %v113
    %v916 = vadd.f32 %v912, %v118
    %v917 = vadd.f32 %v913, %v123
    %v918 = vadd.f32 %v914, %v128
    %v919 = vtanh.pop %v915
    %v920 = vtanh.pop %v916
    %v921 = vtanh.pop %v917
    %v922 = vtanh.pop %v918
    %923 = vmatprep.subr.mxu0 0.0
    %924 = vmatpush1.msra.mxu0 %v919
    %925 = vmatprep.subr.mxu0 0.0
    %926 = vmatpush1.msra.mxu0 %v920
    %927 = vmatprep.subr.mxu0 0.0
    %928 = vmatpush1.msra.mxu0 %v921
    %929 = vmatprep.subr.mxu0 0.0
    %930 = vmatpush1.msra.mxu0 %v922
    %931 = vmatprep.subr.mxu0 0.0
    %932 = vmatpush1.msra.mxu0 0.0
    %933 = vmatprep.subr.mxu0 0.0
    %934 = vmatpush1.msra.mxu0 0.0
    %935 = vmatprep.subr.mxu0 0.0
    %936 = vmatpush1.msra.mxu0 0.0
    %937 = vmatprep.subr.mxu0 0.0
    %938 = vmatpush1.msra.mxu0 0.0
    %939 = vmatprep.subr.mxu0 0.0
    %940 = vmatpush1.msra.mxu0 0.0
    %941 = vmatprep.subr.mxu0 0.0
    %942 = vmatpush1.msra.mxu0 0.0
    %943 = vmatprep.subr.mxu0 0.0
    %944 = vmatpush1.msra.mxu0 0.0
    %945 = vmatprep.subr.mxu0 0.0
    %946 = vmatpush1.msra.mxu0 0.0
    %947 = vmatprep.subr.mxu0 0.0
    %948 = vmatpush1.msra.mxu0 0.0
    %949 = vmatprep.subr.mxu0 0.0
    %950 = vmatpush1.msra.mxu0 0.0
    %951 = vmatprep.subr.mxu0 0.0
    %952 = vmatpush1.msra.mxu0 0.0
    %953 = vmatprep.subr.mxu0 0.0
    %954 = vmatpush1.msra.mxu0 0.0
    %955 = vmatprep.subr.mxu0 0.0
    %956 = vmatpush1.msra.mxu0 0.0
    %957 = vmatprep.subr.mxu0 0.0
    %958 = vmatpush1.msra.mxu0 0.0
    %959 = vmatprep.subr.mxu0 0.0
    %960 = vmatpush1.msra.mxu0 0.0
    %961 = vmatprep.subr.mxu0 0.0
    %962 = vmatpush1.msra.mxu0 0.0
    %963 = vmatprep.subr.mxu0 0.0
    %964 = vmatpush1.msra.mxu0 0.0
    %965 = vmatprep.subr.mxu0 0.0
    %966 = vmatpush1.msra.mxu0 0.0
    %967 = vmatprep.subr.mxu0 0.0
    %968 = vmatpush1.msra.mxu0 0.0
    %969 = vmatprep.subr.mxu0 0.0
    %970 = vmatpush1.msra.mxu0 0.0
    %971 = vmatprep.subr.mxu0 0.0
    %972 = vmatpush1.msra.mxu0 0.0
    %973 = vmatprep.subr.mxu0 0.0
    %974 = vmatpush1.msra.mxu0 0.0
    %975 = vmatprep.subr.mxu0 0.0
    %976 = vmatpush1.msra.mxu0 0.0
    %977 = vmatprep.subr.mxu0 0.0
    %978 = vmatpush1.msra.mxu0 0.0
    %979 = vmatprep.subr.mxu0 0.0
    %980 = vmatpush1.msra.mxu0 0.0
    %981 = vmatprep.subr.mxu0 0.0
    %982 = vmatpush1.msra.mxu0 0.0
    %983 = vmatprep.subr.mxu0 0.0
    %984 = vmatpush1.msra.mxu0 0.0
    %985 = vmatprep.subr.mxu0 0.0
    %986 = vmatpush1.msra.mxu0 0.0
    %987 = vmatprep.mubr.f32.mxu0 0.0
    %988 = vmatmul.mubr.f32.gmra.mrb[0].mxu0 %v160
    %v989 = vpop.f32.mrb[0].mxu0
    %v990 = vadd.f32 %v141, %v989
    %v991 = vpop.f32.mrb[0].mxu0
    %992 = vmatprep.mubr.f32.mxu0 0.0
    %993 = vmatmul.mubr.f32.gmra.mrb[0].mxu0 %v163
    %v994 = vpop.f32.mrb[0].mxu0
    %v995 = vadd.f32 %v146, %v994
    %v996 = vpop.f32.mrb[0].mxu0
    %997 = vmatprep.mubr.f32.mxu0 0.0
    %998 = vmatmul.mubr.f32.gmra.mrb[0].mxu0 %v166
    %v999 = vpop.f32.mrb[0].mxu0
    %v1000 = vadd.f32 %v151, %v999
    %v1001 = vpop.f32.mrb[0].mxu0
    %1002 = vmatprep.mubr.f32.mxu0 0.0
    %1003 = vmatmul.mubr.f32.gmra.mrb[0].mxu0 %v169
    %v1004 = vpop.f32.mrb[0].mxu0
    %v1005 = vadd.f32 %v156, %v1004
    %v1006 = vpop.f32.mrb[0].mxu0
    %1007 = vdwg.mxu0
    %v1008 = vtanh.pop %v990
    %v1009 = vtanh.pop %v995
    %v1010 = vtanh.pop %v1000
    %v1011 = vtanh.pop %v1005
    %v1012 = vmul.f32 %v263, %v1008
    %v1013 = vmul.f32 %v268, %v1009
    %v1014 = vmul.f32 %v273, %v1010
    %v1015 = vmul.f32 %v278, %v1011
    %v1016 = vadd.f32 %v1012, %v1013
    %v1017 = vadd.f32 %v1016, %v1014
    %v1018 = vadd.f32 %v1017, %v1015
    %v1019 = vrot.slane %v1018, 4
    %v1020 = vadd.f32 %v1018, %v1019
    %v1021 = vrot.slane %v1020, 2
    %v1022 = vadd.f32 %v1020, %v1021
    %v1023 = vrot.slane %v1022, 1
    %v1024 = vadd.f32 %v1022, %v1023
    %v1025 = vadd.f32 %v1024, %v301
    %v1026 = vxor.u32 %v1025, 2147483648
    %v1027 = vmul.f32 %v1026, 1.442695
    %v1028 = vpow.pop %v1027
    %v1029 = vadd.f32 %v1028, 1.0
    %v1030 = vrcp.pop %v1029
    %v1031 = vmul.f32 1.0, %v1030
    %1032 = vrot.lane.b32.xlu0 %v904, 1
    %v1033 = vpop.permute.xlu0 %1032
    %1034 = vrot.lane.b32.xlu0 %v904, 127
    %v1035 = vpop.permute.xlu0 %1034
    %v1036 = vsel %vm73, 1.0, %v1033
    %v1037 = vmul.f32 %v904, -1.0
    %v1038 = vadd.f32 %v1037, %v1036
    %v1039 = vadd.f32 %v1037, %v1035
    %v1040 = vsel %vm74, 0.0, %v1039
    %v1041 = vmul.f32 %v1031, %v318
    %v1042 = vadd.f32 %v1038, %v1040
    %v1043 = vmul.f32 %v1041, %v1042
    %v1044 = vmul.f32 %v902, %v1043
    %v1045 = vadd.f32 %v757, %v1044
    %v1047 = vlaneseq
    %v1048 = vshrl.u32 %v1047, 7
    %v1049 = vsub.s32 0, %v1048
    %v1050 = vrot.slane %v1045, %v1049
    %v1052 = vmul.f32 %v83, %v1050
    %v1053 = vmul.f32 %v88, %v1050
    %v1054 = vmul.f32 %v93, %v1050
    %v1055 = vmul.f32 %v98, %v1050
    %v1056 = vadd.f32 %v1052, %v113
    %v1057 = vadd.f32 %v1053, %v118
    %v1058 = vadd.f32 %v1054, %v123
    %v1059 = vadd.f32 %v1055, %v128
    %v1060 = vtanh.pop %v1056
    %v1061 = vtanh.pop %v1057
    %v1062 = vtanh.pop %v1058
    %v1063 = vtanh.pop %v1059
    %1064 = vmatprep.subr.mxu0 0.0
    %1065 = vmatpush1.msra.mxu0 %v1060
    %1066 = vmatprep.subr.mxu0 0.0
    %1067 = vmatpush1.msra.mxu0 %v1061
    %1068 = vmatprep.subr.mxu0 0.0
    %1069 = vmatpush1.msra.mxu0 %v1062
    %1070 = vmatprep.subr.mxu0 0.0
    %1071 = vmatpush1.msra.mxu0 %v1063
    %1072 = vmatprep.subr.mxu0 0.0
    %1073 = vmatpush1.msra.mxu0 0.0
    %1074 = vmatprep.subr.mxu0 0.0
    %1075 = vmatpush1.msra.mxu0 0.0
    %1076 = vmatprep.subr.mxu0 0.0
    %1077 = vmatpush1.msra.mxu0 0.0
    %1078 = vmatprep.subr.mxu0 0.0
    %1079 = vmatpush1.msra.mxu0 0.0
    %1080 = vmatprep.subr.mxu0 0.0
    %1081 = vmatpush1.msra.mxu0 0.0
    %1082 = vmatprep.subr.mxu0 0.0
    %1083 = vmatpush1.msra.mxu0 0.0
    %1084 = vmatprep.subr.mxu0 0.0
    %1085 = vmatpush1.msra.mxu0 0.0
    %1086 = vmatprep.subr.mxu0 0.0
    %1087 = vmatpush1.msra.mxu0 0.0
    %1088 = vmatprep.subr.mxu0 0.0
    %1089 = vmatpush1.msra.mxu0 0.0
    %1090 = vmatprep.subr.mxu0 0.0
    %1091 = vmatpush1.msra.mxu0 0.0
    %1092 = vmatprep.subr.mxu0 0.0
    %1093 = vmatpush1.msra.mxu0 0.0
    %1094 = vmatprep.subr.mxu0 0.0
    %1095 = vmatpush1.msra.mxu0 0.0
    %1096 = vmatprep.subr.mxu0 0.0
    %1097 = vmatpush1.msra.mxu0 0.0
    %1098 = vmatprep.subr.mxu0 0.0
    %1099 = vmatpush1.msra.mxu0 0.0
    %1100 = vmatprep.subr.mxu0 0.0
    %1101 = vmatpush1.msra.mxu0 0.0
    %1102 = vmatprep.subr.mxu0 0.0
    %1103 = vmatpush1.msra.mxu0 0.0
    %1104 = vmatprep.subr.mxu0 0.0
    %1105 = vmatpush1.msra.mxu0 0.0
    %1106 = vmatprep.subr.mxu0 0.0
    %1107 = vmatpush1.msra.mxu0 0.0
    %1108 = vmatprep.subr.mxu0 0.0
    %1109 = vmatpush1.msra.mxu0 0.0
    %1110 = vmatprep.subr.mxu0 0.0
    %1111 = vmatpush1.msra.mxu0 0.0
    %1112 = vmatprep.subr.mxu0 0.0
    %1113 = vmatpush1.msra.mxu0 0.0
    %1114 = vmatprep.subr.mxu0 0.0
    %1115 = vmatpush1.msra.mxu0 0.0
    %1116 = vmatprep.subr.mxu0 0.0
    %1117 = vmatpush1.msra.mxu0 0.0
    %1118 = vmatprep.subr.mxu0 0.0
    %1119 = vmatpush1.msra.mxu0 0.0
    %1120 = vmatprep.subr.mxu0 0.0
    %1121 = vmatpush1.msra.mxu0 0.0
    %1122 = vmatprep.subr.mxu0 0.0
    %1123 = vmatpush1.msra.mxu0 0.0
    %1124 = vmatprep.subr.mxu0 0.0
    %1125 = vmatpush1.msra.mxu0 0.0
    %1126 = vmatprep.subr.mxu0 0.0
    %1127 = vmatpush1.msra.mxu0 0.0
    %1128 = vmatprep.mubr.f32.mxu0 0.0
    %1129 = vmatmul.mubr.f32.gmra.mrb[0].mxu0 %v160
    %v1130 = vpop.f32.mrb[0].mxu0
    %v1131 = vadd.f32 %v141, %v1130
    %v1132 = vpop.f32.mrb[0].mxu0
    %1133 = vmatprep.mubr.f32.mxu0 0.0
    %1134 = vmatmul.mubr.f32.gmra.mrb[0].mxu0 %v163
    %v1135 = vpop.f32.mrb[0].mxu0
    %v1136 = vadd.f32 %v146, %v1135
    %v1137 = vpop.f32.mrb[0].mxu0
    %1138 = vmatprep.mubr.f32.mxu0 0.0
    %1139 = vmatmul.mubr.f32.gmra.mrb[0].mxu0 %v166
    %v1140 = vpop.f32.mrb[0].mxu0
    %v1141 = vadd.f32 %v151, %v1140
    %v1142 = vpop.f32.mrb[0].mxu0
    %1143 = vmatprep.mubr.f32.mxu0 0.0
    %1144 = vmatmul.mubr.f32.gmra.mrb[0].mxu0 %v169
    %v1145 = vpop.f32.mrb[0].mxu0
    %v1146 = vadd.f32 %v156, %v1145
    %v1147 = vpop.f32.mrb[0].mxu0
    %1148 = vdwg.mxu0
    %v1149 = vtanh.pop %v1131
    %v1150 = vtanh.pop %v1136
    %v1151 = vtanh.pop %v1141
    %v1152 = vtanh.pop %v1146
    %v1153 = vmul.f32 %v263, %v1149
    %v1154 = vmul.f32 %v268, %v1150
    %v1155 = vmul.f32 %v273, %v1151
    %v1156 = vmul.f32 %v278, %v1152
    %v1157 = vadd.f32 %v1153, %v1154
    %v1158 = vadd.f32 %v1157, %v1155
    %v1159 = vadd.f32 %v1158, %v1156
    %v1160 = vrot.slane %v1159, 4
    %v1161 = vadd.f32 %v1159, %v1160
    %v1162 = vrot.slane %v1161, 2
    %v1163 = vadd.f32 %v1161, %v1162
    %v1164 = vrot.slane %v1163, 1
    %v1165 = vadd.f32 %v1163, %v1164
    %v1166 = vadd.f32 %v1165, %v301
    %v1167 = vxor.u32 %v1166, 2147483648
    %v1168 = vmul.f32 %v1167, 1.442695
    %v1169 = vpow.pop %v1168
    %v1170 = vadd.f32 %v1169, 1.0
    %v1171 = vrcp.pop %v1170
    %v1172 = vmul.f32 1.0, %v1171
    %1173 = vrot.lane.b32.xlu0 %v1045, 1
    %v1174 = vpop.permute.xlu0 %1173
    %1175 = vrot.lane.b32.xlu0 %v1045, 127
    %v1176 = vpop.permute.xlu0 %1175
    %v1177 = vsel %vm73, 1.0, %v1174
    %v1178 = vmul.f32 %v1045, -1.0
    %v1179 = vadd.f32 %v1178, %v1177
    %v1180 = vadd.f32 %v1178, %v1176
    %v1181 = vsel %vm74, 0.0, %v1180
    %v1182 = vmul.f32 %v1172, %v318
    %v1183 = vadd.f32 %v1179, %v1181
    %v1184 = vmul.f32 %v1182, %v1183
    %v1185 = vstv %s761
    %v1186 = vmul.f32 %v1185, %v1184
    %v1187 = vadd.f32 %v757, %v1186
    %v1189 = vlaneseq
    %v1190 = vshrl.u32 %v1189, 7
    %v1191 = vsub.s32 0, %v1190
    %v1192 = vrot.slane %v1187, %v1191
    %v1194 = vmul.f32 %v83, %v1192
    %v1195 = vmul.f32 %v88, %v1192
    %v1196 = vmul.f32 %v93, %v1192
    %v1197 = vmul.f32 %v98, %v1192
    %v1198 = vadd.f32 %v1194, %v113
    %v1199 = vadd.f32 %v1195, %v118
    %v1200 = vadd.f32 %v1196, %v123
    %v1201 = vadd.f32 %v1197, %v128
    %v1202 = vtanh.pop %v1198
    %v1203 = vtanh.pop %v1199
    %v1204 = vtanh.pop %v1200
    %v1205 = vtanh.pop %v1201
    %1206 = vmatprep.subr.mxu0 0.0
    %1207 = vmatpush1.msra.mxu0 %v1202
    %1208 = vmatprep.subr.mxu0 0.0
    %1209 = vmatpush1.msra.mxu0 %v1203
    %1210 = vmatprep.subr.mxu0 0.0
    %1211 = vmatpush1.msra.mxu0 %v1204
    %1212 = vmatprep.subr.mxu0 0.0
    %1213 = vmatpush1.msra.mxu0 %v1205
    %1214 = vmatprep.subr.mxu0 0.0
    %1215 = vmatpush1.msra.mxu0 0.0
    %1216 = vmatprep.subr.mxu0 0.0
    %1217 = vmatpush1.msra.mxu0 0.0
    %1218 = vmatprep.subr.mxu0 0.0
    %1219 = vmatpush1.msra.mxu0 0.0
    %1220 = vmatprep.subr.mxu0 0.0
    %1221 = vmatpush1.msra.mxu0 0.0
    %1222 = vmatprep.subr.mxu0 0.0
    %1223 = vmatpush1.msra.mxu0 0.0
    %1224 = vmatprep.subr.mxu0 0.0
    %1225 = vmatpush1.msra.mxu0 0.0
    %1226 = vmatprep.subr.mxu0 0.0
    %1227 = vmatpush1.msra.mxu0 0.0
    %1228 = vmatprep.subr.mxu0 0.0
    %1229 = vmatpush1.msra.mxu0 0.0
    %1230 = vmatprep.subr.mxu0 0.0
    %1231 = vmatpush1.msra.mxu0 0.0
    %1232 = vmatprep.subr.mxu0 0.0
    %1233 = vmatpush1.msra.mxu0 0.0
    %1234 = vmatprep.subr.mxu0 0.0
    %1235 = vmatpush1.msra.mxu0 0.0
    %1236 = vmatprep.subr.mxu0 0.0
    %1237 = vmatpush1.msra.mxu0 0.0
    %1238 = vmatprep.subr.mxu0 0.0
    %1239 = vmatpush1.msra.mxu0 0.0
    %1240 = vmatprep.subr.mxu0 0.0
    %1241 = vmatpush1.msra.mxu0 0.0
    %1242 = vmatprep.subr.mxu0 0.0
    %1243 = vmatpush1.msra.mxu0 0.0
    %1244 = vmatprep.subr.mxu0 0.0
    %1245 = vmatpush1.msra.mxu0 0.0
    %1246 = vmatprep.subr.mxu0 0.0
    %1247 = vmatpush1.msra.mxu0 0.0
    %1248 = vmatprep.subr.mxu0 0.0
    %1249 = vmatpush1.msra.mxu0 0.0
    %1250 = vmatprep.subr.mxu0 0.0
    %1251 = vmatpush1.msra.mxu0 0.0
    %1252 = vmatprep.subr.mxu0 0.0
    %1253 = vmatpush1.msra.mxu0 0.0
    %1254 = vmatprep.subr.mxu0 0.0
    %1255 = vmatpush1.msra.mxu0 0.0
    %1256 = vmatprep.subr.mxu0 0.0
    %1257 = vmatpush1.msra.mxu0 0.0
    %1258 = vmatprep.subr.mxu0 0.0
    %1259 = vmatpush1.msra.mxu0 0.0
    %1260 = vmatprep.subr.mxu0 0.0
    %1261 = vmatpush1.msra.mxu0 0.0
    %1262 = vmatprep.subr.mxu0 0.0
    %1263 = vmatpush1.msra.mxu0 0.0
    %1264 = vmatprep.subr.mxu0 0.0
    %1265 = vmatpush1.msra.mxu0 0.0
    %1266 = vmatprep.subr.mxu0 0.0
    %1267 = vmatpush1.msra.mxu0 0.0
    %1268 = vmatprep.subr.mxu0 0.0
    %1269 = vmatpush1.msra.mxu0 0.0
    %1270 = vmatprep.mubr.f32.mxu0 0.0
    %1271 = vmatmul.mubr.f32.gmra.mrb[0].mxu0 %v160
    %v1272 = vpop.f32.mrb[0].mxu0
    %v1273 = vadd.f32 %v141, %v1272
    %v1274 = vpop.f32.mrb[0].mxu0
    %1275 = vmatprep.mubr.f32.mxu0 0.0
    %1276 = vmatmul.mubr.f32.gmra.mrb[0].mxu0 %v163
    %v1277 = vpop.f32.mrb[0].mxu0
    %v1278 = vadd.f32 %v146, %v1277
    %v1279 = vpop.f32.mrb[0].mxu0
    %1280 = vmatprep.mubr.f32.mxu0 0.0
    %1281 = vmatmul.mubr.f32.gmra.mrb[0].mxu0 %v166
    %v1282 = vpop.f32.mrb[0].mxu0
    %v1283 = vadd.f32 %v151, %v1282
    %v1284 = vpop.f32.mrb[0].mxu0
    %1285 = vmatprep.mubr.f32.mxu0 0.0
    %1286 = vmatmul.mubr.f32.gmra.mrb[0].mxu0 %v169
    %v1287 = vpop.f32.mrb[0].mxu0
    %v1288 = vadd.f32 %v156, %v1287
    %v1289 = vpop.f32.mrb[0].mxu0
    %1290 = vdwg.mxu0
    %v1291 = vtanh.pop %v1273
    %v1292 = vtanh.pop %v1278
    %v1293 = vtanh.pop %v1283
    %v1294 = vtanh.pop %v1288
    %v1295 = vmul.f32 %v263, %v1291
    %v1296 = vmul.f32 %v268, %v1292
    %v1297 = vmul.f32 %v273, %v1293
    %v1298 = vmul.f32 %v278, %v1294
    %v1299 = vadd.f32 %v1295, %v1296
    %v1300 = vadd.f32 %v1299, %v1297
    %v1301 = vadd.f32 %v1300, %v1298
    %v1302 = vrot.slane %v1301, 4
    %v1303 = vadd.f32 %v1301, %v1302
    %v1304 = vrot.slane %v1303, 2
    %v1305 = vadd.f32 %v1303, %v1304
    %v1306 = vrot.slane %v1305, 1
    %v1307 = vadd.f32 %v1305, %v1306
    %v1308 = vadd.f32 %v1307, %v301
    %v1309 = vxor.u32 %v1308, 2147483648
    %v1310 = vmul.f32 %v1309, 1.442695
    %v1311 = vpow.pop %v1310
    %v1312 = vadd.f32 %v1311, 1.0
    %v1313 = vrcp.pop %v1312
    %v1314 = vmul.f32 1.0, %v1313
    %1315 = vrot.lane.b32.xlu0 %v1187, 1
    %v1316 = vpop.permute.xlu0 %1315
    %1317 = vrot.lane.b32.xlu0 %v1187, 127
    %v1318 = vpop.permute.xlu0 %1317
    %v1319 = vsel %vm73, 1.0, %v1316
    %v1320 = vmul.f32 %v1187, -1.0
    %v1321 = vadd.f32 %v1320, %v1319
    %v1322 = vadd.f32 %v1320, %v1318
    %v1323 = vsel %vm74, 0.0, %v1322
    %v1324 = vmul.f32 %v1314, %v318
    %v1325 = vadd.f32 %v1321, %v1323
    %v1326 = vmul.f32 %v1324, %v1325
    %v1327 = vrcp.pop 6.0
    %s1328 = vtos %v1327
    %s1329 = smul.f32 %s761, %s1328
    %v1330 = vadd.f32 %v1043, %v1184
    %v1331 = vmul.f32 %v1330, 2.0
    %v1332 = vadd.f32 %v900, %v1331
    %v1333 = vadd.f32 %v1332, %v1326
    %v1334 = vstv %s1329
    %v1335 = vmul.f32 %v1334, %v1333
    %v1336 = vadd.f32 %v757, %v1335
    %1337 = vst [vmem:[#allocation7 + $0x2] sm:$0x1] %v1336
    %s1338 = sld [smem:[#allocation4 + $0x2]]
    %s1339 = sld [smem:[#allocation4 + $0x3]]
    %s1340 = ssub.f32 %s1339, %s1338
    %v1342 = vlaneseq
    %v1343 = vshrl.u32 %v1342, 7
    %v1344 = vsub.s32 0, %v1343
    %v1345 = vrot.slane %v1336, %v1344
    %v1347 = vmul.f32 %v83, %v1345
    %v1348 = vmul.f32 %v88, %v1345
    %v1349 = vmul.f32 %v93, %v1345
    %v1350 = vmul.f32 %v98, %v1345
    %v1351 = vadd.f32 %v1347, %v113
    %v1352 = vadd.f32 %v1348, %v118
    %v1353 = vadd.f32 %v1349, %v123
    %v1354 = vadd.f32 %v1350, %v128
    %v1355 = vtanh.pop %v1351
    %v1356 = vtanh.pop %v1352
    %v1357 = vtanh.pop %v1353
    %v1358 = vtanh.pop %v1354
    %1359 = vmatprep.subr.mxu0 0.0
    %1360 = vmatpush1.msra.mxu0 %v1355
    %1361 = vmatprep.subr.mxu0 0.0
    %1362 = vmatpush1.msra.mxu0 %v1356
    %1363 = vmatprep.subr.mxu0 0.0
    %1364 = vmatpush1.msra.mxu0 %v1357
    %1365 = vmatprep.subr.mxu0 0.0
    %1366 = vmatpush1.msra.mxu0 %v1358
    %1367 = vmatprep.subr.mxu0 0.0
    %1368 = vmatpush1.msra.mxu0 0.0
    %1369 = vmatprep.subr.mxu0 0.0
    %1370 = vmatpush1.msra.mxu0 0.0
    %1371 = vmatprep.subr.mxu0 0.0
    %1372 = vmatpush1.msra.mxu0 0.0
    %1373 = vmatprep.subr.mxu0 0.0
    %1374 = vmatpush1.msra.mxu0 0.0
    %1375 = vmatprep.subr.mxu0 0.0
    %1376 = vmatpush1.msra.mxu0 0.0
    %1377 = vmatprep.subr.mxu0 0.0
    %1378 = vmatpush1.msra.mxu0 0.0
    %1379 = vmatprep.subr.mxu0 0.0
    %1380 = vmatpush1.msra.mxu0 0.0
    %1381 = vmatprep.subr.mxu0 0.0
    %1382 = vmatpush1.msra.mxu0 0.0
    %1383 = vmatprep.subr.mxu0 0.0
    %1384 = vmatpush1.msra.mxu0 0.0
    %1385 = vmatprep.subr.mxu0 0.0
    %1386 = vmatpush1.msra.mxu0 0.0
    %1387 = vmatprep.subr.mxu0 0.0
    %1388 = vmatpush1.msra.mxu0 0.0
    %1389 = vmatprep.subr.mxu0 0.0
    %1390 = vmatpush1.msra.mxu0 0.0
    %1391 = vmatprep.subr.mxu0 0.0
    %1392 = vmatpush1.msra.mxu0 0.0
    %1393 = vmatprep.subr.mxu0 0.0
    %1394 = vmatpush1.msra.mxu0 0.0
    %1395 = vmatprep.subr.mxu0 0.0
    %1396 = vmatpush1.msra.mxu0 0.0
    %1397 = vmatprep.subr.mxu0 0.0
    %1398 = vmatpush1.msra.mxu0 0.0
    %1399 = vmatprep.subr.mxu0 0.0
    %1400 = vmatpush1.msra.mxu0 0.0
    %1401 = vmatprep.subr.mxu0 0.0
    %1402 = vmatpush1.msra.mxu0 0.0
    %1403 = vmatprep.subr.mxu0 0.0
    %1404 = vmatpush1.msra.mxu0 0.0
    %1405 = vmatprep.subr.mxu0 0.0
    %1406 = vmatpush1.msra.mxu0 0.0
    %1407 = vmatprep.subr.mxu0 0.0
    %1408 = vmatpush1.msra.mxu0 0.0
    %1409 = vmatprep.subr.mxu0 0.0
    %1410 = vmatpush1.msra.mxu0 0.0
    %1411 = vmatprep.subr.mxu0 0.0
    %1412 = vmatpush1.msra.mxu0 0.0
    %1413 = vmatprep.subr.mxu0 0.0
    %1414 = vmatpush1.msra.mxu0 0.0
    %1415 = vmatprep.subr.mxu0 0.0
    %1416 = vmatpush1.msra.mxu0 0.0
    %1417 = vmatprep.subr.mxu0 0.0
    %1418 = vmatpush1.msra.mxu0 0.0
    %1419 = vmatprep.subr.mxu0 0.0
    %1420 = vmatpush1.msra.mxu0 0.0
    %1421 = vmatprep.subr.mxu0 0.0
    %1422 = vmatpush1.msra.mxu0 0.0
    %1423 = vmatprep.mubr.f32.mxu0 0.0
    %1424 = vmatmul.mubr.f32.gmra.mrb[0].mxu0 %v160
    %v1425 = vpop.f32.mrb[0].mxu0
    %v1426 = vadd.f32 %v141, %v1425
    %v1427 = vpop.f32.mrb[0].mxu0
    %1428 = vmatprep.mubr.f32.mxu0 0.0
    %1429 = vmatmul.mubr.f32.gmra.mrb[0].mxu0 %v163
    %v1430 = vpop.f32.mrb[0].mxu0
    %v1431 = vadd.f32 %v146, %v1430
    %v1432 = vpop.f32.mrb[0].mxu0
    %1433 = vmatprep.mubr.f32.mxu0 0.0
    %1434 = vmatmul.mubr.f32.gmra.mrb[0].mxu0 %v166
    %v1435 = vpop.f32.mrb[0].mxu0
    %v1436 = vadd.f32 %v151, %v1435
    %v1437 = vpop.f32.mrb[0].mxu0
    %1438 = vmatprep.mubr.f32.mxu0 0.0
    %1439 = vmatmul.mubr.f32.gmra.mrb[0].mxu0 %v169
    %v1440 = vpop.f32.mrb[0].mxu0
    %v1441 = vadd.f32 %v156, %v1440
    %v1442 = vpop.f32.mrb[0].mxu0
    %1443 = vdwg.mxu0
    %v1444 = vtanh.pop %v1426
    %v1445 = vtanh.pop %v1431
    %v1446 = vtanh.pop %v1436
    %v1447 = vtanh.pop %v1441
    %v1448 = vmul.f32 %v263, %v1444
    %v1449 = vmul.f32 %v268, %v1445
    %v1450 = vmul.f32 %v273, %v1446
    %v1451 = vmul.f32 %v278, %v1447
    %v1452 = vadd.f32 %v1448, %v1449
    %v1453 = vadd.f32 %v1452, %v1450
    %v1454 = vadd.f32 %v1453, %v1451
    %v1455 = vrot.slane %v1454, 4
    %v1456 = vadd.f32 %v1454, %v1455
    %v1457 = vrot.slane %v1456, 2
    %v1458 = vadd.f32 %v1456, %v1457
    %v1459 = vrot.slane %v1458, 1
    %v1460 = vadd.f32 %v1458, %v1459
    %v1461 = vadd.f32 %v1460, %v301
    %v1462 = vxor.u32 %v1461, 2147483648
    %v1463 = vmul.f32 %v1462, 1.442695
    %v1464 = vpow.pop %v1463
    %v1465 = vadd.f32 %v1464, 1.0
    %v1466 = vrcp.pop %v1465
    %v1467 = vmul.f32 1.0, %v1466
    %1468 = vrot.lane.b32.xlu0 %v1336, 1
    %v1469 = vpop.permute.xlu0 %1468
    %1470 = vrot.lane.b32.xlu0 %v1336, 127
    %v1471 = vpop.permute.xlu0 %1470
    %v1472 = vsel %vm73, 1.0, %v1469
    %v1473 = vmul.f32 %v1336, -1.0
    %v1474 = vadd.f32 %v1473, %v1472
    %v1475 = vadd.f32 %v1473, %v1471
    %v1476 = vsel %vm74, 0.0, %v1475
    %v1477 = vmul.f32 %v1467, %v318
    %v1478 = vadd.f32 %v1474, %v1476
    %v1479 = vmul.f32 %v1477, %v1478
    %s1480 = smul.f32 %s1340, 0.5
    %v1481 = vstv %s1480
    %v1482 = vmul.f32 %v1481, %v1479
    %v1483 = vadd.f32 %v1336, %v1482
    %v1485 = vlaneseq
    %v1486 = vshrl.u32 %v1485, 7
    %v1487 = vsub.s32 0, %v1486
    %v1488 = vrot.slane %v1483, %v1487
    %v1490 = vmul.f32 %v83, %v1488
    %v1491 = vmul.f32 %v88, %v1488
    %v1492 = vmul.f32 %v93, %v1488
    %v1493 = vmul.f32 %v98, %v1488
    %v1494 = vadd.f32 %v1490, %v113
    %v1495 = vadd.f32 %v1491, %v118
    %v1496 = vadd.f32 %v1492, %v123
    %v1497 = vadd.f32 %v1493, %v128
    %v1498 = vtanh.pop %v1494
    %v1499 = vtanh.pop %v1495
    %v1500 = vtanh.pop %v1496
    %v1501 = vtanh.pop %v1497
    %1502 = vmatprep.subr.mxu0 0.0
    %1503 = vmatpush1.msra.mxu0 %v1498
    %1504 = vmatprep.subr.mxu0 0.0
    %1505 = vmatpush1.msra.mxu0 %v1499
    %1506 = vmatprep.subr.mxu0 0.0
    %1507 = vmatpush1.msra.mxu0 %v1500
    %1508 = vmatprep.subr.mxu0 0.0
    %1509 = vmatpush1.msra.mxu0 %v1501
    %1510 = vmatprep.subr.mxu0 0.0
    %1511 = vmatpush1.msra.mxu0 0.0
    %1512 = vmatprep.subr.mxu0 0.0
    %1513 = vmatpush1.msra.mxu0 0.0
    %1514 = vmatprep.subr.mxu0 0.0
    %1515 = vmatpush1.msra.mxu0 0.0
    %1516 = vmatprep.subr.mxu0 0.0
    %1517 = vmatpush1.msra.mxu0 0.0
    %1518 = vmatprep.subr.mxu0 0.0
    %1519 = vmatpush1.msra.mxu0 0.0
    %1520 = vmatprep.subr.mxu0 0.0
    %1521 = vmatpush1.msra.mxu0 0.0
    %1522 = vmatprep.subr.mxu0 0.0
    %1523 = vmatpush1.msra.mxu0 0.0
    %1524 = vmatprep.subr.mxu0 0.0
    %1525 = vmatpush1.msra.mxu0 0.0
    %1526 = vmatprep.subr.mxu0 0.0
    %1527 = vmatpush1.msra.mxu0 0.0
    %1528 = vmatprep.subr.mxu0 0.0
    %1529 = vmatpush1.msra.mxu0 0.0
    %1530 = vmatprep.subr.mxu0 0.0
    %1531 = vmatpush1.msra.mxu0 0.0
    %1532 = vmatprep.subr.mxu0 0.0
    %1533 = vmatpush1.msra.mxu0 0.0
    %1534 = vmatprep.subr.mxu0 0.0
    %1535 = vmatpush1.msra.mxu0 0.0
    %1536 = vmatprep.subr.mxu0 0.0
    %1537 = vmatpush1.msra.mxu0 0.0
    %1538 = vmatprep.subr.mxu0 0.0
    %1539 = vmatpush1.msra.mxu0 0.0
    %1540 = vmatprep.subr.mxu0 0.0
    %1541 = vmatpush1.msra.mxu0 0.0
    %1542 = vmatprep.subr.mxu0 0.0
    %1543 = vmatpush1.msra.mxu0 0.0
    %1544 = vmatprep.subr.mxu0 0.0
    %1545 = vmatpush1.msra.mxu0 0.0
    %1546 = vmatprep.subr.mxu0 0.0
    %1547 = vmatpush1.msra.mxu0 0.0
    %1548 = vmatprep.subr.mxu0 0.0
    %1549 = vmatpush1.msra.mxu0 0.0
    %1550 = vmatprep.subr.mxu0 0.0
    %1551 = vmatpush1.msra.mxu0 0.0
    %1552 = vmatprep.subr.mxu0 0.0
    %1553 = vmatpush1.msra.mxu0 0.0
    %1554 = vmatprep.subr.mxu0 0.0
    %1555 = vmatpush1.msra.mxu0 0.0
    %1556 = vmatprep.subr.mxu0 0.0
    %1557 = vmatpush1.msra.mxu0 0.0
    %1558 = vmatprep.subr.mxu0 0.0
    %1559 = vmatpush1.msra.mxu0 0.0
    %1560 = vmatprep.subr.mxu0 0.0
    %1561 = vmatpush1.msra.mxu0 0.0
    %1562 = vmatprep.subr.mxu0 0.0
    %1563 = vmatpush1.msra.mxu0 0.0
    %1564 = vmatprep.subr.mxu0 0.0
    %1565 = vmatpush1.msra.mxu0 0.0
    %1566 = vmatprep.mubr.f32.mxu0 0.0
    %1567 = vmatmul.mubr.f32.gmra.mrb[0].mxu0 %v160
    %v1568 = vpop.f32.mrb[0].mxu0
    %v1569 = vadd.f32 %v141, %v1568
    %v1570 = vpop.f32.mrb[0].mxu0
    %1571 = vmatprep.mubr.f32.mxu0 0.0
    %1572 = vmatmul.mubr.f32.gmra.mrb[0].mxu0 %v163
    %v1573 = vpop.f32.mrb[0].mxu0
    %v1574 = vadd.f32 %v146, %v1573
    %v1575 = vpop.f32.mrb[0].mxu0
    %1576 = vmatprep.mubr.f32.mxu0 0.0
    %1577 = vmatmul.mubr.f32.gmra.mrb[0].mxu0 %v166
    %v1578 = vpop.f32.mrb[0].mxu0
    %v1579 = vadd.f32 %v151, %v1578
    %v1580 = vpop.f32.mrb[0].mxu0
    %1581 = vmatprep.mubr.f32.mxu0 0.0
    %1582 = vmatmul.mubr.f32.gmra.mrb[0].mxu0 %v169
    %v1583 = vpop.f32.mrb[0].mxu0
    %v1584 = vadd.f32 %v156, %v1583
    %v1585 = vpop.f32.mrb[0].mxu0
    %1586 = vdwg.mxu0
    %v1587 = vtanh.pop %v1569
    %v1588 = vtanh.pop %v1574
    %v1589 = vtanh.pop %v1579
    %v1590 = vtanh.pop %v1584
    %v1591 = vmul.f32 %v263, %v1587
    %v1592 = vmul.f32 %v268, %v1588
    %v1593 = vmul.f32 %v273, %v1589
    %v1594 = vmul.f32 %v278, %v1590
    %v1595 = vadd.f32 %v1591, %v1592
    %v1596 = vadd.f32 %v1595, %v1593
    %v1597 = vadd.f32 %v1596, %v1594
    %v1598 = vrot.slane %v1597, 4
    %v1599 = vadd.f32 %v1597, %v1598
    %v1600 = vrot.slane %v1599, 2
    %v1601 = vadd.f32 %v1599, %v1600
    %v1602 = vrot.slane %v1601, 1
    %v1603 = vadd.f32 %v1601, %v1602
    %v1604 = vadd.f32 %v1603, %v301
    %v1605 = vxor.u32 %v1604, 2147483648
    %v1606 = vmul.f32 %v1605, 1.442695
    %v1607 = vpow.pop %v1606
    %v1608 = vadd.f32 %v1607, 1.0
    %v1609 = vrcp.pop %v1608
    %v1610 = vmul.f32 1.0, %v1609
    %1611 = vrot.lane.b32.xlu0 %v1483, 1
    %v1612 = vpop.permute.xlu0 %1611
    %1613 = vrot.lane.b32.xlu0 %v1483, 127
    %v1614 = vpop.permute.xlu0 %1613
    %v1615 = vsel %vm73, 1.0, %v1612
    %v1616 = vmul.f32 %v1483, -1.0
    %v1617 = vadd.f32 %v1616, %v1615
    %v1618 = vadd.f32 %v1616, %v1614
    %v1619 = vsel %vm74, 0.0, %v1618
    %v1620 = vmul.f32 %v1610, %v318
    %v1621 = vadd.f32 %v1617, %v1619
    %v1622 = vmul.f32 %v1620, %v1621
    %v1623 = vmul.f32 %v1481, %v1622
    %v1624 = vadd.f32 %v1336, %v1623
    %v1626 = vlaneseq
    %v1627 = vshrl.u32 %v1626, 7
    %v1628 = vsub.s32 0, %v1627
    %v1629 = vrot.slane %v1624, %v1628
    %v1631 = vmul.f32 %v83, %v1629
    %v1632 = vmul.f32 %v88, %v1629
    %v1633 = vmul.f32 %v93, %v1629
    %v1634 = vmul.f32 %v98, %v1629
    %v1635 = vadd.f32 %v1631, %v113
    %v1636 = vadd.f32 %v1632, %v118
    %v1637 = vadd.f32 %v1633, %v123
    %v1638 = vadd.f32 %v1634, %v128
    %v1639 = vtanh.pop %v1635
    %v1640 = vtanh.pop %v1636
    %v1641 = vtanh.pop %v1637
    %v1642 = vtanh.pop %v1638
    %1643 = vmatprep.subr.mxu0 0.0
    %1644 = vmatpush1.msra.mxu0 %v1639
    %1645 = vmatprep.subr.mxu0 0.0
    %1646 = vmatpush1.msra.mxu0 %v1640
    %1647 = vmatprep.subr.mxu0 0.0
    %1648 = vmatpush1.msra.mxu0 %v1641
    %1649 = vmatprep.subr.mxu0 0.0
    %1650 = vmatpush1.msra.mxu0 %v1642
    %1651 = vmatprep.subr.mxu0 0.0
    %1652 = vmatpush1.msra.mxu0 0.0
    %1653 = vmatprep.subr.mxu0 0.0
    %1654 = vmatpush1.msra.mxu0 0.0
    %1655 = vmatprep.subr.mxu0 0.0
    %1656 = vmatpush1.msra.mxu0 0.0
    %1657 = vmatprep.subr.mxu0 0.0
    %1658 = vmatpush1.msra.mxu0 0.0
    %1659 = vmatprep.subr.mxu0 0.0
    %1660 = vmatpush1.msra.mxu0 0.0
    %1661 = vmatprep.subr.mxu0 0.0
    %1662 = vmatpush1.msra.mxu0 0.0
    %1663 = vmatprep.subr.mxu0 0.0
    %1664 = vmatpush1.msra.mxu0 0.0
    %1665 = vmatprep.subr.mxu0 0.0
    %1666 = vmatpush1.msra.mxu0 0.0
    %1667 = vmatprep.subr.mxu0 0.0
    %1668 = vmatpush1.msra.mxu0 0.0
    %1669 = vmatprep.subr.mxu0 0.0
    %1670 = vmatpush1.msra.mxu0 0.0
    %1671 = vmatprep.subr.mxu0 0.0
    %1672 = vmatpush1.msra.mxu0 0.0
    %1673 = vmatprep.subr.mxu0 0.0
    %1674 = vmatpush1.msra.mxu0 0.0
    %1675 = vmatprep.subr.mxu0 0.0
    %1676 = vmatpush1.msra.mxu0 0.0
    %1677 = vmatprep.subr.mxu0 0.0
    %1678 = vmatpush1.msra.mxu0 0.0
    %1679 = vmatprep.subr.mxu0 0.0
    %1680 = vmatpush1.msra.mxu0 0.0
    %1681 = vmatprep.subr.mxu0 0.0
    %1682 = vmatpush1.msra.mxu0 0.0
    %1683 = vmatprep.subr.mxu0 0.0
    %1684 = vmatpush1.msra.mxu0 0.0
    %1685 = vmatprep.subr.mxu0 0.0
    %1686 = vmatpush1.msra.mxu0 0.0
    %1687 = vmatprep.subr.mxu0 0.0
    %1688 = vmatpush1.msra.mxu0 0.0
    %1689 = vmatprep.subr.mxu0 0.0
    %1690 = vmatpush1.msra.mxu0 0.0
    %1691 = vmatprep.subr.mxu0 0.0
    %1692 = vmatpush1.msra.mxu0 0.0
    %1693 = vmatprep.subr.mxu0 0.0
    %1694 = vmatpush1.msra.mxu0 0.0
    %1695 = vmatprep.subr.mxu0 0.0
    %1696 = vmatpush1.msra.mxu0 0.0
    %1697 = vmatprep.subr.mxu0 0.0
    %1698 = vmatpush1.msra.mxu0 0.0
    %1699 = vmatprep.subr.mxu0 0.0
    %1700 = vmatpush1.msra.mxu0 0.0
    %1701 = vmatprep.subr.mxu0 0.0
    %1702 = vmatpush1.msra.mxu0 0.0
    %1703 = vmatprep.subr.mxu0 0.0
    %1704 = vmatpush1.msra.mxu0 0.0
    %1705 = vmatprep.subr.mxu0 0.0
    %1706 = vmatpush1.msra.mxu0 0.0
    %1707 = vmatprep.mubr.f32.mxu0 0.0
    %1708 = vmatmul.mubr.f32.gmra.mrb[0].mxu0 %v160
    %v1709 = vpop.f32.mrb[0].mxu0
    %v1710 = vadd.f32 %v141, %v1709
    %v1711 = vpop.f32.mrb[0].mxu0
    %1712 = vmatprep.mubr.f32.mxu0 0.0
    %1713 = vmatmul.mubr.f32.gmra.mrb[0].mxu0 %v163
    %v1714 = vpop.f32.mrb[0].mxu0
    %v1715 = vadd.f32 %v146, %v1714
    %v1716 = vpop.f32.mrb[0].mxu0
    %1717 = vmatprep.mubr.f32.mxu0 0.0
    %1718 = vmatmul.mubr.f32.gmra.mrb[0].mxu0 %v166
    %v1719 = vpop.f32.mrb[0].mxu0
    %v1720 = vadd.f32 %v151, %v1719
    %v1721 = vpop.f32.mrb[0].mxu0
    %1722 = vmatprep.mubr.f32.mxu0 0.0
    %1723 = vmatmul.mubr.f32.gmra.mrb[0].mxu0 %v169
    %v1724 = vpop.f32.mrb[0].mxu0
    %v1725 = vadd.f32 %v156, %v1724
    %v1726 = vpop.f32.mrb[0].mxu0
    %1727 = vdwg.mxu0
    %v1728 = vtanh.pop %v1710
    %v1729 = vtanh.pop %v1715
    %v1730 = vtanh.pop %v1720
    %v1731 = vtanh.pop %v1725
    %v1732 = vmul.f32 %v263, %v1728
    %v1733 = vmul.f32 %v268, %v1729
    %v1734 = vmul.f32 %v273, %v1730
    %v1735 = vmul.f32 %v278, %v1731
    %v1736 = vadd.f32 %v1732, %v1733
    %v1737 = vadd.f32 %v1736, %v1734
    %v1738 = vadd.f32 %v1737, %v1735
    %v1739 = vrot.slane %v1738, 4
    %v1740 = vadd.f32 %v1738, %v1739
    %v1741 = vrot.slane %v1740, 2
    %v1742 = vadd.f32 %v1740, %v1741
    %v1743 = vrot.slane %v1742, 1
    %v1744 = vadd.f32 %v1742, %v1743
    %v1745 = vadd.f32 %v1744, %v301
    %v1746 = vxor.u32 %v1745, 2147483648
    %v1747 = vmul.f32 %v1746, 1.442695
    %v1748 = vpow.pop %v1747
    %v1749 = vadd.f32 %v1748, 1.0
    %v1750 = vrcp.pop %v1749
    %v1751 = vmul.f32 1.0, %v1750
    %1752 = vrot.lane.b32.xlu0 %v1624, 1
    %v1753 = vpop.permute.xlu0 %1752
    %1754 = vrot.lane.b32.xlu0 %v1624, 127
    %v1755 = vpop.permute.xlu0 %1754
    %v1756 = vsel %vm73, 1.0, %v1753
    %v1757 = vmul.f32 %v1624, -1.0
    %v1758 = vadd.f32 %v1757, %v1756
    %v1759 = vadd.f32 %v1757, %v1755
    %v1760 = vsel %vm74, 0.0, %v1759
    %v1761 = vmul.f32 %v1751, %v318
    %v1762 = vadd.f32 %v1758, %v1760
    %v1763 = vmul.f32 %v1761, %v1762
    %v1764 = vstv %s1340
    %v1765 = vmul.f32 %v1764, %v1763
    %v1766 = vadd.f32 %v1336, %v1765
    %v1768 = vlaneseq
    %v1769 = vshrl.u32 %v1768, 7
    %v1770 = vsub.s32 0, %v1769
    %v1771 = vrot.slane %v1766, %v1770
    %v1773 = vmul.f32 %v83, %v1771
    %v1774 = vmul.f32 %v88, %v1771
    %v1775 = vmul.f32 %v93, %v1771
    %v1776 = vmul.f32 %v98, %v1771
    %v1777 = vadd.f32 %v1773, %v113
    %v1778 = vadd.f32 %v1774, %v118
    %v1779 = vadd.f32 %v1775, %v123
    %v1780 = vadd.f32 %v1776, %v128
    %v1781 = vtanh.pop %v1777
    %v1782 = vtanh.pop %v1778
    %v1783 = vtanh.pop %v1779
    %v1784 = vtanh.pop %v1780
    %1785 = vmatprep.subr.mxu0 0.0
    %1786 = vmatpush1.msra.mxu0 %v1781
    %1787 = vmatprep.subr.mxu0 0.0
    %1788 = vmatpush1.msra.mxu0 %v1782
    %1789 = vmatprep.subr.mxu0 0.0
    %1790 = vmatpush1.msra.mxu0 %v1783
    %1791 = vmatprep.subr.mxu0 0.0
    %1792 = vmatpush1.msra.mxu0 %v1784
    %1793 = vmatprep.subr.mxu0 0.0
    %1794 = vmatpush1.msra.mxu0 0.0
    %1795 = vmatprep.subr.mxu0 0.0
    %1796 = vmatpush1.msra.mxu0 0.0
    %1797 = vmatprep.subr.mxu0 0.0
    %1798 = vmatpush1.msra.mxu0 0.0
    %1799 = vmatprep.subr.mxu0 0.0
    %1800 = vmatpush1.msra.mxu0 0.0
    %1801 = vmatprep.subr.mxu0 0.0
    %1802 = vmatpush1.msra.mxu0 0.0
    %1803 = vmatprep.subr.mxu0 0.0
    %1804 = vmatpush1.msra.mxu0 0.0
    %1805 = vmatprep.subr.mxu0 0.0
    %1806 = vmatpush1.msra.mxu0 0.0
    %1807 = vmatprep.subr.mxu0 0.0
    %1808 = vmatpush1.msra.mxu0 0.0
    %1809 = vmatprep.subr.mxu0 0.0
    %1810 = vmatpush1.msra.mxu0 0.0
    %1811 = vmatprep.subr.mxu0 0.0
    %1812 = vmatpush1.msra.mxu0 0.0
    %1813 = vmatprep.subr.mxu0 0.0
    %1814 = vmatpush1.msra.mxu0 0.0
    %1815 = vmatprep.subr.mxu0 0.0
    %1816 = vmatpush1.msra.mxu0 0.0
    %1817 = vmatprep.subr.mxu0 0.0
    %1818 = vmatpush1.msra.mxu0 0.0
    %1819 = vmatprep.subr.mxu0 0.0
    %1820 = vmatpush1.msra.mxu0 0.0
    %1821 = vmatprep.subr.mxu0 0.0
    %1822 = vmatpush1.msra.mxu0 0.0
    %1823 = vmatprep.subr.mxu0 0.0
    %1824 = vmatpush1.msra.mxu0 0.0
    %1825 = vmatprep.subr.mxu0 0.0
    %1826 = vmatpush1.msra.mxu0 0.0
    %1827 = vmatprep.subr.mxu0 0.0
    %1828 = vmatpush1.msra.mxu0 0.0
    %1829 = vmatprep.subr.mxu0 0.0
    %1830 = vmatpush1.msra.mxu0 0.0
    %1831 = vmatprep.subr.mxu0 0.0
    %1832 = vmatpush1.msra.mxu0 0.0
    %1833 = vmatprep.subr.mxu0 0.0
    %1834 = vmatpush1.msra.mxu0 0.0
    %1835 = vmatprep.subr.mxu0 0.0
    %1836 = vmatpush1.msra.mxu0 0.0
    %1837 = vmatprep.subr.mxu0 0.0
    %1838 = vmatpush1.msra.mxu0 0.0
    %1839 = vmatprep.subr.mxu0 0.0
    %1840 = vmatpush1.msra.mxu0 0.0
    %1841 = vmatprep.subr.mxu0 0.0
    %1842 = vmatpush1.msra.mxu0 0.0
    %1843 = vmatprep.subr.mxu0 0.0
    %1844 = vmatpush1.msra.mxu0 0.0
    %1845 = vmatprep.subr.mxu0 0.0
    %1846 = vmatpush1.msra.mxu0 0.0
    %1847 = vmatprep.subr.mxu0 0.0
    %1848 = vmatpush1.msra.mxu0 0.0
    %1849 = vmatprep.mubr.f32.mxu0 0.0
    %1850 = vmatmul.mubr.f32.gmra.mrb[0].mxu0 %v160
    %v1851 = vpop.f32.mrb[0].mxu0
    %v1852 = vadd.f32 %v141, %v1851
    %v1853 = vpop.f32.mrb[0].mxu0
    %1854 = vmatprep.mubr.f32.mxu0 0.0
    %1855 = vmatmul.mubr.f32.gmra.mrb[0].mxu0 %v163
    %v1856 = vpop.f32.mrb[0].mxu0
    %v1857 = vadd.f32 %v146, %v1856
    %v1858 = vpop.f32.mrb[0].mxu0
    %1859 = vmatprep.mubr.f32.mxu0 0.0
    %1860 = vmatmul.mubr.f32.gmra.mrb[0].mxu0 %v166
    %v1861 = vpop.f32.mrb[0].mxu0
    %v1862 = vadd.f32 %v151, %v1861
    %v1863 = vpop.f32.mrb[0].mxu0
    %1864 = vmatprep.mubr.f32.mxu0 0.0
    %1865 = vmatmul.mubr.f32.gmra.mrb[0].mxu0 %v169
    %v1866 = vpop.f32.mrb[0].mxu0
    %v1867 = vadd.f32 %v156, %v1866
    %v1868 = vpop.f32.mrb[0].mxu0
    %1869 = vdwg.mxu0
    %v1870 = vtanh.pop %v1852
    %v1871 = vtanh.pop %v1857
    %v1872 = vtanh.pop %v1862
    %v1873 = vtanh.pop %v1867
    %v1874 = vmul.f32 %v263, %v1870
    %v1875 = vmul.f32 %v268, %v1871
    %v1876 = vmul.f32 %v273, %v1872
    %v1877 = vmul.f32 %v278, %v1873
    %v1878 = vadd.f32 %v1874, %v1875
    %v1879 = vadd.f32 %v1878, %v1876
    %v1880 = vadd.f32 %v1879, %v1877
    %v1881 = vrot.slane %v1880, 4
    %v1882 = vadd.f32 %v1880, %v1881
    %v1883 = vrot.slane %v1882, 2
    %v1884 = vadd.f32 %v1882, %v1883
    %v1885 = vrot.slane %v1884, 1
    %v1886 = vadd.f32 %v1884, %v1885
    %v1887 = vadd.f32 %v1886, %v301
    %v1888 = vxor.u32 %v1887, 2147483648
    %v1889 = vmul.f32 %v1888, 1.442695
    %v1890 = vpow.pop %v1889
    %v1891 = vadd.f32 %v1890, 1.0
    %v1892 = vrcp.pop %v1891
    %v1893 = vmul.f32 1.0, %v1892
    %1894 = vrot.lane.b32.xlu0 %v1766, 1
    %v1895 = vpop.permute.xlu0 %1894
    %1896 = vrot.lane.b32.xlu0 %v1766, 127
    %v1897 = vpop.permute.xlu0 %1896
    %v1898 = vsel %vm73, 1.0, %v1895
    %v1899 = vmul.f32 %v1766, -1.0
    %v1900 = vadd.f32 %v1899, %v1898
    %v1901 = vadd.f32 %v1899, %v1897
    %v1902 = vsel %vm74, 0.0, %v1901
    %v1903 = vmul.f32 %v1893, %v318
    %v1904 = vadd.f32 %v1900, %v1902
    %v1905 = vmul.f32 %v1903, %v1904
    %v1906 = vrcp.pop 6.0
    %s1907 = vtos %v1906
    %s1908 = smul.f32 %s1340, %s1907
    %v1909 = vadd.f32 %v1622, %v1763
    %v1910 = vmul.f32 %v1909, 2.0
    %v1911 = vadd.f32 %v1479, %v1910
    %v1912 = vadd.f32 %v1911, %v1905
    %v1913 = vstv %s1908
    %v1914 = vmul.f32 %v1913, %v1912
    %v1915 = vadd.f32 %v1336, %v1914
    %1916 = vst [vmem:[#allocation7 + $0x3] sm:$0x1] %v1915
    %s1917 = sld [smem:[#allocation4 + $0x3]]
    %s1918 = sld [smem:[#allocation4 + $0x4]]
    %s1919 = ssub.f32 %s1918, %s1917
    %v1921 = vlaneseq
    %v1922 = vshrl.u32 %v1921, 7
    %v1923 = vsub.s32 0, %v1922
    %v1924 = vrot.slane %v1915, %v1923
    %v1926 = vmul.f32 %v83, %v1924
    %v1927 = vmul.f32 %v88, %v1924
    %v1928 = vmul.f32 %v93, %v1924
    %v1929 = vmul.f32 %v98, %v1924
    %v1930 = vadd.f32 %v1926, %v113
    %v1931 = vadd.f32 %v1927, %v118
    %v1932 = vadd.f32 %v1928, %v123
    %v1933 = vadd.f32 %v1929, %v128
    %v1934 = vtanh.pop %v1930
    %v1935 = vtanh.pop %v1931
    %v1936 = vtanh.pop %v1932
    %v1937 = vtanh.pop %v1933
    %1938 = vmatprep.subr.mxu0 0.0
    %1939 = vmatpush1.msra.mxu0 %v1934
    %1940 = vmatprep.subr.mxu0 0.0
    %1941 = vmatpush1.msra.mxu0 %v1935
    %1942 = vmatprep.subr.mxu0 0.0
    %1943 = vmatpush1.msra.mxu0 %v1936
    %1944 = vmatprep.subr.mxu0 0.0
    %1945 = vmatpush1.msra.mxu0 %v1937
    %1946 = vmatprep.subr.mxu0 0.0
    %1947 = vmatpush1.msra.mxu0 0.0
    %1948 = vmatprep.subr.mxu0 0.0
    %1949 = vmatpush1.msra.mxu0 0.0
    %1950 = vmatprep.subr.mxu0 0.0
    %1951 = vmatpush1.msra.mxu0 0.0
    %1952 = vmatprep.subr.mxu0 0.0
    %1953 = vmatpush1.msra.mxu0 0.0
    %1954 = vmatprep.subr.mxu0 0.0
    %1955 = vmatpush1.msra.mxu0 0.0
    %1956 = vmatprep.subr.mxu0 0.0
    %1957 = vmatpush1.msra.mxu0 0.0
    %1958 = vmatprep.subr.mxu0 0.0
    %1959 = vmatpush1.msra.mxu0 0.0
    %1960 = vmatprep.subr.mxu0 0.0
    %1961 = vmatpush1.msra.mxu0 0.0
    %1962 = vmatprep.subr.mxu0 0.0
    %1963 = vmatpush1.msra.mxu0 0.0
    %1964 = vmatprep.subr.mxu0 0.0
    %1965 = vmatpush1.msra.mxu0 0.0
    %1966 = vmatprep.subr.mxu0 0.0
    %1967 = vmatpush1.msra.mxu0 0.0
    %1968 = vmatprep.subr.mxu0 0.0
    %1969 = vmatpush1.msra.mxu0 0.0
    %1970 = vmatprep.subr.mxu0 0.0
    %1971 = vmatpush1.msra.mxu0 0.0
    %1972 = vmatprep.subr.mxu0 0.0
    %1973 = vmatpush1.msra.mxu0 0.0
    %1974 = vmatprep.subr.mxu0 0.0
    %1975 = vmatpush1.msra.mxu0 0.0
    %1976 = vmatprep.subr.mxu0 0.0
    %1977 = vmatpush1.msra.mxu0 0.0
    %1978 = vmatprep.subr.mxu0 0.0
    %1979 = vmatpush1.msra.mxu0 0.0
    %1980 = vmatprep.subr.mxu0 0.0
    %1981 = vmatpush1.msra.mxu0 0.0
    %1982 = vmatprep.subr.mxu0 0.0
    %1983 = vmatpush1.msra.mxu0 0.0
    %1984 = vmatprep.subr.mxu0 0.0
    %1985 = vmatpush1.msra.mxu0 0.0
    %1986 = vmatprep.subr.mxu0 0.0
    %1987 = vmatpush1.msra.mxu0 0.0
    %1988 = vmatprep.subr.mxu0 0.0
    %1989 = vmatpush1.msra.mxu0 0.0
    %1990 = vmatprep.subr.mxu0 0.0
    %1991 = vmatpush1.msra.mxu0 0.0
    %1992 = vmatprep.subr.mxu0 0.0
    %1993 = vmatpush1.msra.mxu0 0.0
    %1994 = vmatprep.subr.mxu0 0.0
    %1995 = vmatpush1.msra.mxu0 0.0
    %1996 = vmatprep.subr.mxu0 0.0
    %1997 = vmatpush1.msra.mxu0 0.0
    %1998 = vmatprep.subr.mxu0 0.0
    %1999 = vmatpush1.msra.mxu0 0.0
    %2000 = vmatprep.subr.mxu0 0.0
    %2001 = vmatpush1.msra.mxu0 0.0
    %2002 = vmatprep.mubr.f32.mxu0 0.0
    %2003 = vmatmul.mubr.f32.gmra.mrb[0].mxu0 %v160
    %v2004 = vpop.f32.mrb[0].mxu0
    %v2005 = vadd.f32 %v141, %v2004
    %v2006 = vpop.f32.mrb[0].mxu0
    %2007 = vmatprep.mubr.f32.mxu0 0.0
    %2008 = vmatmul.mubr.f32.gmra.mrb[0].mxu0 %v163
    %v2009 = vpop.f32.mrb[0].mxu0
    %v2010 = vadd.f32 %v146, %v2009
    %v2011 = vpop.f32.mrb[0].mxu0
    %2012 = vmatprep.mubr.f32.mxu0 0.0
    %2013 = vmatmul.mubr.f32.gmra.mrb[0].mxu0 %v166
    %v2014 = vpop.f32.mrb[0].mxu0
    %v2015 = vadd.f32 %v151, %v2014
    %v2016 = vpop.f32.mrb[0].mxu0
    %2017 = vmatprep.mubr.f32.mxu0 0.0
    %2018 = vmatmul.mubr.f32.gmra.mrb[0].mxu0 %v169
    %v2019 = vpop.f32.mrb[0].mxu0
    %v2020 = vadd.f32 %v156, %v2019
    %v2021 = vpop.f32.mrb[0].mxu0
    %2022 = vdwg.mxu0
    %v2023 = vtanh.pop %v2005
    %v2024 = vtanh.pop %v2010
    %v2025 = vtanh.pop %v2015
    %v2026 = vtanh.pop %v2020
    %v2027 = vmul.f32 %v263, %v2023
    %v2028 = vmul.f32 %v268, %v2024
    %v2029 = vmul.f32 %v273, %v2025
    %v2030 = vmul.f32 %v278, %v2026
    %v2031 = vadd.f32 %v2027, %v2028
    %v2032 = vadd.f32 %v2031, %v2029
    %v2033 = vadd.f32 %v2032, %v2030
    %v2034 = vrot.slane %v2033, 4
    %v2035 = vadd.f32 %v2033, %v2034
    %v2036 = vrot.slane %v2035, 2
    %v2037 = vadd.f32 %v2035, %v2036
    %v2038 = vrot.slane %v2037, 1
    %v2039 = vadd.f32 %v2037, %v2038
    %v2040 = vadd.f32 %v2039, %v301
    %v2041 = vxor.u32 %v2040, 2147483648
    %v2042 = vmul.f32 %v2041, 1.442695
    %v2043 = vpow.pop %v2042
    %v2044 = vadd.f32 %v2043, 1.0
    %v2045 = vrcp.pop %v2044
    %v2046 = vmul.f32 1.0, %v2045
    %2047 = vrot.lane.b32.xlu0 %v1915, 1
    %v2048 = vpop.permute.xlu0 %2047
    %2049 = vrot.lane.b32.xlu0 %v1915, 127
    %v2050 = vpop.permute.xlu0 %2049
    %v2051 = vsel %vm73, 1.0, %v2048
    %v2052 = vmul.f32 %v1915, -1.0
    %v2053 = vadd.f32 %v2052, %v2051
    %v2054 = vadd.f32 %v2052, %v2050
    %v2055 = vsel %vm74, 0.0, %v2054
    %v2056 = vmul.f32 %v2046, %v318
    %v2057 = vadd.f32 %v2053, %v2055
    %v2058 = vmul.f32 %v2056, %v2057
    %s2059 = smul.f32 %s1919, 0.5
    %v2060 = vstv %s2059
    %v2061 = vmul.f32 %v2060, %v2058
    %v2062 = vadd.f32 %v1915, %v2061
    %v2064 = vlaneseq
    %v2065 = vshrl.u32 %v2064, 7
    %v2066 = vsub.s32 0, %v2065
    %v2067 = vrot.slane %v2062, %v2066
    %v2069 = vmul.f32 %v83, %v2067
    %v2070 = vmul.f32 %v88, %v2067
    %v2071 = vmul.f32 %v93, %v2067
    %v2072 = vmul.f32 %v98, %v2067
    %v2073 = vadd.f32 %v2069, %v113
    %v2074 = vadd.f32 %v2070, %v118
    %v2075 = vadd.f32 %v2071, %v123
    %v2076 = vadd.f32 %v2072, %v128
    %v2077 = vtanh.pop %v2073
    %v2078 = vtanh.pop %v2074
    %v2079 = vtanh.pop %v2075
    %v2080 = vtanh.pop %v2076
    %2081 = vmatprep.subr.mxu0 0.0
    %2082 = vmatpush1.msra.mxu0 %v2077
    %2083 = vmatprep.subr.mxu0 0.0
    %2084 = vmatpush1.msra.mxu0 %v2078
    %2085 = vmatprep.subr.mxu0 0.0
    %2086 = vmatpush1.msra.mxu0 %v2079
    %2087 = vmatprep.subr.mxu0 0.0
    %2088 = vmatpush1.msra.mxu0 %v2080
    %2089 = vmatprep.subr.mxu0 0.0
    %2090 = vmatpush1.msra.mxu0 0.0
    %2091 = vmatprep.subr.mxu0 0.0
    %2092 = vmatpush1.msra.mxu0 0.0
    %2093 = vmatprep.subr.mxu0 0.0
    %2094 = vmatpush1.msra.mxu0 0.0
    %2095 = vmatprep.subr.mxu0 0.0
    %2096 = vmatpush1.msra.mxu0 0.0
    %2097 = vmatprep.subr.mxu0 0.0
    %2098 = vmatpush1.msra.mxu0 0.0
    %2099 = vmatprep.subr.mxu0 0.0
    %2100 = vmatpush1.msra.mxu0 0.0
    %2101 = vmatprep.subr.mxu0 0.0
    %2102 = vmatpush1.msra.mxu0 0.0
    %2103 = vmatprep.subr.mxu0 0.0
    %2104 = vmatpush1.msra.mxu0 0.0
    %2105 = vmatprep.subr.mxu0 0.0
    %2106 = vmatpush1.msra.mxu0 0.0
    %2107 = vmatprep.subr.mxu0 0.0
    %2108 = vmatpush1.msra.mxu0 0.0
    %2109 = vmatprep.subr.mxu0 0.0
    %2110 = vmatpush1.msra.mxu0 0.0
    %2111 = vmatprep.subr.mxu0 0.0
    %2112 = vmatpush1.msra.mxu0 0.0
    %2113 = vmatprep.subr.mxu0 0.0
    %2114 = vmatpush1.msra.mxu0 0.0
    %2115 = vmatprep.subr.mxu0 0.0
    %2116 = vmatpush1.msra.mxu0 0.0
    %2117 = vmatprep.subr.mxu0 0.0
    %2118 = vmatpush1.msra.mxu0 0.0
    %2119 = vmatprep.subr.mxu0 0.0
    %2120 = vmatpush1.msra.mxu0 0.0
    %2121 = vmatprep.subr.mxu0 0.0
    %2122 = vmatpush1.msra.mxu0 0.0
    %2123 = vmatprep.subr.mxu0 0.0
    %2124 = vmatpush1.msra.mxu0 0.0
    %2125 = vmatprep.subr.mxu0 0.0
    %2126 = vmatpush1.msra.mxu0 0.0
    %2127 = vmatprep.subr.mxu0 0.0
    %2128 = vmatpush1.msra.mxu0 0.0
    %2129 = vmatprep.subr.mxu0 0.0
    %2130 = vmatpush1.msra.mxu0 0.0
    %2131 = vmatprep.subr.mxu0 0.0
    %2132 = vmatpush1.msra.mxu0 0.0
    %2133 = vmatprep.subr.mxu0 0.0
    %2134 = vmatpush1.msra.mxu0 0.0
    %2135 = vmatprep.subr.mxu0 0.0
    %2136 = vmatpush1.msra.mxu0 0.0
    %2137 = vmatprep.subr.mxu0 0.0
    %2138 = vmatpush1.msra.mxu0 0.0
    %2139 = vmatprep.subr.mxu0 0.0
    %2140 = vmatpush1.msra.mxu0 0.0
    %2141 = vmatprep.subr.mxu0 0.0
    %2142 = vmatpush1.msra.mxu0 0.0
    %2143 = vmatprep.subr.mxu0 0.0
    %2144 = vmatpush1.msra.mxu0 0.0
    %2145 = vmatprep.mubr.f32.mxu0 0.0
    %2146 = vmatmul.mubr.f32.gmra.mrb[0].mxu0 %v160
    %v2147 = vpop.f32.mrb[0].mxu0
    %v2148 = vadd.f32 %v141, %v2147
    %v2149 = vpop.f32.mrb[0].mxu0
    %2150 = vmatprep.mubr.f32.mxu0 0.0
    %2151 = vmatmul.mubr.f32.gmra.mrb[0].mxu0 %v163
    %v2152 = vpop.f32.mrb[0].mxu0
    %v2153 = vadd.f32 %v146, %v2152
    %v2154 = vpop.f32.mrb[0].mxu0
    %2155 = vmatprep.mubr.f32.mxu0 0.0
    %2156 = vmatmul.mubr.f32.gmra.mrb[0].mxu0 %v166
    %v2157 = vpop.f32.mrb[0].mxu0
    %v2158 = vadd.f32 %v151, %v2157
    %v2159 = vpop.f32.mrb[0].mxu0
    %2160 = vmatprep.mubr.f32.mxu0 0.0
    %2161 = vmatmul.mubr.f32.gmra.mrb[0].mxu0 %v169
    %v2162 = vpop.f32.mrb[0].mxu0
    %v2163 = vadd.f32 %v156, %v2162
    %v2164 = vpop.f32.mrb[0].mxu0
    %2165 = vdwg.mxu0
    %v2166 = vtanh.pop %v2148
    %v2167 = vtanh.pop %v2153
    %v2168 = vtanh.pop %v2158
    %v2169 = vtanh.pop %v2163
    %v2170 = vmul.f32 %v263, %v2166
    %v2171 = vmul.f32 %v268, %v2167
    %v2172 = vmul.f32 %v273, %v2168
    %v2173 = vmul.f32 %v278, %v2169
    %v2174 = vadd.f32 %v2170, %v2171
    %v2175 = vadd.f32 %v2174, %v2172
    %v2176 = vadd.f32 %v2175, %v2173
    %v2177 = vrot.slane %v2176, 4
    %v2178 = vadd.f32 %v2176, %v2177
    %v2179 = vrot.slane %v2178, 2
    %v2180 = vadd.f32 %v2178, %v2179
    %v2181 = vrot.slane %v2180, 1
    %v2182 = vadd.f32 %v2180, %v2181
    %v2183 = vadd.f32 %v2182, %v301
    %v2184 = vxor.u32 %v2183, 2147483648
    %v2185 = vmul.f32 %v2184, 1.442695
    %v2186 = vpow.pop %v2185
    %v2187 = vadd.f32 %v2186, 1.0
    %v2188 = vrcp.pop %v2187
    %v2189 = vmul.f32 1.0, %v2188
    %2190 = vrot.lane.b32.xlu0 %v2062, 1
    %v2191 = vpop.permute.xlu0 %2190
    %2192 = vrot.lane.b32.xlu0 %v2062, 127
    %v2193 = vpop.permute.xlu0 %2192
    %v2194 = vsel %vm73, 1.0, %v2191
    %v2195 = vmul.f32 %v2062, -1.0
    %v2196 = vadd.f32 %v2195, %v2194
    %v2197 = vadd.f32 %v2195, %v2193
    %v2198 = vsel %vm74, 0.0, %v2197
    %v2199 = vmul.f32 %v2189, %v318
    %v2200 = vadd.f32 %v2196, %v2198
    %v2201 = vmul.f32 %v2199, %v2200
    %v2202 = vmul.f32 %v2060, %v2201
    %v2203 = vadd.f32 %v1915, %v2202
    %v2205 = vlaneseq
    %v2206 = vshrl.u32 %v2205, 7
    %v2207 = vsub.s32 0, %v2206
    %v2208 = vrot.slane %v2203, %v2207
    %v2210 = vmul.f32 %v83, %v2208
    %v2211 = vmul.f32 %v88, %v2208
    %v2212 = vmul.f32 %v93, %v2208
    %v2213 = vmul.f32 %v98, %v2208
    %v2214 = vadd.f32 %v2210, %v113
    %v2215 = vadd.f32 %v2211, %v118
    %v2216 = vadd.f32 %v2212, %v123
    %v2217 = vadd.f32 %v2213, %v128
    %v2218 = vtanh.pop %v2214
    %v2219 = vtanh.pop %v2215
    %v2220 = vtanh.pop %v2216
    %v2221 = vtanh.pop %v2217
    %2222 = vmatprep.subr.mxu0 0.0
    %2223 = vmatpush1.msra.mxu0 %v2218
    %2224 = vmatprep.subr.mxu0 0.0
    %2225 = vmatpush1.msra.mxu0 %v2219
    %2226 = vmatprep.subr.mxu0 0.0
    %2227 = vmatpush1.msra.mxu0 %v2220
    %2228 = vmatprep.subr.mxu0 0.0
    %2229 = vmatpush1.msra.mxu0 %v2221
    %2230 = vmatprep.subr.mxu0 0.0
    %2231 = vmatpush1.msra.mxu0 0.0
    %2232 = vmatprep.subr.mxu0 0.0
    %2233 = vmatpush1.msra.mxu0 0.0
    %2234 = vmatprep.subr.mxu0 0.0
    %2235 = vmatpush1.msra.mxu0 0.0
    %2236 = vmatprep.subr.mxu0 0.0
    %2237 = vmatpush1.msra.mxu0 0.0
    %2238 = vmatprep.subr.mxu0 0.0
    %2239 = vmatpush1.msra.mxu0 0.0
    %2240 = vmatprep.subr.mxu0 0.0
    %2241 = vmatpush1.msra.mxu0 0.0
    %2242 = vmatprep.subr.mxu0 0.0
    %2243 = vmatpush1.msra.mxu0 0.0
    %2244 = vmatprep.subr.mxu0 0.0
    %2245 = vmatpush1.msra.mxu0 0.0
    %2246 = vmatprep.subr.mxu0 0.0
    %2247 = vmatpush1.msra.mxu0 0.0
    %2248 = vmatprep.subr.mxu0 0.0
    %2249 = vmatpush1.msra.mxu0 0.0
    %2250 = vmatprep.subr.mxu0 0.0
    %2251 = vmatpush1.msra.mxu0 0.0
    %2252 = vmatprep.subr.mxu0 0.0
    %2253 = vmatpush1.msra.mxu0 0.0
    %2254 = vmatprep.subr.mxu0 0.0
    %2255 = vmatpush1.msra.mxu0 0.0
    %2256 = vmatprep.subr.mxu0 0.0
    %2257 = vmatpush1.msra.mxu0 0.0
    %2258 = vmatprep.subr.mxu0 0.0
    %2259 = vmatpush1.msra.mxu0 0.0
    %2260 = vmatprep.subr.mxu0 0.0
    %2261 = vmatpush1.msra.mxu0 0.0
    %2262 = vmatprep.subr.mxu0 0.0
    %2263 = vmatpush1.msra.mxu0 0.0
    %2264 = vmatprep.subr.mxu0 0.0
    %2265 = vmatpush1.msra.mxu0 0.0
    %2266 = vmatprep.subr.mxu0 0.0
    %2267 = vmatpush1.msra.mxu0 0.0
    %2268 = vmatprep.subr.mxu0 0.0
    %2269 = vmatpush1.msra.mxu0 0.0
    %2270 = vmatprep.subr.mxu0 0.0
    %2271 = vmatpush1.msra.mxu0 0.0
    %2272 = vmatprep.subr.mxu0 0.0
    %2273 = vmatpush1.msra.mxu0 0.0
    %2274 = vmatprep.subr.mxu0 0.0
    %2275 = vmatpush1.msra.mxu0 0.0
    %2276 = vmatprep.subr.mxu0 0.0
    %2277 = vmatpush1.msra.mxu0 0.0
    %2278 = vmatprep.subr.mxu0 0.0
    %2279 = vmatpush1.msra.mxu0 0.0
    %2280 = vmatprep.subr.mxu0 0.0
    %2281 = vmatpush1.msra.mxu0 0.0
    %2282 = vmatprep.subr.mxu0 0.0
    %2283 = vmatpush1.msra.mxu0 0.0
    %2284 = vmatprep.subr.mxu0 0.0
    %2285 = vmatpush1.msra.mxu0 0.0
    %2286 = vmatprep.mubr.f32.mxu0 0.0
    %2287 = vmatmul.mubr.f32.gmra.mrb[0].mxu0 %v160
    %v2288 = vpop.f32.mrb[0].mxu0
    %v2289 = vadd.f32 %v141, %v2288
    %v2290 = vpop.f32.mrb[0].mxu0
    %2291 = vmatprep.mubr.f32.mxu0 0.0
    %2292 = vmatmul.mubr.f32.gmra.mrb[0].mxu0 %v163
    %v2293 = vpop.f32.mrb[0].mxu0
    %v2294 = vadd.f32 %v146, %v2293
    %v2295 = vpop.f32.mrb[0].mxu0
    %2296 = vmatprep.mubr.f32.mxu0 0.0
    %2297 = vmatmul.mubr.f32.gmra.mrb[0].mxu0 %v166
    %v2298 = vpop.f32.mrb[0].mxu0
    %v2299 = vadd.f32 %v151, %v2298
    %v2300 = vpop.f32.mrb[0].mxu0
    %2301 = vmatprep.mubr.f32.mxu0 0.0
    %2302 = vmatmul.mubr.f32.gmra.mrb[0].mxu0 %v169
    %v2303 = vpop.f32.mrb[0].mxu0
    %v2304 = vadd.f32 %v156, %v2303
    %v2305 = vpop.f32.mrb[0].mxu0
    %2306 = vdwg.mxu0
    %v2307 = vtanh.pop %v2289
    %v2308 = vtanh.pop %v2294
    %v2309 = vtanh.pop %v2299
    %v2310 = vtanh.pop %v2304
    %v2311 = vmul.f32 %v263, %v2307
    %v2312 = vmul.f32 %v268, %v2308
    %v2313 = vmul.f32 %v273, %v2309
    %v2314 = vmul.f32 %v278, %v2310
    %v2315 = vadd.f32 %v2311, %v2312
    %v2316 = vadd.f32 %v2315, %v2313
    %v2317 = vadd.f32 %v2316, %v2314
    %v2318 = vrot.slane %v2317, 4
    %v2319 = vadd.f32 %v2317, %v2318
    %v2320 = vrot.slane %v2319, 2
    %v2321 = vadd.f32 %v2319, %v2320
    %v2322 = vrot.slane %v2321, 1
    %v2323 = vadd.f32 %v2321, %v2322
    %v2324 = vadd.f32 %v2323, %v301
    %v2325 = vxor.u32 %v2324, 2147483648
    %v2326 = vmul.f32 %v2325, 1.442695
    %v2327 = vpow.pop %v2326
    %v2328 = vadd.f32 %v2327, 1.0
    %v2329 = vrcp.pop %v2328
    %v2330 = vmul.f32 1.0, %v2329
    %2331 = vrot.lane.b32.xlu0 %v2203, 1
    %v2332 = vpop.permute.xlu0 %2331
    %2333 = vrot.lane.b32.xlu0 %v2203, 127
    %v2334 = vpop.permute.xlu0 %2333
    %v2335 = vsel %vm73, 1.0, %v2332
    %v2336 = vmul.f32 %v2203, -1.0
    %v2337 = vadd.f32 %v2336, %v2335
    %v2338 = vadd.f32 %v2336, %v2334
    %v2339 = vsel %vm74, 0.0, %v2338
    %v2340 = vmul.f32 %v2330, %v318
    %v2341 = vadd.f32 %v2337, %v2339
    %v2342 = vmul.f32 %v2340, %v2341
    %v2343 = vstv %s1919
    %v2344 = vmul.f32 %v2343, %v2342
    %v2345 = vadd.f32 %v1915, %v2344
    %v2347 = vlaneseq
    %v2348 = vshrl.u32 %v2347, 7
    %v2349 = vsub.s32 0, %v2348
    %v2350 = vrot.slane %v2345, %v2349
    %v2352 = vmul.f32 %v83, %v2350
    %v2353 = vmul.f32 %v88, %v2350
    %v2354 = vmul.f32 %v93, %v2350
    %v2355 = vmul.f32 %v98, %v2350
    %v2356 = vadd.f32 %v2352, %v113
    %v2357 = vadd.f32 %v2353, %v118
    %v2358 = vadd.f32 %v2354, %v123
    %v2359 = vadd.f32 %v2355, %v128
    %v2360 = vtanh.pop %v2356
    %v2361 = vtanh.pop %v2357
    %v2362 = vtanh.pop %v2358
    %v2363 = vtanh.pop %v2359
    %2364 = vmatprep.subr.mxu0 0.0
    %2365 = vmatpush1.msra.mxu0 %v2360
    %2366 = vmatprep.subr.mxu0 0.0
    %2367 = vmatpush1.msra.mxu0 %v2361
    %2368 = vmatprep.subr.mxu0 0.0
    %2369 = vmatpush1.msra.mxu0 %v2362
    %2370 = vmatprep.subr.mxu0 0.0
    %2371 = vmatpush1.msra.mxu0 %v2363
    %2372 = vmatprep.subr.mxu0 0.0
    %2373 = vmatpush1.msra.mxu0 0.0
    %2374 = vmatprep.subr.mxu0 0.0
    %2375 = vmatpush1.msra.mxu0 0.0
    %2376 = vmatprep.subr.mxu0 0.0
    %2377 = vmatpush1.msra.mxu0 0.0
    %2378 = vmatprep.subr.mxu0 0.0
    %2379 = vmatpush1.msra.mxu0 0.0
    %2380 = vmatprep.subr.mxu0 0.0
    %2381 = vmatpush1.msra.mxu0 0.0
    %2382 = vmatprep.subr.mxu0 0.0
    %2383 = vmatpush1.msra.mxu0 0.0
    %2384 = vmatprep.subr.mxu0 0.0
    %2385 = vmatpush1.msra.mxu0 0.0
    %2386 = vmatprep.subr.mxu0 0.0
    %2387 = vmatpush1.msra.mxu0 0.0
    %2388 = vmatprep.subr.mxu0 0.0
    %2389 = vmatpush1.msra.mxu0 0.0
    %2390 = vmatprep.subr.mxu0 0.0
    %2391 = vmatpush1.msra.mxu0 0.0
    %2392 = vmatprep.subr.mxu0 0.0
    %2393 = vmatpush1.msra.mxu0 0.0
    %2394 = vmatprep.subr.mxu0 0.0
    %2395 = vmatpush1.msra.mxu0 0.0
    %2396 = vmatprep.subr.mxu0 0.0
    %2397 = vmatpush1.msra.mxu0 0.0
    %2398 = vmatprep.subr.mxu0 0.0
    %2399 = vmatpush1.msra.mxu0 0.0
    %2400 = vmatprep.subr.mxu0 0.0
    %2401 = vmatpush1.msra.mxu0 0.0
    %2402 = vmatprep.subr.mxu0 0.0
    %2403 = vmatpush1.msra.mxu0 0.0
    %2404 = vmatprep.subr.mxu0 0.0
    %2405 = vmatpush1.msra.mxu0 0.0
    %2406 = vmatprep.subr.mxu0 0.0
    %2407 = vmatpush1.msra.mxu0 0.0
    %2408 = vmatprep.subr.mxu0 0.0
    %2409 = vmatpush1.msra.mxu0 0.0
    %2410 = vmatprep.subr.mxu0 0.0
    %2411 = vmatpush1.msra.mxu0 0.0
    %2412 = vmatprep.subr.mxu0 0.0
    %2413 = vmatpush1.msra.mxu0 0.0
    %2414 = vmatprep.subr.mxu0 0.0
    %2415 = vmatpush1.msra.mxu0 0.0
    %2416 = vmatprep.subr.mxu0 0.0
    %2417 = vmatpush1.msra.mxu0 0.0
    %2418 = vmatprep.subr.mxu0 0.0
    %2419 = vmatpush1.msra.mxu0 0.0
    %2420 = vmatprep.subr.mxu0 0.0
    %2421 = vmatpush1.msra.mxu0 0.0
    %2422 = vmatprep.subr.mxu0 0.0
    %2423 = vmatpush1.msra.mxu0 0.0
    %2424 = vmatprep.subr.mxu0 0.0
    %2425 = vmatpush1.msra.mxu0 0.0
    %2426 = vmatprep.subr.mxu0 0.0
    %2427 = vmatpush1.msra.mxu0 0.0
    %2428 = vmatprep.mubr.f32.mxu0 0.0
    %2429 = vmatmul.mubr.f32.gmra.mrb[0].mxu0 %v160
    %v2430 = vpop.f32.mrb[0].mxu0
    %v2431 = vadd.f32 %v141, %v2430
    %v2432 = vpop.f32.mrb[0].mxu0
    %2433 = vmatprep.mubr.f32.mxu0 0.0
    %2434 = vmatmul.mubr.f32.gmra.mrb[0].mxu0 %v163
    %v2435 = vpop.f32.mrb[0].mxu0
    %v2436 = vadd.f32 %v146, %v2435
    %v2437 = vpop.f32.mrb[0].mxu0
    %2438 = vmatprep.mubr.f32.mxu0 0.0
    %2439 = vmatmul.mubr.f32.gmra.mrb[0].mxu0 %v166
    %v2440 = vpop.f32.mrb[0].mxu0
    %v2441 = vadd.f32 %v151, %v2440
    %v2442 = vpop.f32.mrb[0].mxu0
    %2443 = vmatprep.mubr.f32.mxu0 0.0
    %2444 = vmatmul.mubr.f32.gmra.mrb[0].mxu0 %v169
    %v2445 = vpop.f32.mrb[0].mxu0
    %v2446 = vadd.f32 %v156, %v2445
    %v2447 = vpop.f32.mrb[0].mxu0
    %2448 = vdwg.mxu0
    %v2449 = vtanh.pop %v2431
    %v2450 = vtanh.pop %v2436
    %v2451 = vtanh.pop %v2441
    %v2452 = vtanh.pop %v2446
    %v2453 = vmul.f32 %v263, %v2449
    %v2454 = vmul.f32 %v268, %v2450
    %v2455 = vmul.f32 %v273, %v2451
    %v2456 = vmul.f32 %v278, %v2452
    %v2457 = vadd.f32 %v2453, %v2454
    %v2458 = vadd.f32 %v2457, %v2455
    %v2459 = vadd.f32 %v2458, %v2456
    %v2460 = vrot.slane %v2459, 4
    %v2461 = vadd.f32 %v2459, %v2460
    %v2462 = vrot.slane %v2461, 2
    %v2463 = vadd.f32 %v2461, %v2462
    %v2464 = vrot.slane %v2463, 1
    %v2465 = vadd.f32 %v2463, %v2464
    %v2466 = vadd.f32 %v2465, %v301
    %v2467 = vxor.u32 %v2466, 2147483648
    %v2468 = vmul.f32 %v2467, 1.442695
    %v2469 = vpow.pop %v2468
    %v2470 = vadd.f32 %v2469, 1.0
    %v2471 = vrcp.pop %v2470
    %v2472 = vmul.f32 1.0, %v2471
    %2473 = vrot.lane.b32.xlu0 %v2345, 1
    %v2474 = vpop.permute.xlu0 %2473
    %2475 = vrot.lane.b32.xlu0 %v2345, 127
    %v2476 = vpop.permute.xlu0 %2475
    %v2477 = vsel %vm73, 1.0, %v2474
    %v2478 = vmul.f32 %v2345, -1.0
    %v2479 = vadd.f32 %v2478, %v2477
    %v2480 = vadd.f32 %v2478, %v2476
    %v2481 = vsel %vm74, 0.0, %v2480
    %v2482 = vmul.f32 %v2472, %v318
    %v2483 = vadd.f32 %v2479, %v2481
    %v2484 = vmul.f32 %v2482, %v2483
    %v2485 = vrcp.pop 6.0
    %s2486 = vtos %v2485
    %s2487 = smul.f32 %s1919, %s2486
    %v2488 = vadd.f32 %v2201, %v2342
    %v2489 = vmul.f32 %v2488, 2.0
    %v2490 = vadd.f32 %v2058, %v2489
    %v2491 = vadd.f32 %v2490, %v2484
    %v2492 = vstv %s2487
    %v2493 = vmul.f32 %v2492, %v2491
    %v2494 = vadd.f32 %v1915, %v2493
    %2495 = vst [vmem:[#allocation7 + $0x4] sm:$0x1] %v2494
    %s2496 = sld [smem:[#allocation4 + $0x4]]
    %s2497 = sld [smem:[#allocation4 + $0x5]]
    %s2498 = ssub.f32 %s2497, %s2496
    %v2500 = vlaneseq
    %v2501 = vshrl.u32 %v2500, 7
    %v2502 = vsub.s32 0, %v2501
    %v2503 = vrot.slane %v2494, %v2502
    %v2505 = vmul.f32 %v83, %v2503
    %v2506 = vmul.f32 %v88, %v2503
    %v2507 = vmul.f32 %v93, %v2503
    %v2508 = vmul.f32 %v98, %v2503
    %v2509 = vadd.f32 %v2505, %v113
    %v2510 = vadd.f32 %v2506, %v118
    %v2511 = vadd.f32 %v2507, %v123
    %v2512 = vadd.f32 %v2508, %v128
    %v2513 = vtanh.pop %v2509
    %v2514 = vtanh.pop %v2510
    %v2515 = vtanh.pop %v2511
    %v2516 = vtanh.pop %v2512
    %2517 = vmatprep.subr.mxu0 0.0
    %2518 = vmatpush1.msra.mxu0 %v2513
    %2519 = vmatprep.subr.mxu0 0.0
    %2520 = vmatpush1.msra.mxu0 %v2514
    %2521 = vmatprep.subr.mxu0 0.0
    %2522 = vmatpush1.msra.mxu0 %v2515
    %2523 = vmatprep.subr.mxu0 0.0
    %2524 = vmatpush1.msra.mxu0 %v2516
    %2525 = vmatprep.subr.mxu0 0.0
    %2526 = vmatpush1.msra.mxu0 0.0
    %2527 = vmatprep.subr.mxu0 0.0
    %2528 = vmatpush1.msra.mxu0 0.0
    %2529 = vmatprep.subr.mxu0 0.0
    %2530 = vmatpush1.msra.mxu0 0.0
    %2531 = vmatprep.subr.mxu0 0.0
    %2532 = vmatpush1.msra.mxu0 0.0
    %2533 = vmatprep.subr.mxu0 0.0
    %2534 = vmatpush1.msra.mxu0 0.0
    %2535 = vmatprep.subr.mxu0 0.0
    %2536 = vmatpush1.msra.mxu0 0.0
    %2537 = vmatprep.subr.mxu0 0.0
    %2538 = vmatpush1.msra.mxu0 0.0
    %2539 = vmatprep.subr.mxu0 0.0
    %2540 = vmatpush1.msra.mxu0 0.0
    %2541 = vmatprep.subr.mxu0 0.0
    %2542 = vmatpush1.msra.mxu0 0.0
    %2543 = vmatprep.subr.mxu0 0.0
    %2544 = vmatpush1.msra.mxu0 0.0
    %2545 = vmatprep.subr.mxu0 0.0
    %2546 = vmatpush1.msra.mxu0 0.0
    %2547 = vmatprep.subr.mxu0 0.0
    %2548 = vmatpush1.msra.mxu0 0.0
    %2549 = vmatprep.subr.mxu0 0.0
    %2550 = vmatpush1.msra.mxu0 0.0
    %2551 = vmatprep.subr.mxu0 0.0
    %2552 = vmatpush1.msra.mxu0 0.0
    %2553 = vmatprep.subr.mxu0 0.0
    %2554 = vmatpush1.msra.mxu0 0.0
    %2555 = vmatprep.subr.mxu0 0.0
    %2556 = vmatpush1.msra.mxu0 0.0
    %2557 = vmatprep.subr.mxu0 0.0
    %2558 = vmatpush1.msra.mxu0 0.0
    %2559 = vmatprep.subr.mxu0 0.0
    %2560 = vmatpush1.msra.mxu0 0.0
    %2561 = vmatprep.subr.mxu0 0.0
    %2562 = vmatpush1.msra.mxu0 0.0
    %2563 = vmatprep.subr.mxu0 0.0
    %2564 = vmatpush1.msra.mxu0 0.0
    %2565 = vmatprep.subr.mxu0 0.0
    %2566 = vmatpush1.msra.mxu0 0.0
    %2567 = vmatprep.subr.mxu0 0.0
    %2568 = vmatpush1.msra.mxu0 0.0
    %2569 = vmatprep.subr.mxu0 0.0
    %2570 = vmatpush1.msra.mxu0 0.0
    %2571 = vmatprep.subr.mxu0 0.0
    %2572 = vmatpush1.msra.mxu0 0.0
    %2573 = vmatprep.subr.mxu0 0.0
    %2574 = vmatpush1.msra.mxu0 0.0
    %2575 = vmatprep.subr.mxu0 0.0
    %2576 = vmatpush1.msra.mxu0 0.0
    %2577 = vmatprep.subr.mxu0 0.0
    %2578 = vmatpush1.msra.mxu0 0.0
    %2579 = vmatprep.subr.mxu0 0.0
    %2580 = vmatpush1.msra.mxu0 0.0
    %2581 = vmatprep.mubr.f32.mxu0 0.0
    %2582 = vmatmul.mubr.f32.gmra.mrb[0].mxu0 %v160
    %v2583 = vpop.f32.mrb[0].mxu0
    %v2584 = vadd.f32 %v141, %v2583
    %v2585 = vpop.f32.mrb[0].mxu0
    %2586 = vmatprep.mubr.f32.mxu0 0.0
    %2587 = vmatmul.mubr.f32.gmra.mrb[0].mxu0 %v163
    %v2588 = vpop.f32.mrb[0].mxu0
    %v2589 = vadd.f32 %v146, %v2588
    %v2590 = vpop.f32.mrb[0].mxu0
    %2591 = vmatprep.mubr.f32.mxu0 0.0
    %2592 = vmatmul.mubr.f32.gmra.mrb[0].mxu0 %v166
    %v2593 = vpop.f32.mrb[0].mxu0
    %v2594 = vadd.f32 %v151, %v2593
    %v2595 = vpop.f32.mrb[0].mxu0
    %2596 = vmatprep.mubr.f32.mxu0 0.0
    %2597 = vmatmul.mubr.f32.gmra.mrb[0].mxu0 %v169
    %v2598 = vpop.f32.mrb[0].mxu0
    %v2599 = vadd.f32 %v156, %v2598
    %v2600 = vpop.f32.mrb[0].mxu0
    %2601 = vdwg.mxu0
    %v2602 = vtanh.pop %v2584
    %v2603 = vtanh.pop %v2589
    %v2604 = vtanh.pop %v2594
    %v2605 = vtanh.pop %v2599
    %v2606 = vmul.f32 %v263, %v2602
    %v2607 = vmul.f32 %v268, %v2603
    %v2608 = vmul.f32 %v273, %v2604
    %v2609 = vmul.f32 %v278, %v2605
    %v2610 = vadd.f32 %v2606, %v2607
    %v2611 = vadd.f32 %v2610, %v2608
    %v2612 = vadd.f32 %v2611, %v2609
    %v2613 = vrot.slane %v2612, 4
    %v2614 = vadd.f32 %v2612, %v2613
    %v2615 = vrot.slane %v2614, 2
    %v2616 = vadd.f32 %v2614, %v2615
    %v2617 = vrot.slane %v2616, 1
    %v2618 = vadd.f32 %v2616, %v2617
    %v2619 = vadd.f32 %v2618, %v301
    %v2620 = vxor.u32 %v2619, 2147483648
    %v2621 = vmul.f32 %v2620, 1.442695
    %v2622 = vpow.pop %v2621
    %v2623 = vadd.f32 %v2622, 1.0
    %v2624 = vrcp.pop %v2623
    %v2625 = vmul.f32 1.0, %v2624
    %2626 = vrot.lane.b32.xlu0 %v2494, 1
    %v2627 = vpop.permute.xlu0 %2626
    %2628 = vrot.lane.b32.xlu0 %v2494, 127
    %v2629 = vpop.permute.xlu0 %2628
    %v2630 = vsel %vm73, 1.0, %v2627
    %v2631 = vmul.f32 %v2494, -1.0
    %v2632 = vadd.f32 %v2631, %v2630
    %v2633 = vadd.f32 %v2631, %v2629
    %v2634 = vsel %vm74, 0.0, %v2633
    %v2635 = vmul.f32 %v2625, %v318
    %v2636 = vadd.f32 %v2632, %v2634
    %v2637 = vmul.f32 %v2635, %v2636
    %s2638 = smul.f32 %s2498, 0.5
    %v2639 = vstv %s2638
    %v2640 = vmul.f32 %v2639, %v2637
    %v2641 = vadd.f32 %v2494, %v2640
    %v2643 = vlaneseq
    %v2644 = vshrl.u32 %v2643, 7
    %v2645 = vsub.s32 0, %v2644
    %v2646 = vrot.slane %v2641, %v2645
    %v2648 = vmul.f32 %v83, %v2646
    %v2649 = vmul.f32 %v88, %v2646
    %v2650 = vmul.f32 %v93, %v2646
    %v2651 = vmul.f32 %v98, %v2646
    %v2652 = vadd.f32 %v2648, %v113
    %v2653 = vadd.f32 %v2649, %v118
    %v2654 = vadd.f32 %v2650, %v123
    %v2655 = vadd.f32 %v2651, %v128
    %v2656 = vtanh.pop %v2652
    %v2657 = vtanh.pop %v2653
    %v2658 = vtanh.pop %v2654
    %v2659 = vtanh.pop %v2655
    %2660 = vmatprep.subr.mxu0 0.0
    %2661 = vmatpush1.msra.mxu0 %v2656
    %2662 = vmatprep.subr.mxu0 0.0
    %2663 = vmatpush1.msra.mxu0 %v2657
    %2664 = vmatprep.subr.mxu0 0.0
    %2665 = vmatpush1.msra.mxu0 %v2658
    %2666 = vmatprep.subr.mxu0 0.0
    %2667 = vmatpush1.msra.mxu0 %v2659
    %2668 = vmatprep.subr.mxu0 0.0
    %2669 = vmatpush1.msra.mxu0 0.0
    %2670 = vmatprep.subr.mxu0 0.0
    %2671 = vmatpush1.msra.mxu0 0.0
    %2672 = vmatprep.subr.mxu0 0.0
    %2673 = vmatpush1.msra.mxu0 0.0
    %2674 = vmatprep.subr.mxu0 0.0
    %2675 = vmatpush1.msra.mxu0 0.0
    %2676 = vmatprep.subr.mxu0 0.0
    %2677 = vmatpush1.msra.mxu0 0.0
    %2678 = vmatprep.subr.mxu0 0.0
    %2679 = vmatpush1.msra.mxu0 0.0
    %2680 = vmatprep.subr.mxu0 0.0
    %2681 = vmatpush1.msra.mxu0 0.0
    %2682 = vmatprep.subr.mxu0 0.0
    %2683 = vmatpush1.msra.mxu0 0.0
    %2684 = vmatprep.subr.mxu0 0.0
    %2685 = vmatpush1.msra.mxu0 0.0
    %2686 = vmatprep.subr.mxu0 0.0
    %2687 = vmatpush1.msra.mxu0 0.0
    %2688 = vmatprep.subr.mxu0 0.0
    %2689 = vmatpush1.msra.mxu0 0.0
    %2690 = vmatprep.subr.mxu0 0.0
    %2691 = vmatpush1.msra.mxu0 0.0
    %2692 = vmatprep.subr.mxu0 0.0
    %2693 = vmatpush1.msra.mxu0 0.0
    %2694 = vmatprep.subr.mxu0 0.0
    %2695 = vmatpush1.msra.mxu0 0.0
    %2696 = vmatprep.subr.mxu0 0.0
    %2697 = vmatpush1.msra.mxu0 0.0
    %2698 = vmatprep.subr.mxu0 0.0
    %2699 = vmatpush1.msra.mxu0 0.0
    %2700 = vmatprep.subr.mxu0 0.0
    %2701 = vmatpush1.msra.mxu0 0.0
    %2702 = vmatprep.subr.mxu0 0.0
    %2703 = vmatpush1.msra.mxu0 0.0
    %2704 = vmatprep.subr.mxu0 0.0
    %2705 = vmatpush1.msra.mxu0 0.0
    %2706 = vmatprep.subr.mxu0 0.0
    %2707 = vmatpush1.msra.mxu0 0.0
    %2708 = vmatprep.subr.mxu0 0.0
    %2709 = vmatpush1.msra.mxu0 0.0
    %2710 = vmatprep.subr.mxu0 0.0
    %2711 = vmatpush1.msra.mxu0 0.0
    %2712 = vmatprep.subr.mxu0 0.0
    %2713 = vmatpush1.msra.mxu0 0.0
    %2714 = vmatprep.subr.mxu0 0.0
    %2715 = vmatpush1.msra.mxu0 0.0
    %2716 = vmatprep.subr.mxu0 0.0
    %2717 = vmatpush1.msra.mxu0 0.0
    %2718 = vmatprep.subr.mxu0 0.0
    %2719 = vmatpush1.msra.mxu0 0.0
    %2720 = vmatprep.subr.mxu0 0.0
    %2721 = vmatpush1.msra.mxu0 0.0
    %2722 = vmatprep.subr.mxu0 0.0
    %2723 = vmatpush1.msra.mxu0 0.0
    %2724 = vmatprep.mubr.f32.mxu0 0.0
    %2725 = vmatmul.mubr.f32.gmra.mrb[0].mxu0 %v160
    %v2726 = vpop.f32.mrb[0].mxu0
    %v2727 = vadd.f32 %v141, %v2726
    %v2728 = vpop.f32.mrb[0].mxu0
    %2729 = vmatprep.mubr.f32.mxu0 0.0
    %2730 = vmatmul.mubr.f32.gmra.mrb[0].mxu0 %v163
    %v2731 = vpop.f32.mrb[0].mxu0
    %v2732 = vadd.f32 %v146, %v2731
    %v2733 = vpop.f32.mrb[0].mxu0
    %2734 = vmatprep.mubr.f32.mxu0 0.0
    %2735 = vmatmul.mubr.f32.gmra.mrb[0].mxu0 %v166
    %v2736 = vpop.f32.mrb[0].mxu0
    %v2737 = vadd.f32 %v151, %v2736
    %v2738 = vpop.f32.mrb[0].mxu0
    %2739 = vmatprep.mubr.f32.mxu0 0.0
    %2740 = vmatmul.mubr.f32.gmra.mrb[0].mxu0 %v169
    %v2741 = vpop.f32.mrb[0].mxu0
    %v2742 = vadd.f32 %v156, %v2741
    %v2743 = vpop.f32.mrb[0].mxu0
    %2744 = vdwg.mxu0
    %v2745 = vtanh.pop %v2727
    %v2746 = vtanh.pop %v2732
    %v2747 = vtanh.pop %v2737
    %v2748 = vtanh.pop %v2742
    %v2749 = vmul.f32 %v263, %v2745
    %v2750 = vmul.f32 %v268, %v2746
    %v2751 = vmul.f32 %v273, %v2747
    %v2752 = vmul.f32 %v278, %v2748
    %v2753 = vadd.f32 %v2749, %v2750
    %v2754 = vadd.f32 %v2753, %v2751
    %v2755 = vadd.f32 %v2754, %v2752
    %v2756 = vrot.slane %v2755, 4
    %v2757 = vadd.f32 %v2755, %v2756
    %v2758 = vrot.slane %v2757, 2
    %v2759 = vadd.f32 %v2757, %v2758
    %v2760 = vrot.slane %v2759, 1
    %v2761 = vadd.f32 %v2759, %v2760
    %v2762 = vadd.f32 %v2761, %v301
    %v2763 = vxor.u32 %v2762, 2147483648
    %v2764 = vmul.f32 %v2763, 1.442695
    %v2765 = vpow.pop %v2764
    %v2766 = vadd.f32 %v2765, 1.0
    %v2767 = vrcp.pop %v2766
    %v2768 = vmul.f32 1.0, %v2767
    %2769 = vrot.lane.b32.xlu0 %v2641, 1
    %v2770 = vpop.permute.xlu0 %2769
    %2771 = vrot.lane.b32.xlu0 %v2641, 127
    %v2772 = vpop.permute.xlu0 %2771
    %v2773 = vsel %vm73, 1.0, %v2770
    %v2774 = vmul.f32 %v2641, -1.0
    %v2775 = vadd.f32 %v2774, %v2773
    %v2776 = vadd.f32 %v2774, %v2772
    %v2777 = vsel %vm74, 0.0, %v2776
    %v2778 = vmul.f32 %v2768, %v318
    %v2779 = vadd.f32 %v2775, %v2777
    %v2780 = vmul.f32 %v2778, %v2779
    %v2781 = vmul.f32 %v2639, %v2780
    %v2782 = vadd.f32 %v2494, %v2781
    %v2784 = vlaneseq
    %v2785 = vshrl.u32 %v2784, 7
    %v2786 = vsub.s32 0, %v2785
    %v2787 = vrot.slane %v2782, %v2786
    %v2789 = vmul.f32 %v83, %v2787
    %v2790 = vmul.f32 %v88, %v2787
    %v2791 = vmul.f32 %v93, %v2787
    %v2792 = vmul.f32 %v98, %v2787
    %v2793 = vadd.f32 %v2789, %v113
    %v2794 = vadd.f32 %v2790, %v118
    %v2795 = vadd.f32 %v2791, %v123
    %v2796 = vadd.f32 %v2792, %v128
    %v2797 = vtanh.pop %v2793
    %v2798 = vtanh.pop %v2794
    %v2799 = vtanh.pop %v2795
    %v2800 = vtanh.pop %v2796
    %2801 = vmatprep.subr.mxu0 0.0
    %2802 = vmatpush1.msra.mxu0 %v2797
    %2803 = vmatprep.subr.mxu0 0.0
    %2804 = vmatpush1.msra.mxu0 %v2798
    %2805 = vmatprep.subr.mxu0 0.0
    %2806 = vmatpush1.msra.mxu0 %v2799
    %2807 = vmatprep.subr.mxu0 0.0
    %2808 = vmatpush1.msra.mxu0 %v2800
    %2809 = vmatprep.subr.mxu0 0.0
    %2810 = vmatpush1.msra.mxu0 0.0
    %2811 = vmatprep.subr.mxu0 0.0
    %2812 = vmatpush1.msra.mxu0 0.0
    %2813 = vmatprep.subr.mxu0 0.0
    %2814 = vmatpush1.msra.mxu0 0.0
    %2815 = vmatprep.subr.mxu0 0.0
    %2816 = vmatpush1.msra.mxu0 0.0
    %2817 = vmatprep.subr.mxu0 0.0
    %2818 = vmatpush1.msra.mxu0 0.0
    %2819 = vmatprep.subr.mxu0 0.0
    %2820 = vmatpush1.msra.mxu0 0.0
    %2821 = vmatprep.subr.mxu0 0.0
    %2822 = vmatpush1.msra.mxu0 0.0
    %2823 = vmatprep.subr.mxu0 0.0
    %2824 = vmatpush1.msra.mxu0 0.0
    %2825 = vmatprep.subr.mxu0 0.0
    %2826 = vmatpush1.msra.mxu0 0.0
    %2827 = vmatprep.subr.mxu0 0.0
    %2828 = vmatpush1.msra.mxu0 0.0
    %2829 = vmatprep.subr.mxu0 0.0
    %2830 = vmatpush1.msra.mxu0 0.0
    %2831 = vmatprep.subr.mxu0 0.0
    %2832 = vmatpush1.msra.mxu0 0.0
    %2833 = vmatprep.subr.mxu0 0.0
    %2834 = vmatpush1.msra.mxu0 0.0
    %2835 = vmatprep.subr.mxu0 0.0
    %2836 = vmatpush1.msra.mxu0 0.0
    %2837 = vmatprep.subr.mxu0 0.0
    %2838 = vmatpush1.msra.mxu0 0.0
    %2839 = vmatprep.subr.mxu0 0.0
    %2840 = vmatpush1.msra.mxu0 0.0
    %2841 = vmatprep.subr.mxu0 0.0
    %2842 = vmatpush1.msra.mxu0 0.0
    %2843 = vmatprep.subr.mxu0 0.0
    %2844 = vmatpush1.msra.mxu0 0.0
    %2845 = vmatprep.subr.mxu0 0.0
    %2846 = vmatpush1.msra.mxu0 0.0
    %2847 = vmatprep.subr.mxu0 0.0
    %2848 = vmatpush1.msra.mxu0 0.0
    %2849 = vmatprep.subr.mxu0 0.0
    %2850 = vmatpush1.msra.mxu0 0.0
    %2851 = vmatprep.subr.mxu0 0.0
    %2852 = vmatpush1.msra.mxu0 0.0
    %2853 = vmatprep.subr.mxu0 0.0
    %2854 = vmatpush1.msra.mxu0 0.0
    %2855 = vmatprep.subr.mxu0 0.0
    %2856 = vmatpush1.msra.mxu0 0.0
    %2857 = vmatprep.subr.mxu0 0.0
    %2858 = vmatpush1.msra.mxu0 0.0
    %2859 = vmatprep.subr.mxu0 0.0
    %2860 = vmatpush1.msra.mxu0 0.0
    %2861 = vmatprep.subr.mxu0 0.0
    %2862 = vmatpush1.msra.mxu0 0.0
    %2863 = vmatprep.subr.mxu0 0.0
    %2864 = vmatpush1.msra.mxu0 0.0
    %2865 = vmatprep.mubr.f32.mxu0 0.0
    %2866 = vmatmul.mubr.f32.gmra.mrb[0].mxu0 %v160
    %v2867 = vpop.f32.mrb[0].mxu0
    %v2868 = vadd.f32 %v141, %v2867
    %v2869 = vpop.f32.mrb[0].mxu0
    %2870 = vmatprep.mubr.f32.mxu0 0.0
    %2871 = vmatmul.mubr.f32.gmra.mrb[0].mxu0 %v163
    %v2872 = vpop.f32.mrb[0].mxu0
    %v2873 = vadd.f32 %v146, %v2872
    %v2874 = vpop.f32.mrb[0].mxu0
    %2875 = vmatprep.mubr.f32.mxu0 0.0
    %2876 = vmatmul.mubr.f32.gmra.mrb[0].mxu0 %v166
    %v2877 = vpop.f32.mrb[0].mxu0
    %v2878 = vadd.f32 %v151, %v2877
    %v2879 = vpop.f32.mrb[0].mxu0
    %2880 = vmatprep.mubr.f32.mxu0 0.0
    %2881 = vmatmul.mubr.f32.gmra.mrb[0].mxu0 %v169
    %v2882 = vpop.f32.mrb[0].mxu0
    %v2883 = vadd.f32 %v156, %v2882
    %v2884 = vpop.f32.mrb[0].mxu0
    %2885 = vdwg.mxu0
    %v2886 = vtanh.pop %v2868
    %v2887 = vtanh.pop %v2873
    %v2888 = vtanh.pop %v2878
    %v2889 = vtanh.pop %v2883
    %v2890 = vmul.f32 %v263, %v2886
    %v2891 = vmul.f32 %v268, %v2887
    %v2892 = vmul.f32 %v273, %v2888
    %v2893 = vmul.f32 %v278, %v2889
    %v2894 = vadd.f32 %v2890, %v2891
    %v2895 = vadd.f32 %v2894, %v2892
    %v2896 = vadd.f32 %v2895, %v2893
    %v2897 = vrot.slane %v2896, 4
    %v2898 = vadd.f32 %v2896, %v2897
    %v2899 = vrot.slane %v2898, 2
    %v2900 = vadd.f32 %v2898, %v2899
    %v2901 = vrot.slane %v2900, 1
    %v2902 = vadd.f32 %v2900, %v2901
    %v2903 = vadd.f32 %v2902, %v301
    %v2904 = vxor.u32 %v2903, 2147483648
    %v2905 = vmul.f32 %v2904, 1.442695
    %v2906 = vpow.pop %v2905
    %v2907 = vadd.f32 %v2906, 1.0
    %v2908 = vrcp.pop %v2907
    %v2909 = vmul.f32 1.0, %v2908
    %2910 = vrot.lane.b32.xlu0 %v2782, 1
    %v2911 = vpop.permute.xlu0 %2910
    %2912 = vrot.lane.b32.xlu0 %v2782, 127
    %v2913 = vpop.permute.xlu0 %2912
    %v2914 = vsel %vm73, 1.0, %v2911
    %v2915 = vmul.f32 %v2782, -1.0
    %v2916 = vadd.f32 %v2915, %v2914
    %v2917 = vadd.f32 %v2915, %v2913
    %v2918 = vsel %vm74, 0.0, %v2917
    %v2919 = vmul.f32 %v2909, %v318
    %v2920 = vadd.f32 %v2916, %v2918
    %v2921 = vmul.f32 %v2919, %v2920
    %v2922 = vstv %s2498
    %v2923 = vmul.f32 %v2922, %v2921
    %v2924 = vadd.f32 %v2494, %v2923
    %v2926 = vlaneseq
    %v2927 = vshrl.u32 %v2926, 7
    %v2928 = vsub.s32 0, %v2927
    %v2929 = vrot.slane %v2924, %v2928
    %v2931 = vmul.f32 %v83, %v2929
    %v2932 = vmul.f32 %v88, %v2929
    %v2933 = vmul.f32 %v93, %v2929
    %v2934 = vmul.f32 %v98, %v2929
    %v2935 = vadd.f32 %v2931, %v113
    %v2936 = vadd.f32 %v2932, %v118
    %v2937 = vadd.f32 %v2933, %v123
    %v2938 = vadd.f32 %v2934, %v128
    %v2939 = vtanh.pop %v2935
    %v2940 = vtanh.pop %v2936
    %v2941 = vtanh.pop %v2937
    %v2942 = vtanh.pop %v2938
    %2943 = vmatprep.subr.mxu0 0.0
    %2944 = vmatpush1.msra.mxu0 %v2939
    %2945 = vmatprep.subr.mxu0 0.0
    %2946 = vmatpush1.msra.mxu0 %v2940
    %2947 = vmatprep.subr.mxu0 0.0
    %2948 = vmatpush1.msra.mxu0 %v2941
    %2949 = vmatprep.subr.mxu0 0.0
    %2950 = vmatpush1.msra.mxu0 %v2942
    %2951 = vmatprep.subr.mxu0 0.0
    %2952 = vmatpush1.msra.mxu0 0.0
    %2953 = vmatprep.subr.mxu0 0.0
    %2954 = vmatpush1.msra.mxu0 0.0
    %2955 = vmatprep.subr.mxu0 0.0
    %2956 = vmatpush1.msra.mxu0 0.0
    %2957 = vmatprep.subr.mxu0 0.0
    %2958 = vmatpush1.msra.mxu0 0.0
    %2959 = vmatprep.subr.mxu0 0.0
    %2960 = vmatpush1.msra.mxu0 0.0
    %2961 = vmatprep.subr.mxu0 0.0
    %2962 = vmatpush1.msra.mxu0 0.0
    %2963 = vmatprep.subr.mxu0 0.0
    %2964 = vmatpush1.msra.mxu0 0.0
    %2965 = vmatprep.subr.mxu0 0.0
    %2966 = vmatpush1.msra.mxu0 0.0
    %2967 = vmatprep.subr.mxu0 0.0
    %2968 = vmatpush1.msra.mxu0 0.0
    %2969 = vmatprep.subr.mxu0 0.0
    %2970 = vmatpush1.msra.mxu0 0.0
    %2971 = vmatprep.subr.mxu0 0.0
    %2972 = vmatpush1.msra.mxu0 0.0
    %2973 = vmatprep.subr.mxu0 0.0
    %2974 = vmatpush1.msra.mxu0 0.0
    %2975 = vmatprep.subr.mxu0 0.0
    %2976 = vmatpush1.msra.mxu0 0.0
    %2977 = vmatprep.subr.mxu0 0.0
    %2978 = vmatpush1.msra.mxu0 0.0
    %2979 = vmatprep.subr.mxu0 0.0
    %2980 = vmatpush1.msra.mxu0 0.0
    %2981 = vmatprep.subr.mxu0 0.0
    %2982 = vmatpush1.msra.mxu0 0.0
    %2983 = vmatprep.subr.mxu0 0.0
    %2984 = vmatpush1.msra.mxu0 0.0
    %2985 = vmatprep.subr.mxu0 0.0
    %2986 = vmatpush1.msra.mxu0 0.0
    %2987 = vmatprep.subr.mxu0 0.0
    %2988 = vmatpush1.msra.mxu0 0.0
    %2989 = vmatprep.subr.mxu0 0.0
    %2990 = vmatpush1.msra.mxu0 0.0
    %2991 = vmatprep.subr.mxu0 0.0
    %2992 = vmatpush1.msra.mxu0 0.0
    %2993 = vmatprep.subr.mxu0 0.0
    %2994 = vmatpush1.msra.mxu0 0.0
    %2995 = vmatprep.subr.mxu0 0.0
    %2996 = vmatpush1.msra.mxu0 0.0
    %2997 = vmatprep.subr.mxu0 0.0
    %2998 = vmatpush1.msra.mxu0 0.0
    %2999 = vmatprep.subr.mxu0 0.0
    %3000 = vmatpush1.msra.mxu0 0.0
    %3001 = vmatprep.subr.mxu0 0.0
    %3002 = vmatpush1.msra.mxu0 0.0
    %3003 = vmatprep.subr.mxu0 0.0
    %3004 = vmatpush1.msra.mxu0 0.0
    %3005 = vmatprep.subr.mxu0 0.0
    %3006 = vmatpush1.msra.mxu0 0.0
    %3007 = vmatprep.mubr.f32.mxu0 0.0
    %3008 = vmatmul.mubr.f32.gmra.mrb[0].mxu0 %v160
    %v3009 = vpop.f32.mrb[0].mxu0
    %v3010 = vadd.f32 %v141, %v3009
    %v3011 = vpop.f32.mrb[0].mxu0
    %3012 = vmatprep.mubr.f32.mxu0 0.0
    %3013 = vmatmul.mubr.f32.gmra.mrb[0].mxu0 %v163
    %v3014 = vpop.f32.mrb[0].mxu0
    %v3015 = vadd.f32 %v146, %v3014
    %v3016 = vpop.f32.mrb[0].mxu0
    %3017 = vmatprep.mubr.f32.mxu0 0.0
    %3018 = vmatmul.mubr.f32.gmra.mrb[0].mxu0 %v166
    %v3019 = vpop.f32.mrb[0].mxu0
    %v3020 = vadd.f32 %v151, %v3019
    %v3021 = vpop.f32.mrb[0].mxu0
    %3022 = vmatprep.mubr.f32.mxu0 0.0
    %3023 = vmatmul.mubr.f32.gmra.mrb[0].mxu0 %v169
    %v3024 = vpop.f32.mrb[0].mxu0
    %v3025 = vadd.f32 %v156, %v3024
    %v3026 = vpop.f32.mrb[0].mxu0
    %3027 = vdwg.mxu0
    %v3028 = vtanh.pop %v3010
    %v3029 = vtanh.pop %v3015
    %v3030 = vtanh.pop %v3020
    %v3031 = vtanh.pop %v3025
    %v3032 = vmul.f32 %v263, %v3028
    %v3033 = vmul.f32 %v268, %v3029
    %v3034 = vmul.f32 %v273, %v3030
    %v3035 = vmul.f32 %v278, %v3031
    %v3036 = vadd.f32 %v3032, %v3033
    %v3037 = vadd.f32 %v3036, %v3034
    %v3038 = vadd.f32 %v3037, %v3035
    %v3039 = vrot.slane %v3038, 4
    %v3040 = vadd.f32 %v3038, %v3039
    %v3041 = vrot.slane %v3040, 2
    %v3042 = vadd.f32 %v3040, %v3041
    %v3043 = vrot.slane %v3042, 1
    %v3044 = vadd.f32 %v3042, %v3043
    %v3045 = vadd.f32 %v3044, %v301
    %v3046 = vxor.u32 %v3045, 2147483648
    %v3047 = vmul.f32 %v3046, 1.442695
    %v3048 = vpow.pop %v3047
    %v3049 = vadd.f32 %v3048, 1.0
    %v3050 = vrcp.pop %v3049
    %v3051 = vmul.f32 1.0, %v3050
    %3052 = vrot.lane.b32.xlu0 %v2924, 1
    %v3053 = vpop.permute.xlu0 %3052
    %3054 = vrot.lane.b32.xlu0 %v2924, 127
    %v3055 = vpop.permute.xlu0 %3054
    %v3056 = vsel %vm73, 1.0, %v3053
    %v3057 = vmul.f32 %v2924, -1.0
    %v3058 = vadd.f32 %v3057, %v3056
    %v3059 = vadd.f32 %v3057, %v3055
    %v3060 = vsel %vm74, 0.0, %v3059
    %v3061 = vmul.f32 %v3051, %v318
    %v3062 = vadd.f32 %v3058, %v3060
    %v3063 = vmul.f32 %v3061, %v3062
    %v3064 = vrcp.pop 6.0
    %s3065 = vtos %v3064
    %s3066 = smul.f32 %s2498, %s3065
    %v3067 = vadd.f32 %v2780, %v2921
    %v3068 = vmul.f32 %v3067, 2.0
    %v3069 = vadd.f32 %v2637, %v3068
    %v3070 = vadd.f32 %v3069, %v3063
    %v3071 = vstv %s3066
    %v3072 = vmul.f32 %v3071, %v3070
    %v3073 = vadd.f32 %v2494, %v3072
    %3074 = vst [vmem:[#allocation7 + $0x5] sm:$0x1] %v3073
    %s3075 = sld [smem:[#allocation4 + $0x5]]
    %s3076 = sld [smem:[#allocation4 + $0x6]]
    %s3077 = ssub.f32 %s3076, %s3075
    %v3079 = vlaneseq
    %v3080 = vshrl.u32 %v3079, 7
    %v3081 = vsub.s32 0, %v3080
    %v3082 = vrot.slane %v3073, %v3081
    %v3084 = vmul.f32 %v83, %v3082
    %v3085 = vmul.f32 %v88, %v3082
    %v3086 = vmul.f32 %v93, %v3082
    %v3087 = vmul.f32 %v98, %v3082
    %v3088 = vadd.f32 %v3084, %v113
    %v3089 = vadd.f32 %v3085, %v118
    %v3090 = vadd.f32 %v3086, %v123
    %v3091 = vadd.f32 %v3087, %v128
    %v3092 = vtanh.pop %v3088
    %v3093 = vtanh.pop %v3089
    %v3094 = vtanh.pop %v3090
    %v3095 = vtanh.pop %v3091
    %3096 = vmatprep.subr.mxu0 0.0
    %3097 = vmatpush1.msra.mxu0 %v3092
    %3098 = vmatprep.subr.mxu0 0.0
    %3099 = vmatpush1.msra.mxu0 %v3093
    %3100 = vmatprep.subr.mxu0 0.0
    %3101 = vmatpush1.msra.mxu0 %v3094
    %3102 = vmatprep.subr.mxu0 0.0
    %3103 = vmatpush1.msra.mxu0 %v3095
    %3104 = vmatprep.subr.mxu0 0.0
    %3105 = vmatpush1.msra.mxu0 0.0
    %3106 = vmatprep.subr.mxu0 0.0
    %3107 = vmatpush1.msra.mxu0 0.0
    %3108 = vmatprep.subr.mxu0 0.0
    %3109 = vmatpush1.msra.mxu0 0.0
    %3110 = vmatprep.subr.mxu0 0.0
    %3111 = vmatpush1.msra.mxu0 0.0
    %3112 = vmatprep.subr.mxu0 0.0
    %3113 = vmatpush1.msra.mxu0 0.0
    %3114 = vmatprep.subr.mxu0 0.0
    %3115 = vmatpush1.msra.mxu0 0.0
    %3116 = vmatprep.subr.mxu0 0.0
    %3117 = vmatpush1.msra.mxu0 0.0
    %3118 = vmatprep.subr.mxu0 0.0
    %3119 = vmatpush1.msra.mxu0 0.0
    %3120 = vmatprep.subr.mxu0 0.0
    %3121 = vmatpush1.msra.mxu0 0.0
    %3122 = vmatprep.subr.mxu0 0.0
    %3123 = vmatpush1.msra.mxu0 0.0
    %3124 = vmatprep.subr.mxu0 0.0
    %3125 = vmatpush1.msra.mxu0 0.0
    %3126 = vmatprep.subr.mxu0 0.0
    %3127 = vmatpush1.msra.mxu0 0.0
    %3128 = vmatprep.subr.mxu0 0.0
    %3129 = vmatpush1.msra.mxu0 0.0
    %3130 = vmatprep.subr.mxu0 0.0
    %3131 = vmatpush1.msra.mxu0 0.0
    %3132 = vmatprep.subr.mxu0 0.0
    %3133 = vmatpush1.msra.mxu0 0.0
    %3134 = vmatprep.subr.mxu0 0.0
    %3135 = vmatpush1.msra.mxu0 0.0
    %3136 = vmatprep.subr.mxu0 0.0
    %3137 = vmatpush1.msra.mxu0 0.0
    %3138 = vmatprep.subr.mxu0 0.0
    %3139 = vmatpush1.msra.mxu0 0.0
    %3140 = vmatprep.subr.mxu0 0.0
    %3141 = vmatpush1.msra.mxu0 0.0
    %3142 = vmatprep.subr.mxu0 0.0
    %3143 = vmatpush1.msra.mxu0 0.0
    %3144 = vmatprep.subr.mxu0 0.0
    %3145 = vmatpush1.msra.mxu0 0.0
    %3146 = vmatprep.subr.mxu0 0.0
    %3147 = vmatpush1.msra.mxu0 0.0
    %3148 = vmatprep.subr.mxu0 0.0
    %3149 = vmatpush1.msra.mxu0 0.0
    %3150 = vmatprep.subr.mxu0 0.0
    %3151 = vmatpush1.msra.mxu0 0.0
    %3152 = vmatprep.subr.mxu0 0.0
    %3153 = vmatpush1.msra.mxu0 0.0
    %3154 = vmatprep.subr.mxu0 0.0
    %3155 = vmatpush1.msra.mxu0 0.0
    %3156 = vmatprep.subr.mxu0 0.0
    %3157 = vmatpush1.msra.mxu0 0.0
    %3158 = vmatprep.subr.mxu0 0.0
    %3159 = vmatpush1.msra.mxu0 0.0
    %3160 = vmatprep.mubr.f32.mxu0 0.0
    %3161 = vmatmul.mubr.f32.gmra.mrb[0].mxu0 %v160
    %v3162 = vpop.f32.mrb[0].mxu0
    %v3163 = vadd.f32 %v141, %v3162
    %v3164 = vpop.f32.mrb[0].mxu0
    %3165 = vmatprep.mubr.f32.mxu0 0.0
    %3166 = vmatmul.mubr.f32.gmra.mrb[0].mxu0 %v163
    %v3167 = vpop.f32.mrb[0].mxu0
    %v3168 = vadd.f32 %v146, %v3167
    %v3169 = vpop.f32.mrb[0].mxu0
    %3170 = vmatprep.mubr.f32.mxu0 0.0
    %3171 = vmatmul.mubr.f32.gmra.mrb[0].mxu0 %v166
    %v3172 = vpop.f32.mrb[0].mxu0
    %v3173 = vadd.f32 %v151, %v3172
    %v3174 = vpop.f32.mrb[0].mxu0
    %3175 = vmatprep.mubr.f32.mxu0 0.0
    %3176 = vmatmul.mubr.f32.gmra.mrb[0].mxu0 %v169
    %v3177 = vpop.f32.mrb[0].mxu0
    %v3178 = vadd.f32 %v156, %v3177
    %v3179 = vpop.f32.mrb[0].mxu0
    %3180 = vdwg.mxu0
    %v3181 = vtanh.pop %v3163
    %v3182 = vtanh.pop %v3168
    %v3183 = vtanh.pop %v3173
    %v3184 = vtanh.pop %v3178
    %v3185 = vmul.f32 %v263, %v3181
    %v3186 = vmul.f32 %v268, %v3182
    %v3187 = vmul.f32 %v273, %v3183
    %v3188 = vmul.f32 %v278, %v3184
    %v3189 = vadd.f32 %v3185, %v3186
    %v3190 = vadd.f32 %v3189, %v3187
    %v3191 = vadd.f32 %v3190, %v3188
    %v3192 = vrot.slane %v3191, 4
    %v3193 = vadd.f32 %v3191, %v3192
    %v3194 = vrot.slane %v3193, 2
    %v3195 = vadd.f32 %v3193, %v3194
    %v3196 = vrot.slane %v3195, 1
    %v3197 = vadd.f32 %v3195, %v3196
    %v3198 = vadd.f32 %v3197, %v301
    %v3199 = vxor.u32 %v3198, 2147483648
    %v3200 = vmul.f32 %v3199, 1.442695
    %v3201 = vpow.pop %v3200
    %v3202 = vadd.f32 %v3201, 1.0
    %v3203 = vrcp.pop %v3202
    %v3204 = vmul.f32 1.0, %v3203
    %3205 = vrot.lane.b32.xlu0 %v3073, 1
    %v3206 = vpop.permute.xlu0 %3205
    %3207 = vrot.lane.b32.xlu0 %v3073, 127
    %v3208 = vpop.permute.xlu0 %3207
    %v3209 = vsel %vm73, 1.0, %v3206
    %v3210 = vmul.f32 %v3073, -1.0
    %v3211 = vadd.f32 %v3210, %v3209
    %v3212 = vadd.f32 %v3210, %v3208
    %v3213 = vsel %vm74, 0.0, %v3212
    %v3214 = vmul.f32 %v3204, %v318
    %v3215 = vadd.f32 %v3211, %v3213
    %v3216 = vmul.f32 %v3214, %v3215
    %s3217 = smul.f32 %s3077, 0.5
    %v3218 = vstv %s3217
    %v3219 = vmul.f32 %v3218, %v3216
    %v3220 = vadd.f32 %v3073, %v3219
    %v3222 = vlaneseq
    %v3223 = vshrl.u32 %v3222, 7
    %v3224 = vsub.s32 0, %v3223
    %v3225 = vrot.slane %v3220, %v3224
    %v3227 = vmul.f32 %v83, %v3225
    %v3228 = vmul.f32 %v88, %v3225
    %v3229 = vmul.f32 %v93, %v3225
    %v3230 = vmul.f32 %v98, %v3225
    %v3231 = vadd.f32 %v3227, %v113
    %v3232 = vadd.f32 %v3228, %v118
    %v3233 = vadd.f32 %v3229, %v123
    %v3234 = vadd.f32 %v3230, %v128
    %v3235 = vtanh.pop %v3231
    %v3236 = vtanh.pop %v3232
    %v3237 = vtanh.pop %v3233
    %v3238 = vtanh.pop %v3234
    %3239 = vmatprep.subr.mxu0 0.0
    %3240 = vmatpush1.msra.mxu0 %v3235
    %3241 = vmatprep.subr.mxu0 0.0
    %3242 = vmatpush1.msra.mxu0 %v3236
    %3243 = vmatprep.subr.mxu0 0.0
    %3244 = vmatpush1.msra.mxu0 %v3237
    %3245 = vmatprep.subr.mxu0 0.0
    %3246 = vmatpush1.msra.mxu0 %v3238
    %3247 = vmatprep.subr.mxu0 0.0
    %3248 = vmatpush1.msra.mxu0 0.0
    %3249 = vmatprep.subr.mxu0 0.0
    %3250 = vmatpush1.msra.mxu0 0.0
    %3251 = vmatprep.subr.mxu0 0.0
    %3252 = vmatpush1.msra.mxu0 0.0
    %3253 = vmatprep.subr.mxu0 0.0
    %3254 = vmatpush1.msra.mxu0 0.0
    %3255 = vmatprep.subr.mxu0 0.0
    %3256 = vmatpush1.msra.mxu0 0.0
    %3257 = vmatprep.subr.mxu0 0.0
    %3258 = vmatpush1.msra.mxu0 0.0
    %3259 = vmatprep.subr.mxu0 0.0
    %3260 = vmatpush1.msra.mxu0 0.0
    %3261 = vmatprep.subr.mxu0 0.0
    %3262 = vmatpush1.msra.mxu0 0.0
    %3263 = vmatprep.subr.mxu0 0.0
    %3264 = vmatpush1.msra.mxu0 0.0
    %3265 = vmatprep.subr.mxu0 0.0
    %3266 = vmatpush1.msra.mxu0 0.0
    %3267 = vmatprep.subr.mxu0 0.0
    %3268 = vmatpush1.msra.mxu0 0.0
    %3269 = vmatprep.subr.mxu0 0.0
    %3270 = vmatpush1.msra.mxu0 0.0
    %3271 = vmatprep.subr.mxu0 0.0
    %3272 = vmatpush1.msra.mxu0 0.0
    %3273 = vmatprep.subr.mxu0 0.0
    %3274 = vmatpush1.msra.mxu0 0.0
    %3275 = vmatprep.subr.mxu0 0.0
    %3276 = vmatpush1.msra.mxu0 0.0
    %3277 = vmatprep.subr.mxu0 0.0
    %3278 = vmatpush1.msra.mxu0 0.0
    %3279 = vmatprep.subr.mxu0 0.0
    %3280 = vmatpush1.msra.mxu0 0.0
    %3281 = vmatprep.subr.mxu0 0.0
    %3282 = vmatpush1.msra.mxu0 0.0
    %3283 = vmatprep.subr.mxu0 0.0
    %3284 = vmatpush1.msra.mxu0 0.0
    %3285 = vmatprep.subr.mxu0 0.0
    %3286 = vmatpush1.msra.mxu0 0.0
    %3287 = vmatprep.subr.mxu0 0.0
    %3288 = vmatpush1.msra.mxu0 0.0
    %3289 = vmatprep.subr.mxu0 0.0
    %3290 = vmatpush1.msra.mxu0 0.0
    %3291 = vmatprep.subr.mxu0 0.0
    %3292 = vmatpush1.msra.mxu0 0.0
    %3293 = vmatprep.subr.mxu0 0.0
    %3294 = vmatpush1.msra.mxu0 0.0
    %3295 = vmatprep.subr.mxu0 0.0
    %3296 = vmatpush1.msra.mxu0 0.0
    %3297 = vmatprep.subr.mxu0 0.0
    %3298 = vmatpush1.msra.mxu0 0.0
    %3299 = vmatprep.subr.mxu0 0.0
    %3300 = vmatpush1.msra.mxu0 0.0
    %3301 = vmatprep.subr.mxu0 0.0
    %3302 = vmatpush1.msra.mxu0 0.0
    %3303 = vmatprep.mubr.f32.mxu0 0.0
    %3304 = vmatmul.mubr.f32.gmra.mrb[0].mxu0 %v160
    %v3305 = vpop.f32.mrb[0].mxu0
    %v3306 = vadd.f32 %v141, %v3305
    %v3307 = vpop.f32.mrb[0].mxu0
    %3308 = vmatprep.mubr.f32.mxu0 0.0
    %3309 = vmatmul.mubr.f32.gmra.mrb[0].mxu0 %v163
    %v3310 = vpop.f32.mrb[0].mxu0
    %v3311 = vadd.f32 %v146, %v3310
    %v3312 = vpop.f32.mrb[0].mxu0
    %3313 = vmatprep.mubr.f32.mxu0 0.0
    %3314 = vmatmul.mubr.f32.gmra.mrb[0].mxu0 %v166
    %v3315 = vpop.f32.mrb[0].mxu0
    %v3316 = vadd.f32 %v151, %v3315
    %v3317 = vpop.f32.mrb[0].mxu0
    %3318 = vmatprep.mubr.f32.mxu0 0.0
    %3319 = vmatmul.mubr.f32.gmra.mrb[0].mxu0 %v169
    %v3320 = vpop.f32.mrb[0].mxu0
    %v3321 = vadd.f32 %v156, %v3320
    %v3322 = vpop.f32.mrb[0].mxu0
    %3323 = vdwg.mxu0
    %v3324 = vtanh.pop %v3306
    %v3325 = vtanh.pop %v3311
    %v3326 = vtanh.pop %v3316
    %v3327 = vtanh.pop %v3321
    %v3328 = vmul.f32 %v263, %v3324
    %v3329 = vmul.f32 %v268, %v3325
    %v3330 = vmul.f32 %v273, %v3326
    %v3331 = vmul.f32 %v278, %v3327
    %v3332 = vadd.f32 %v3328, %v3329
    %v3333 = vadd.f32 %v3332, %v3330
    %v3334 = vadd.f32 %v3333, %v3331
    %v3335 = vrot.slane %v3334, 4
    %v3336 = vadd.f32 %v3334, %v3335
    %v3337 = vrot.slane %v3336, 2
    %v3338 = vadd.f32 %v3336, %v3337
    %v3339 = vrot.slane %v3338, 1
    %v3340 = vadd.f32 %v3338, %v3339
    %v3341 = vadd.f32 %v3340, %v301
    %v3342 = vxor.u32 %v3341, 2147483648
    %v3343 = vmul.f32 %v3342, 1.442695
    %v3344 = vpow.pop %v3343
    %v3345 = vadd.f32 %v3344, 1.0
    %v3346 = vrcp.pop %v3345
    %v3347 = vmul.f32 1.0, %v3346
    %3348 = vrot.lane.b32.xlu0 %v3220, 1
    %v3349 = vpop.permute.xlu0 %3348
    %3350 = vrot.lane.b32.xlu0 %v3220, 127
    %v3351 = vpop.permute.xlu0 %3350
    %v3352 = vsel %vm73, 1.0, %v3349
    %v3353 = vmul.f32 %v3220, -1.0
    %v3354 = vadd.f32 %v3353, %v3352
    %v3355 = vadd.f32 %v3353, %v3351
    %v3356 = vsel %vm74, 0.0, %v3355
    %v3357 = vmul.f32 %v3347, %v318
    %v3358 = vadd.f32 %v3354, %v3356
    %v3359 = vmul.f32 %v3357, %v3358
    %v3360 = vmul.f32 %v3218, %v3359
    %v3361 = vadd.f32 %v3073, %v3360
    %v3363 = vlaneseq
    %v3364 = vshrl.u32 %v3363, 7
    %v3365 = vsub.s32 0, %v3364
    %v3366 = vrot.slane %v3361, %v3365
    %v3368 = vmul.f32 %v83, %v3366
    %v3369 = vmul.f32 %v88, %v3366
    %v3370 = vmul.f32 %v93, %v3366
    %v3371 = vmul.f32 %v98, %v3366
    %v3372 = vadd.f32 %v3368, %v113
    %v3373 = vadd.f32 %v3369, %v118
    %v3374 = vadd.f32 %v3370, %v123
    %v3375 = vadd.f32 %v3371, %v128
    %v3376 = vtanh.pop %v3372
    %v3377 = vtanh.pop %v3373
    %v3378 = vtanh.pop %v3374
    %v3379 = vtanh.pop %v3375
    %3380 = vmatprep.subr.mxu0 0.0
    %3381 = vmatpush1.msra.mxu0 %v3376
    %3382 = vmatprep.subr.mxu0 0.0
    %3383 = vmatpush1.msra.mxu0 %v3377
    %3384 = vmatprep.subr.mxu0 0.0
    %3385 = vmatpush1.msra.mxu0 %v3378
    %3386 = vmatprep.subr.mxu0 0.0
    %3387 = vmatpush1.msra.mxu0 %v3379
    %3388 = vmatprep.subr.mxu0 0.0
    %3389 = vmatpush1.msra.mxu0 0.0
    %3390 = vmatprep.subr.mxu0 0.0
    %3391 = vmatpush1.msra.mxu0 0.0
    %3392 = vmatprep.subr.mxu0 0.0
    %3393 = vmatpush1.msra.mxu0 0.0
    %3394 = vmatprep.subr.mxu0 0.0
    %3395 = vmatpush1.msra.mxu0 0.0
    %3396 = vmatprep.subr.mxu0 0.0
    %3397 = vmatpush1.msra.mxu0 0.0
    %3398 = vmatprep.subr.mxu0 0.0
    %3399 = vmatpush1.msra.mxu0 0.0
    %3400 = vmatprep.subr.mxu0 0.0
    %3401 = vmatpush1.msra.mxu0 0.0
    %3402 = vmatprep.subr.mxu0 0.0
    %3403 = vmatpush1.msra.mxu0 0.0
    %3404 = vmatprep.subr.mxu0 0.0
    %3405 = vmatpush1.msra.mxu0 0.0
    %3406 = vmatprep.subr.mxu0 0.0
    %3407 = vmatpush1.msra.mxu0 0.0
    %3408 = vmatprep.subr.mxu0 0.0
    %3409 = vmatpush1.msra.mxu0 0.0
    %3410 = vmatprep.subr.mxu0 0.0
    %3411 = vmatpush1.msra.mxu0 0.0
    %3412 = vmatprep.subr.mxu0 0.0
    %3413 = vmatpush1.msra.mxu0 0.0
    %3414 = vmatprep.subr.mxu0 0.0
    %3415 = vmatpush1.msra.mxu0 0.0
    %3416 = vmatprep.subr.mxu0 0.0
    %3417 = vmatpush1.msra.mxu0 0.0
    %3418 = vmatprep.subr.mxu0 0.0
    %3419 = vmatpush1.msra.mxu0 0.0
    %3420 = vmatprep.subr.mxu0 0.0
    %3421 = vmatpush1.msra.mxu0 0.0
    %3422 = vmatprep.subr.mxu0 0.0
    %3423 = vmatpush1.msra.mxu0 0.0
    %3424 = vmatprep.subr.mxu0 0.0
    %3425 = vmatpush1.msra.mxu0 0.0
    %3426 = vmatprep.subr.mxu0 0.0
    %3427 = vmatpush1.msra.mxu0 0.0
    %3428 = vmatprep.subr.mxu0 0.0
    %3429 = vmatpush1.msra.mxu0 0.0
    %3430 = vmatprep.subr.mxu0 0.0
    %3431 = vmatpush1.msra.mxu0 0.0
    %3432 = vmatprep.subr.mxu0 0.0
    %3433 = vmatpush1.msra.mxu0 0.0
    %3434 = vmatprep.subr.mxu0 0.0
    %3435 = vmatpush1.msra.mxu0 0.0
    %3436 = vmatprep.subr.mxu0 0.0
    %3437 = vmatpush1.msra.mxu0 0.0
    %3438 = vmatprep.subr.mxu0 0.0
    %3439 = vmatpush1.msra.mxu0 0.0
    %3440 = vmatprep.subr.mxu0 0.0
    %3441 = vmatpush1.msra.mxu0 0.0
    %3442 = vmatprep.subr.mxu0 0.0
    %3443 = vmatpush1.msra.mxu0 0.0
    %3444 = vmatprep.mubr.f32.mxu0 0.0
    %3445 = vmatmul.mubr.f32.gmra.mrb[0].mxu0 %v160
    %v3446 = vpop.f32.mrb[0].mxu0
    %v3447 = vadd.f32 %v141, %v3446
    %v3448 = vpop.f32.mrb[0].mxu0
    %3449 = vmatprep.mubr.f32.mxu0 0.0
    %3450 = vmatmul.mubr.f32.gmra.mrb[0].mxu0 %v163
    %v3451 = vpop.f32.mrb[0].mxu0
    %v3452 = vadd.f32 %v146, %v3451
    %v3453 = vpop.f32.mrb[0].mxu0
    %3454 = vmatprep.mubr.f32.mxu0 0.0
    %3455 = vmatmul.mubr.f32.gmra.mrb[0].mxu0 %v166
    %v3456 = vpop.f32.mrb[0].mxu0
    %v3457 = vadd.f32 %v151, %v3456
    %v3458 = vpop.f32.mrb[0].mxu0
    %3459 = vmatprep.mubr.f32.mxu0 0.0
    %3460 = vmatmul.mubr.f32.gmra.mrb[0].mxu0 %v169
    %v3461 = vpop.f32.mrb[0].mxu0
    %v3462 = vadd.f32 %v156, %v3461
    %v3463 = vpop.f32.mrb[0].mxu0
    %3464 = vdwg.mxu0
    %v3465 = vtanh.pop %v3447
    %v3466 = vtanh.pop %v3452
    %v3467 = vtanh.pop %v3457
    %v3468 = vtanh.pop %v3462
    %v3469 = vmul.f32 %v263, %v3465
    %v3470 = vmul.f32 %v268, %v3466
    %v3471 = vmul.f32 %v273, %v3467
    %v3472 = vmul.f32 %v278, %v3468
    %v3473 = vadd.f32 %v3469, %v3470
    %v3474 = vadd.f32 %v3473, %v3471
    %v3475 = vadd.f32 %v3474, %v3472
    %v3476 = vrot.slane %v3475, 4
    %v3477 = vadd.f32 %v3475, %v3476
    %v3478 = vrot.slane %v3477, 2
    %v3479 = vadd.f32 %v3477, %v3478
    %v3480 = vrot.slane %v3479, 1
    %v3481 = vadd.f32 %v3479, %v3480
    %v3482 = vadd.f32 %v3481, %v301
    %v3483 = vxor.u32 %v3482, 2147483648
    %v3484 = vmul.f32 %v3483, 1.442695
    %v3485 = vpow.pop %v3484
    %v3486 = vadd.f32 %v3485, 1.0
    %v3487 = vrcp.pop %v3486
    %v3488 = vmul.f32 1.0, %v3487
    %3489 = vrot.lane.b32.xlu0 %v3361, 1
    %v3490 = vpop.permute.xlu0 %3489
    %3491 = vrot.lane.b32.xlu0 %v3361, 127
    %v3492 = vpop.permute.xlu0 %3491
    %v3493 = vsel %vm73, 1.0, %v3490
    %v3494 = vmul.f32 %v3361, -1.0
    %v3495 = vadd.f32 %v3494, %v3493
    %v3496 = vadd.f32 %v3494, %v3492
    %v3497 = vsel %vm74, 0.0, %v3496
    %v3498 = vmul.f32 %v3488, %v318
    %v3499 = vadd.f32 %v3495, %v3497
    %v3500 = vmul.f32 %v3498, %v3499
    %v3501 = vstv %s3077
    %v3502 = vmul.f32 %v3501, %v3500
    %v3503 = vadd.f32 %v3073, %v3502
    %v3505 = vlaneseq
    %v3506 = vshrl.u32 %v3505, 7
    %v3507 = vsub.s32 0, %v3506
    %v3508 = vrot.slane %v3503, %v3507
    %v3510 = vmul.f32 %v83, %v3508
    %v3511 = vmul.f32 %v88, %v3508
    %v3512 = vmul.f32 %v93, %v3508
    %v3513 = vmul.f32 %v98, %v3508
    %v3514 = vadd.f32 %v3510, %v113
    %v3515 = vadd.f32 %v3511, %v118
    %v3516 = vadd.f32 %v3512, %v123
    %v3517 = vadd.f32 %v3513, %v128
    %v3518 = vtanh.pop %v3514
    %v3519 = vtanh.pop %v3515
    %v3520 = vtanh.pop %v3516
    %v3521 = vtanh.pop %v3517
    %3522 = vmatprep.subr.mxu0 0.0
    %3523 = vmatpush1.msra.mxu0 %v3518
    %3524 = vmatprep.subr.mxu0 0.0
    %3525 = vmatpush1.msra.mxu0 %v3519
    %3526 = vmatprep.subr.mxu0 0.0
    %3527 = vmatpush1.msra.mxu0 %v3520
    %3528 = vmatprep.subr.mxu0 0.0
    %3529 = vmatpush1.msra.mxu0 %v3521
    %3530 = vmatprep.subr.mxu0 0.0
    %3531 = vmatpush1.msra.mxu0 0.0
    %3532 = vmatprep.subr.mxu0 0.0
    %3533 = vmatpush1.msra.mxu0 0.0
    %3534 = vmatprep.subr.mxu0 0.0
    %3535 = vmatpush1.msra.mxu0 0.0
    %3536 = vmatprep.subr.mxu0 0.0
    %3537 = vmatpush1.msra.mxu0 0.0
    %3538 = vmatprep.subr.mxu0 0.0
    %3539 = vmatpush1.msra.mxu0 0.0
    %3540 = vmatprep.subr.mxu0 0.0
    %3541 = vmatpush1.msra.mxu0 0.0
    %3542 = vmatprep.subr.mxu0 0.0
    %3543 = vmatpush1.msra.mxu0 0.0
    %3544 = vmatprep.subr.mxu0 0.0
    %3545 = vmatpush1.msra.mxu0 0.0
    %3546 = vmatprep.subr.mxu0 0.0
    %3547 = vmatpush1.msra.mxu0 0.0
    %3548 = vmatprep.subr.mxu0 0.0
    %3549 = vmatpush1.msra.mxu0 0.0
    %3550 = vmatprep.subr.mxu0 0.0
    %3551 = vmatpush1.msra.mxu0 0.0
    %3552 = vmatprep.subr.mxu0 0.0
    %3553 = vmatpush1.msra.mxu0 0.0
    %3554 = vmatprep.subr.mxu0 0.0
    %3555 = vmatpush1.msra.mxu0 0.0
    %3556 = vmatprep.subr.mxu0 0.0
    %3557 = vmatpush1.msra.mxu0 0.0
    %3558 = vmatprep.subr.mxu0 0.0
    %3559 = vmatpush1.msra.mxu0 0.0
    %3560 = vmatprep.subr.mxu0 0.0
    %3561 = vmatpush1.msra.mxu0 0.0
    %3562 = vmatprep.subr.mxu0 0.0
    %3563 = vmatpush1.msra.mxu0 0.0
    %3564 = vmatprep.subr.mxu0 0.0
    %3565 = vmatpush1.msra.mxu0 0.0
    %3566 = vmatprep.subr.mxu0 0.0
    %3567 = vmatpush1.msra.mxu0 0.0
    %3568 = vmatprep.subr.mxu0 0.0
    %3569 = vmatpush1.msra.mxu0 0.0
    %3570 = vmatprep.subr.mxu0 0.0
    %3571 = vmatpush1.msra.mxu0 0.0
    %3572 = vmatprep.subr.mxu0 0.0
    %3573 = vmatpush1.msra.mxu0 0.0
    %3574 = vmatprep.subr.mxu0 0.0
    %3575 = vmatpush1.msra.mxu0 0.0
    %3576 = vmatprep.subr.mxu0 0.0
    %3577 = vmatpush1.msra.mxu0 0.0
    %3578 = vmatprep.subr.mxu0 0.0
    %3579 = vmatpush1.msra.mxu0 0.0
    %3580 = vmatprep.subr.mxu0 0.0
    %3581 = vmatpush1.msra.mxu0 0.0
    %3582 = vmatprep.subr.mxu0 0.0
    %3583 = vmatpush1.msra.mxu0 0.0
    %3584 = vmatprep.subr.mxu0 0.0
    %3585 = vmatpush1.msra.mxu0 0.0
    %3586 = vmatprep.mubr.f32.mxu0 0.0
    %3587 = vmatmul.mubr.f32.gmra.mrb[0].mxu0 %v160
    %v3588 = vpop.f32.mrb[0].mxu0
    %v3589 = vadd.f32 %v141, %v3588
    %v3590 = vpop.f32.mrb[0].mxu0
    %3591 = vmatprep.mubr.f32.mxu0 0.0
    %3592 = vmatmul.mubr.f32.gmra.mrb[0].mxu0 %v163
    %v3593 = vpop.f32.mrb[0].mxu0
    %v3594 = vadd.f32 %v146, %v3593
    %v3595 = vpop.f32.mrb[0].mxu0
    %3596 = vmatprep.mubr.f32.mxu0 0.0
    %3597 = vmatmul.mubr.f32.gmra.mrb[0].mxu0 %v166
    %v3598 = vpop.f32.mrb[0].mxu0
    %v3599 = vadd.f32 %v151, %v3598
    %v3600 = vpop.f32.mrb[0].mxu0
    %3601 = vmatprep.mubr.f32.mxu0 0.0
    %3602 = vmatmul.mubr.f32.gmra.mrb[0].mxu0 %v169
    %v3603 = vpop.f32.mrb[0].mxu0
    %v3604 = vadd.f32 %v156, %v3603
    %v3605 = vpop.f32.mrb[0].mxu0
    %3606 = vdwg.mxu0
    %v3607 = vtanh.pop %v3589
    %v3608 = vtanh.pop %v3594
    %v3609 = vtanh.pop %v3599
    %v3610 = vtanh.pop %v3604
    %v3611 = vmul.f32 %v263, %v3607
    %v3612 = vmul.f32 %v268, %v3608
    %v3613 = vmul.f32 %v273, %v3609
    %v3614 = vmul.f32 %v278, %v3610
    %v3615 = vadd.f32 %v3611, %v3612
    %v3616 = vadd.f32 %v3615, %v3613
    %v3617 = vadd.f32 %v3616, %v3614
    %v3618 = vrot.slane %v3617, 4
    %v3619 = vadd.f32 %v3617, %v3618
    %v3620 = vrot.slane %v3619, 2
    %v3621 = vadd.f32 %v3619, %v3620
    %v3622 = vrot.slane %v3621, 1
    %v3623 = vadd.f32 %v3621, %v3622
    %v3624 = vadd.f32 %v3623, %v301
    %v3625 = vxor.u32 %v3624, 2147483648
    %v3626 = vmul.f32 %v3625, 1.442695
    %v3627 = vpow.pop %v3626
    %v3628 = vadd.f32 %v3627, 1.0
    %v3629 = vrcp.pop %v3628
    %v3630 = vmul.f32 1.0, %v3629
    %3631 = vrot.lane.b32.xlu0 %v3503, 1
    %v3632 = vpop.permute.xlu0 %3631
    %3633 = vrot.lane.b32.xlu0 %v3503, 127
    %v3634 = vpop.permute.xlu0 %3633
    %v3635 = vsel %vm73, 1.0, %v3632
    %v3636 = vmul.f32 %v3503, -1.0
    %v3637 = vadd.f32 %v3636, %v3635
    %v3638 = vadd.f32 %v3636, %v3634
    %v3639 = vsel %vm74, 0.0, %v3638
    %v3640 = vmul.f32 %v3630, %v318
    %v3641 = vadd.f32 %v3637, %v3639
    %v3642 = vmul.f32 %v3640, %v3641
    %v3643 = vrcp.pop 6.0
    %s3644 = vtos %v3643
    %s3645 = smul.f32 %s3077, %s3644
    %v3646 = vadd.f32 %v3359, %v3500
    %v3647 = vmul.f32 %v3646, 2.0
    %v3648 = vadd.f32 %v3216, %v3647
    %v3649 = vadd.f32 %v3648, %v3642
    %v3650 = vstv %s3645
    %v3651 = vmul.f32 %v3650, %v3649
    %v3652 = vadd.f32 %v3073, %v3651
    %3653 = vst [vmem:[#allocation7 + $0x6] sm:$0x1] %v3652
    %s3654 = sld [smem:[#allocation4 + $0x6]]
    %s3655 = sld [smem:[#allocation4 + $0x7]]
    %s3656 = ssub.f32 %s3655, %s3654
    %v3658 = vlaneseq
    %v3659 = vshrl.u32 %v3658, 7
    %v3660 = vsub.s32 0, %v3659
    %v3661 = vrot.slane %v3652, %v3660
    %v3663 = vmul.f32 %v83, %v3661
    %v3664 = vmul.f32 %v88, %v3661
    %v3665 = vmul.f32 %v93, %v3661
    %v3666 = vmul.f32 %v98, %v3661
    %v3667 = vadd.f32 %v3663, %v113
    %v3668 = vadd.f32 %v3664, %v118
    %v3669 = vadd.f32 %v3665, %v123
    %v3670 = vadd.f32 %v3666, %v128
    %v3671 = vtanh.pop %v3667
    %v3672 = vtanh.pop %v3668
    %v3673 = vtanh.pop %v3669
    %v3674 = vtanh.pop %v3670
    %3675 = vmatprep.subr.mxu0 0.0
    %3676 = vmatpush1.msra.mxu0 %v3671
    %3677 = vmatprep.subr.mxu0 0.0
    %3678 = vmatpush1.msra.mxu0 %v3672
    %3679 = vmatprep.subr.mxu0 0.0
    %3680 = vmatpush1.msra.mxu0 %v3673
    %3681 = vmatprep.subr.mxu0 0.0
    %3682 = vmatpush1.msra.mxu0 %v3674
    %3683 = vmatprep.subr.mxu0 0.0
    %3684 = vmatpush1.msra.mxu0 0.0
    %3685 = vmatprep.subr.mxu0 0.0
    %3686 = vmatpush1.msra.mxu0 0.0
    %3687 = vmatprep.subr.mxu0 0.0
    %3688 = vmatpush1.msra.mxu0 0.0
    %3689 = vmatprep.subr.mxu0 0.0
    %3690 = vmatpush1.msra.mxu0 0.0
    %3691 = vmatprep.subr.mxu0 0.0
    %3692 = vmatpush1.msra.mxu0 0.0
    %3693 = vmatprep.subr.mxu0 0.0
    %3694 = vmatpush1.msra.mxu0 0.0
    %3695 = vmatprep.subr.mxu0 0.0
    %3696 = vmatpush1.msra.mxu0 0.0
    %3697 = vmatprep.subr.mxu0 0.0
    %3698 = vmatpush1.msra.mxu0 0.0
    %3699 = vmatprep.subr.mxu0 0.0
    %3700 = vmatpush1.msra.mxu0 0.0
    %3701 = vmatprep.subr.mxu0 0.0
    %3702 = vmatpush1.msra.mxu0 0.0
    %3703 = vmatprep.subr.mxu0 0.0
    %3704 = vmatpush1.msra.mxu0 0.0
    %3705 = vmatprep.subr.mxu0 0.0
    %3706 = vmatpush1.msra.mxu0 0.0
    %3707 = vmatprep.subr.mxu0 0.0
    %3708 = vmatpush1.msra.mxu0 0.0
    %3709 = vmatprep.subr.mxu0 0.0
    %3710 = vmatpush1.msra.mxu0 0.0
    %3711 = vmatprep.subr.mxu0 0.0
    %3712 = vmatpush1.msra.mxu0 0.0
    %3713 = vmatprep.subr.mxu0 0.0
    %3714 = vmatpush1.msra.mxu0 0.0
    %3715 = vmatprep.subr.mxu0 0.0
    %3716 = vmatpush1.msra.mxu0 0.0
    %3717 = vmatprep.subr.mxu0 0.0
    %3718 = vmatpush1.msra.mxu0 0.0
    %3719 = vmatprep.subr.mxu0 0.0
    %3720 = vmatpush1.msra.mxu0 0.0
    %3721 = vmatprep.subr.mxu0 0.0
    %3722 = vmatpush1.msra.mxu0 0.0
    %3723 = vmatprep.subr.mxu0 0.0
    %3724 = vmatpush1.msra.mxu0 0.0
    %3725 = vmatprep.subr.mxu0 0.0
    %3726 = vmatpush1.msra.mxu0 0.0
    %3727 = vmatprep.subr.mxu0 0.0
    %3728 = vmatpush1.msra.mxu0 0.0
    %3729 = vmatprep.subr.mxu0 0.0
    %3730 = vmatpush1.msra.mxu0 0.0
    %3731 = vmatprep.subr.mxu0 0.0
    %3732 = vmatpush1.msra.mxu0 0.0
    %3733 = vmatprep.subr.mxu0 0.0
    %3734 = vmatpush1.msra.mxu0 0.0
    %3735 = vmatprep.subr.mxu0 0.0
    %3736 = vmatpush1.msra.mxu0 0.0
    %3737 = vmatprep.subr.mxu0 0.0
    %3738 = vmatpush1.msra.mxu0 0.0
    %3739 = vmatprep.mubr.f32.mxu0 0.0
    %3740 = vmatmul.mubr.f32.gmra.mrb[0].mxu0 %v160
    %v3741 = vpop.f32.mrb[0].mxu0
    %v3742 = vadd.f32 %v141, %v3741
    %v3743 = vpop.f32.mrb[0].mxu0
    %3744 = vmatprep.mubr.f32.mxu0 0.0
    %3745 = vmatmul.mubr.f32.gmra.mrb[0].mxu0 %v163
    %v3746 = vpop.f32.mrb[0].mxu0
    %v3747 = vadd.f32 %v146, %v3746
    %v3748 = vpop.f32.mrb[0].mxu0
    %3749 = vmatprep.mubr.f32.mxu0 0.0
    %3750 = vmatmul.mubr.f32.gmra.mrb[0].mxu0 %v166
    %v3751 = vpop.f32.mrb[0].mxu0
    %v3752 = vadd.f32 %v151, %v3751
    %v3753 = vpop.f32.mrb[0].mxu0
    %3754 = vmatprep.mubr.f32.mxu0 0.0
    %3755 = vmatmul.mubr.f32.gmra.mrb[0].mxu0 %v169
    %v3756 = vpop.f32.mrb[0].mxu0
    %v3757 = vadd.f32 %v156, %v3756
    %v3758 = vpop.f32.mrb[0].mxu0
    %3759 = vdwg.mxu0
    %v3760 = vtanh.pop %v3742
    %v3761 = vtanh.pop %v3747
    %v3762 = vtanh.pop %v3752
    %v3763 = vtanh.pop %v3757
    %v3764 = vmul.f32 %v263, %v3760
    %v3765 = vmul.f32 %v268, %v3761
    %v3766 = vmul.f32 %v273, %v3762
    %v3767 = vmul.f32 %v278, %v3763
    %v3768 = vadd.f32 %v3764, %v3765
    %v3769 = vadd.f32 %v3768, %v3766
    %v3770 = vadd.f32 %v3769, %v3767
    %v3771 = vrot.slane %v3770, 4
    %v3772 = vadd.f32 %v3770, %v3771
    %v3773 = vrot.slane %v3772, 2
    %v3774 = vadd.f32 %v3772, %v3773
    %v3775 = vrot.slane %v3774, 1
    %v3776 = vadd.f32 %v3774, %v3775
    %v3777 = vadd.f32 %v3776, %v301
    %v3778 = vxor.u32 %v3777, 2147483648
    %v3779 = vmul.f32 %v3778, 1.442695
    %v3780 = vpow.pop %v3779
    %v3781 = vadd.f32 %v3780, 1.0
    %v3782 = vrcp.pop %v3781
    %v3783 = vmul.f32 1.0, %v3782
    %3784 = vrot.lane.b32.xlu0 %v3652, 1
    %v3785 = vpop.permute.xlu0 %3784
    %3786 = vrot.lane.b32.xlu0 %v3652, 127
    %v3787 = vpop.permute.xlu0 %3786
    %v3788 = vsel %vm73, 1.0, %v3785
    %v3789 = vmul.f32 %v3652, -1.0
    %v3790 = vadd.f32 %v3789, %v3788
    %v3791 = vadd.f32 %v3789, %v3787
    %v3792 = vsel %vm74, 0.0, %v3791
    %v3793 = vmul.f32 %v3783, %v318
    %v3794 = vadd.f32 %v3790, %v3792
    %v3795 = vmul.f32 %v3793, %v3794
    %s3796 = smul.f32 %s3656, 0.5
    %v3797 = vstv %s3796
    %v3798 = vmul.f32 %v3797, %v3795
    %v3799 = vadd.f32 %v3652, %v3798
    %v3801 = vlaneseq
    %v3802 = vshrl.u32 %v3801, 7
    %v3803 = vsub.s32 0, %v3802
    %v3804 = vrot.slane %v3799, %v3803
    %v3806 = vmul.f32 %v83, %v3804
    %v3807 = vmul.f32 %v88, %v3804
    %v3808 = vmul.f32 %v93, %v3804
    %v3809 = vmul.f32 %v98, %v3804
    %v3810 = vadd.f32 %v3806, %v113
    %v3811 = vadd.f32 %v3807, %v118
    %v3812 = vadd.f32 %v3808, %v123
    %v3813 = vadd.f32 %v3809, %v128
    %v3814 = vtanh.pop %v3810
    %v3815 = vtanh.pop %v3811
    %v3816 = vtanh.pop %v3812
    %v3817 = vtanh.pop %v3813
    %3818 = vmatprep.subr.mxu0 0.0
    %3819 = vmatpush1.msra.mxu0 %v3814
    %3820 = vmatprep.subr.mxu0 0.0
    %3821 = vmatpush1.msra.mxu0 %v3815
    %3822 = vmatprep.subr.mxu0 0.0
    %3823 = vmatpush1.msra.mxu0 %v3816
    %3824 = vmatprep.subr.mxu0 0.0
    %3825 = vmatpush1.msra.mxu0 %v3817
    %3826 = vmatprep.subr.mxu0 0.0
    %3827 = vmatpush1.msra.mxu0 0.0
    %3828 = vmatprep.subr.mxu0 0.0
    %3829 = vmatpush1.msra.mxu0 0.0
    %3830 = vmatprep.subr.mxu0 0.0
    %3831 = vmatpush1.msra.mxu0 0.0
    %3832 = vmatprep.subr.mxu0 0.0
    %3833 = vmatpush1.msra.mxu0 0.0
    %3834 = vmatprep.subr.mxu0 0.0
    %3835 = vmatpush1.msra.mxu0 0.0
    %3836 = vmatprep.subr.mxu0 0.0
    %3837 = vmatpush1.msra.mxu0 0.0
    %3838 = vmatprep.subr.mxu0 0.0
    %3839 = vmatpush1.msra.mxu0 0.0
    %3840 = vmatprep.subr.mxu0 0.0
    %3841 = vmatpush1.msra.mxu0 0.0
    %3842 = vmatprep.subr.mxu0 0.0
    %3843 = vmatpush1.msra.mxu0 0.0
    %3844 = vmatprep.subr.mxu0 0.0
    %3845 = vmatpush1.msra.mxu0 0.0
    %3846 = vmatprep.subr.mxu0 0.0
    %3847 = vmatpush1.msra.mxu0 0.0
    %3848 = vmatprep.subr.mxu0 0.0
    %3849 = vmatpush1.msra.mxu0 0.0
    %3850 = vmatprep.subr.mxu0 0.0
    %3851 = vmatpush1.msra.mxu0 0.0
    %3852 = vmatprep.subr.mxu0 0.0
    %3853 = vmatpush1.msra.mxu0 0.0
    %3854 = vmatprep.subr.mxu0 0.0
    %3855 = vmatpush1.msra.mxu0 0.0
    %3856 = vmatprep.subr.mxu0 0.0
    %3857 = vmatpush1.msra.mxu0 0.0
    %3858 = vmatprep.subr.mxu0 0.0
    %3859 = vmatpush1.msra.mxu0 0.0
    %3860 = vmatprep.subr.mxu0 0.0
    %3861 = vmatpush1.msra.mxu0 0.0
    %3862 = vmatprep.subr.mxu0 0.0
    %3863 = vmatpush1.msra.mxu0 0.0
    %3864 = vmatprep.subr.mxu0 0.0
    %3865 = vmatpush1.msra.mxu0 0.0
    %3866 = vmatprep.subr.mxu0 0.0
    %3867 = vmatpush1.msra.mxu0 0.0
    %3868 = vmatprep.subr.mxu0 0.0
    %3869 = vmatpush1.msra.mxu0 0.0
    %3870 = vmatprep.subr.mxu0 0.0
    %3871 = vmatpush1.msra.mxu0 0.0
    %3872 = vmatprep.subr.mxu0 0.0
    %3873 = vmatpush1.msra.mxu0 0.0
    %3874 = vmatprep.subr.mxu0 0.0
    %3875 = vmatpush1.msra.mxu0 0.0
    %3876 = vmatprep.subr.mxu0 0.0
    %3877 = vmatpush1.msra.mxu0 0.0
    %3878 = vmatprep.subr.mxu0 0.0
    %3879 = vmatpush1.msra.mxu0 0.0
    %3880 = vmatprep.subr.mxu0 0.0
    %3881 = vmatpush1.msra.mxu0 0.0
    %3882 = vmatprep.mubr.f32.mxu0 0.0
    %3883 = vmatmul.mubr.f32.gmra.mrb[0].mxu0 %v160
    %v3884 = vpop.f32.mrb[0].mxu0
    %v3885 = vadd.f32 %v141, %v3884
    %v3886 = vpop.f32.mrb[0].mxu0
    %3887 = vmatprep.mubr.f32.mxu0 0.0
    %3888 = vmatmul.mubr.f32.gmra.mrb[0].mxu0 %v163
    %v3889 = vpop.f32.mrb[0].mxu0
    %v3890 = vadd.f32 %v146, %v3889
    %v3891 = vpop.f32.mrb[0].mxu0
    %3892 = vmatprep.mubr.f32.mxu0 0.0
    %3893 = vmatmul.mubr.f32.gmra.mrb[0].mxu0 %v166
    %v3894 = vpop.f32.mrb[0].mxu0
    %v3895 = vadd.f32 %v151, %v3894
    %v3896 = vpop.f32.mrb[0].mxu0
    %3897 = vmatprep.mubr.f32.mxu0 0.0
    %3898 = vmatmul.mubr.f32.gmra.mrb[0].mxu0 %v169
    %v3899 = vpop.f32.mrb[0].mxu0
    %v3900 = vadd.f32 %v156, %v3899
    %v3901 = vpop.f32.mrb[0].mxu0
    %3902 = vdwg.mxu0
    %v3903 = vtanh.pop %v3885
    %v3904 = vtanh.pop %v3890
    %v3905 = vtanh.pop %v3895
    %v3906 = vtanh.pop %v3900
    %v3907 = vmul.f32 %v263, %v3903
    %v3908 = vmul.f32 %v268, %v3904
    %v3909 = vmul.f32 %v273, %v3905
    %v3910 = vmul.f32 %v278, %v3906
    %v3911 = vadd.f32 %v3907, %v3908
    %v3912 = vadd.f32 %v3911, %v3909
    %v3913 = vadd.f32 %v3912, %v3910
    %v3914 = vrot.slane %v3913, 4
    %v3915 = vadd.f32 %v3913, %v3914
    %v3916 = vrot.slane %v3915, 2
    %v3917 = vadd.f32 %v3915, %v3916
    %v3918 = vrot.slane %v3917, 1
    %v3919 = vadd.f32 %v3917, %v3918
    %v3920 = vadd.f32 %v3919, %v301
    %v3921 = vxor.u32 %v3920, 2147483648
    %v3922 = vmul.f32 %v3921, 1.442695
    %v3923 = vpow.pop %v3922
    %v3924 = vadd.f32 %v3923, 1.0
    %v3925 = vrcp.pop %v3924
    %v3926 = vmul.f32 1.0, %v3925
    %3927 = vrot.lane.b32.xlu0 %v3799, 1
    %v3928 = vpop.permute.xlu0 %3927
    %3929 = vrot.lane.b32.xlu0 %v3799, 127
    %v3930 = vpop.permute.xlu0 %3929
    %v3931 = vsel %vm73, 1.0, %v3928
    %v3932 = vmul.f32 %v3799, -1.0
    %v3933 = vadd.f32 %v3932, %v3931
    %v3934 = vadd.f32 %v3932, %v3930
    %v3935 = vsel %vm74, 0.0, %v3934
    %v3936 = vmul.f32 %v3926, %v318
    %v3937 = vadd.f32 %v3933, %v3935
    %v3938 = vmul.f32 %v3936, %v3937
    %v3939 = vmul.f32 %v3797, %v3938
    %v3940 = vadd.f32 %v3652, %v3939
    %v3942 = vlaneseq
    %v3943 = vshrl.u32 %v3942, 7
    %v3944 = vsub.s32 0, %v3943
    %v3945 = vrot.slane %v3940, %v3944
    %v3947 = vmul.f32 %v83, %v3945
    %v3948 = vmul.f32 %v88, %v3945
    %v3949 = vmul.f32 %v93, %v3945
    %v3950 = vmul.f32 %v98, %v3945
    %v3951 = vadd.f32 %v3947, %v113
    %v3952 = vadd.f32 %v3948, %v118
    %v3953 = vadd.f32 %v3949, %v123
    %v3954 = vadd.f32 %v3950, %v128
    %v3955 = vtanh.pop %v3951
    %v3956 = vtanh.pop %v3952
    %v3957 = vtanh.pop %v3953
    %v3958 = vtanh.pop %v3954
    %3959 = vmatprep.subr.mxu0 0.0
    %3960 = vmatpush1.msra.mxu0 %v3955
    %3961 = vmatprep.subr.mxu0 0.0
    %3962 = vmatpush1.msra.mxu0 %v3956
    %3963 = vmatprep.subr.mxu0 0.0
    %3964 = vmatpush1.msra.mxu0 %v3957
    %3965 = vmatprep.subr.mxu0 0.0
    %3966 = vmatpush1.msra.mxu0 %v3958
    %3967 = vmatprep.subr.mxu0 0.0
    %3968 = vmatpush1.msra.mxu0 0.0
    %3969 = vmatprep.subr.mxu0 0.0
    %3970 = vmatpush1.msra.mxu0 0.0
    %3971 = vmatprep.subr.mxu0 0.0
    %3972 = vmatpush1.msra.mxu0 0.0
    %3973 = vmatprep.subr.mxu0 0.0
    %3974 = vmatpush1.msra.mxu0 0.0
    %3975 = vmatprep.subr.mxu0 0.0
    %3976 = vmatpush1.msra.mxu0 0.0
    %3977 = vmatprep.subr.mxu0 0.0
    %3978 = vmatpush1.msra.mxu0 0.0
    %3979 = vmatprep.subr.mxu0 0.0
    %3980 = vmatpush1.msra.mxu0 0.0
    %3981 = vmatprep.subr.mxu0 0.0
    %3982 = vmatpush1.msra.mxu0 0.0
    %3983 = vmatprep.subr.mxu0 0.0
    %3984 = vmatpush1.msra.mxu0 0.0
    %3985 = vmatprep.subr.mxu0 0.0
    %3986 = vmatpush1.msra.mxu0 0.0
    %3987 = vmatprep.subr.mxu0 0.0
    %3988 = vmatpush1.msra.mxu0 0.0
    %3989 = vmatprep.subr.mxu0 0.0
    %3990 = vmatpush1.msra.mxu0 0.0
    %3991 = vmatprep.subr.mxu0 0.0
    %3992 = vmatpush1.msra.mxu0 0.0
    %3993 = vmatprep.subr.mxu0 0.0
    %3994 = vmatpush1.msra.mxu0 0.0
    %3995 = vmatprep.subr.mxu0 0.0
    %3996 = vmatpush1.msra.mxu0 0.0
    %3997 = vmatprep.subr.mxu0 0.0
    %3998 = vmatpush1.msra.mxu0 0.0
    %3999 = vmatprep.subr.mxu0 0.0
    %4000 = vmatpush1.msra.mxu0 0.0
    %4001 = vmatprep.subr.mxu0 0.0
    %4002 = vmatpush1.msra.mxu0 0.0
    %4003 = vmatprep.subr.mxu0 0.0
    %4004 = vmatpush1.msra.mxu0 0.0
    %4005 = vmatprep.subr.mxu0 0.0
    %4006 = vmatpush1.msra.mxu0 0.0
    %4007 = vmatprep.subr.mxu0 0.0
    %4008 = vmatpush1.msra.mxu0 0.0
    %4009 = vmatprep.subr.mxu0 0.0
    %4010 = vmatpush1.msra.mxu0 0.0
    %4011 = vmatprep.subr.mxu0 0.0
    %4012 = vmatpush1.msra.mxu0 0.0
    %4013 = vmatprep.subr.mxu0 0.0
    %4014 = vmatpush1.msra.mxu0 0.0
    %4015 = vmatprep.subr.mxu0 0.0
    %4016 = vmatpush1.msra.mxu0 0.0
    %4017 = vmatprep.subr.mxu0 0.0
    %4018 = vmatpush1.msra.mxu0 0.0
    %4019 = vmatprep.subr.mxu0 0.0
    %4020 = vmatpush1.msra.mxu0 0.0
    %4021 = vmatprep.subr.mxu0 0.0
    %4022 = vmatpush1.msra.mxu0 0.0
    %4023 = vmatprep.mubr.f32.mxu0 0.0
    %4024 = vmatmul.mubr.f32.gmra.mrb[0].mxu0 %v160
    %v4025 = vpop.f32.mrb[0].mxu0
    %v4026 = vadd.f32 %v141, %v4025
    %v4027 = vpop.f32.mrb[0].mxu0
    %4028 = vmatprep.mubr.f32.mxu0 0.0
    %4029 = vmatmul.mubr.f32.gmra.mrb[0].mxu0 %v163
    %v4030 = vpop.f32.mrb[0].mxu0
    %v4031 = vadd.f32 %v146, %v4030
    %v4032 = vpop.f32.mrb[0].mxu0
    %4033 = vmatprep.mubr.f32.mxu0 0.0
    %4034 = vmatmul.mubr.f32.gmra.mrb[0].mxu0 %v166
    %v4035 = vpop.f32.mrb[0].mxu0
    %v4036 = vadd.f32 %v151, %v4035
    %v4037 = vpop.f32.mrb[0].mxu0
    %4038 = vmatprep.mubr.f32.mxu0 0.0
    %4039 = vmatmul.mubr.f32.gmra.mrb[0].mxu0 %v169
    %v4040 = vpop.f32.mrb[0].mxu0
    %v4041 = vadd.f32 %v156, %v4040
    %v4042 = vpop.f32.mrb[0].mxu0
    %4043 = vdwg.mxu0
    %v4044 = vtanh.pop %v4026
    %v4045 = vtanh.pop %v4031
    %v4046 = vtanh.pop %v4036
    %v4047 = vtanh.pop %v4041
    %v4048 = vmul.f32 %v263, %v4044
    %v4049 = vmul.f32 %v268, %v4045
    %v4050 = vmul.f32 %v273, %v4046
    %v4051 = vmul.f32 %v278, %v4047
    %v4052 = vadd.f32 %v4048, %v4049
    %v4053 = vadd.f32 %v4052, %v4050
    %v4054 = vadd.f32 %v4053, %v4051
    %v4055 = vrot.slane %v4054, 4
    %v4056 = vadd.f32 %v4054, %v4055
    %v4057 = vrot.slane %v4056, 2
    %v4058 = vadd.f32 %v4056, %v4057
    %v4059 = vrot.slane %v4058, 1
    %v4060 = vadd.f32 %v4058, %v4059
    %v4061 = vadd.f32 %v4060, %v301
    %v4062 = vxor.u32 %v4061, 2147483648
    %v4063 = vmul.f32 %v4062, 1.442695
    %v4064 = vpow.pop %v4063
    %v4065 = vadd.f32 %v4064, 1.0
    %v4066 = vrcp.pop %v4065
    %v4067 = vmul.f32 1.0, %v4066
    %4068 = vrot.lane.b32.xlu0 %v3940, 1
    %v4069 = vpop.permute.xlu0 %4068
    %4070 = vrot.lane.b32.xlu0 %v3940, 127
    %v4071 = vpop.permute.xlu0 %4070
    %v4072 = vsel %vm73, 1.0, %v4069
    %v4073 = vmul.f32 %v3940, -1.0
    %v4074 = vadd.f32 %v4073, %v4072
    %v4075 = vadd.f32 %v4073, %v4071
    %v4076 = vsel %vm74, 0.0, %v4075
    %v4077 = vmul.f32 %v4067, %v318
    %v4078 = vadd.f32 %v4074, %v4076
    %v4079 = vmul.f32 %v4077, %v4078
    %v4080 = vstv %s3656
    %v4081 = vmul.f32 %v4080, %v4079
    %v4082 = vadd.f32 %v3652, %v4081
    %v4084 = vlaneseq
    %v4085 = vshrl.u32 %v4084, 7
    %v4086 = vsub.s32 0, %v4085
    %v4087 = vrot.slane %v4082, %v4086
    %v4089 = vmul.f32 %v83, %v4087
    %v4090 = vmul.f32 %v88, %v4087
    %v4091 = vmul.f32 %v93, %v4087
    %v4092 = vmul.f32 %v98, %v4087
    %v4093 = vadd.f32 %v4089, %v113
    %v4094 = vadd.f32 %v4090, %v118
    %v4095 = vadd.f32 %v4091, %v123
    %v4096 = vadd.f32 %v4092, %v128
    %v4097 = vtanh.pop %v4093
    %v4098 = vtanh.pop %v4094
    %v4099 = vtanh.pop %v4095
    %v4100 = vtanh.pop %v4096
    %4101 = vmatprep.subr.mxu0 0.0
    %4102 = vmatpush1.msra.mxu0 %v4097
    %4103 = vmatprep.subr.mxu0 0.0
    %4104 = vmatpush1.msra.mxu0 %v4098
    %4105 = vmatprep.subr.mxu0 0.0
    %4106 = vmatpush1.msra.mxu0 %v4099
    %4107 = vmatprep.subr.mxu0 0.0
    %4108 = vmatpush1.msra.mxu0 %v4100
    %4109 = vmatprep.subr.mxu0 0.0
    %4110 = vmatpush1.msra.mxu0 0.0
    %4111 = vmatprep.subr.mxu0 0.0
    %4112 = vmatpush1.msra.mxu0 0.0
    %4113 = vmatprep.subr.mxu0 0.0
    %4114 = vmatpush1.msra.mxu0 0.0
    %4115 = vmatprep.subr.mxu0 0.0
    %4116 = vmatpush1.msra.mxu0 0.0
    %4117 = vmatprep.subr.mxu0 0.0
    %4118 = vmatpush1.msra.mxu0 0.0
    %4119 = vmatprep.subr.mxu0 0.0
    %4120 = vmatpush1.msra.mxu0 0.0
    %4121 = vmatprep.subr.mxu0 0.0
    %4122 = vmatpush1.msra.mxu0 0.0
    %4123 = vmatprep.subr.mxu0 0.0
    %4124 = vmatpush1.msra.mxu0 0.0
    %4125 = vmatprep.subr.mxu0 0.0
    %4126 = vmatpush1.msra.mxu0 0.0
    %4127 = vmatprep.subr.mxu0 0.0
    %4128 = vmatpush1.msra.mxu0 0.0
    %4129 = vmatprep.subr.mxu0 0.0
    %4130 = vmatpush1.msra.mxu0 0.0
    %4131 = vmatprep.subr.mxu0 0.0
    %4132 = vmatpush1.msra.mxu0 0.0
    %4133 = vmatprep.subr.mxu0 0.0
    %4134 = vmatpush1.msra.mxu0 0.0
    %4135 = vmatprep.subr.mxu0 0.0
    %4136 = vmatpush1.msra.mxu0 0.0
    %4137 = vmatprep.subr.mxu0 0.0
    %4138 = vmatpush1.msra.mxu0 0.0
    %4139 = vmatprep.subr.mxu0 0.0
    %4140 = vmatpush1.msra.mxu0 0.0
    %4141 = vmatprep.subr.mxu0 0.0
    %4142 = vmatpush1.msra.mxu0 0.0
    %4143 = vmatprep.subr.mxu0 0.0
    %4144 = vmatpush1.msra.mxu0 0.0
    %4145 = vmatprep.subr.mxu0 0.0
    %4146 = vmatpush1.msra.mxu0 0.0
    %4147 = vmatprep.subr.mxu0 0.0
    %4148 = vmatpush1.msra.mxu0 0.0
    %4149 = vmatprep.subr.mxu0 0.0
    %4150 = vmatpush1.msra.mxu0 0.0
    %4151 = vmatprep.subr.mxu0 0.0
    %4152 = vmatpush1.msra.mxu0 0.0
    %4153 = vmatprep.subr.mxu0 0.0
    %4154 = vmatpush1.msra.mxu0 0.0
    %4155 = vmatprep.subr.mxu0 0.0
    %4156 = vmatpush1.msra.mxu0 0.0
    %4157 = vmatprep.subr.mxu0 0.0
    %4158 = vmatpush1.msra.mxu0 0.0
    %4159 = vmatprep.subr.mxu0 0.0
    %4160 = vmatpush1.msra.mxu0 0.0
    %4161 = vmatprep.subr.mxu0 0.0
    %4162 = vmatpush1.msra.mxu0 0.0
    %4163 = vmatprep.subr.mxu0 0.0
    %4164 = vmatpush1.msra.mxu0 0.0
    %4165 = vmatprep.mubr.f32.mxu0 0.0
    %4166 = vmatmul.mubr.f32.gmra.mrb[0].mxu0 %v160
    %v4167 = vpop.f32.mrb[0].mxu0
    %v4168 = vadd.f32 %v141, %v4167
    %v4169 = vpop.f32.mrb[0].mxu0
    %4170 = vmatprep.mubr.f32.mxu0 0.0
    %4171 = vmatmul.mubr.f32.gmra.mrb[0].mxu0 %v163
    %v4172 = vpop.f32.mrb[0].mxu0
    %v4173 = vadd.f32 %v146, %v4172
    %v4174 = vpop.f32.mrb[0].mxu0
    %4175 = vmatprep.mubr.f32.mxu0 0.0
    %4176 = vmatmul.mubr.f32.gmra.mrb[0].mxu0 %v166
    %v4177 = vpop.f32.mrb[0].mxu0
    %v4178 = vadd.f32 %v151, %v4177
    %v4179 = vpop.f32.mrb[0].mxu0
    %4180 = vmatprep.mubr.f32.mxu0 0.0
    %4181 = vmatmul.mubr.f32.gmra.mrb[0].mxu0 %v169
    %v4182 = vpop.f32.mrb[0].mxu0
    %v4183 = vadd.f32 %v156, %v4182
    %v4184 = vpop.f32.mrb[0].mxu0
    %4185 = vdwg.mxu0
    %v4186 = vtanh.pop %v4168
    %v4187 = vtanh.pop %v4173
    %v4188 = vtanh.pop %v4178
    %v4189 = vtanh.pop %v4183
    %v4190 = vmul.f32 %v263, %v4186
    %v4191 = vmul.f32 %v268, %v4187
    %v4192 = vmul.f32 %v273, %v4188
    %v4193 = vmul.f32 %v278, %v4189
    %v4194 = vadd.f32 %v4190, %v4191
    %v4195 = vadd.f32 %v4194, %v4192
    %v4196 = vadd.f32 %v4195, %v4193
    %v4197 = vrot.slane %v4196, 4
    %v4198 = vadd.f32 %v4196, %v4197
    %v4199 = vrot.slane %v4198, 2
    %v4200 = vadd.f32 %v4198, %v4199
    %v4201 = vrot.slane %v4200, 1
    %v4202 = vadd.f32 %v4200, %v4201
    %v4203 = vadd.f32 %v4202, %v301
    %v4204 = vxor.u32 %v4203, 2147483648
    %v4205 = vmul.f32 %v4204, 1.442695
    %v4206 = vpow.pop %v4205
    %v4207 = vadd.f32 %v4206, 1.0
    %v4208 = vrcp.pop %v4207
    %v4209 = vmul.f32 1.0, %v4208
    %4210 = vrot.lane.b32.xlu0 %v4082, 1
    %v4211 = vpop.permute.xlu0 %4210
    %4212 = vrot.lane.b32.xlu0 %v4082, 127
    %v4213 = vpop.permute.xlu0 %4212
    %v4214 = vsel %vm73, 1.0, %v4211
    %v4215 = vmul.f32 %v4082, -1.0
    %v4216 = vadd.f32 %v4215, %v4214
    %v4217 = vadd.f32 %v4215, %v4213
    %v4218 = vsel %vm74, 0.0, %v4217
    %v4219 = vmul.f32 %v4209, %v318
    %v4220 = vadd.f32 %v4216, %v4218
    %v4221 = vmul.f32 %v4219, %v4220
    %v4222 = vrcp.pop 6.0
    %s4223 = vtos %v4222
    %s4224 = smul.f32 %s3656, %s4223
    %v4225 = vadd.f32 %v3938, %v4079
    %v4226 = vmul.f32 %v4225, 2.0
    %v4227 = vadd.f32 %v3795, %v4226
    %v4228 = vadd.f32 %v4227, %v4221
    %v4229 = vstv %s4224
    %v4230 = vmul.f32 %v4229, %v4228
    %v4231 = vadd.f32 %v3652, %v4230
    %4232 = vst [vmem:[#allocation7 + $0x7] sm:$0x1] %v4231
    // Predicated region
    $region42: #{concentration_predictor_forward.1} parent=1 // pred_check
      _
    $region43: #{concentration_predictor_forward.1} parent=1 // pred_check_branch
      %4234 = sbr.rel (0) target = $region45
    $region44: #{concentration_predictor_forward.1} parent=1 // pred_region
      %s4236 = ssub.s32 128, 128
      %4237 = vsyncadd [#allocation5], %s4236
      %s4239 = sshll.u32 [#allocation7], 4
      %s4240 = int_to_ptr.vmem [resolvable:$true] %s4239
      %4242 = dma.vmem_to_hbm [thread:$0]  %s4240, 128, %s9, [#allocation5]
    $region45: #{concentration_predictor_forward.1} parent=1 // pred_fallthru
      _
    // Predicated region
    $region46: #{concentration_predictor_forward.1} parent=1 // pred_check
      _
    $region47: #{concentration_predictor_forward.1} parent=1 // pred_check_branch
      %4244 = sbr.rel (0) target = $region49
    $region48: #{concentration_predictor_forward.1} parent=1 // pred_region
      %4245 = dma.done [#allocation5], 128
    $region49: #{concentration_predictor_forward.1} parent=1 // pred_fallthru
      _
    %4246 = vsyncpa [#allocation5], 1
    %4247 = vsyncpa [#allocation6], 1

</llo_original>
